<compile_context>
chip_gen: v7x
topology: tpu7x:2x2x1
jax: 0.10.0
libtpu: 0.0.40
codegen_flags: <defaults>
</compile_context>

<pallas_src>
import functools

import jax
import jax.numpy as jnp
import numpy as np
from jax.experimental import pallas as pl
from jax.experimental.pallas import tpu as pltpu

_HEAD_PAD = 128  # lane-dense width for the fc2 output block


# ---------------------------------------------------------------------------
# Fused whole-network kernel (one image per grid step).
# ---------------------------------------------------------------------------
def _fused_kernel(x_ref,
                  T1, s1, b1, sel1,
                  T2, s2, b2, sel2,
                  T3, s3, b3, sel3,
                  T4, s4, b4,
                  fw1, fb1, fw2, fb2,
                  o_ref):
    f32 = jnp.float32

    def conv_bn_relu(ap, t_ref, s_ref, b_ref):
        # ap: (H+4, L_in) zero-padded rows; t_ref: (3, L_in, W*Cout).
        # One matmul per kernel row ky; kx taps + x-padding live in t_ref.
        r = ap.shape[0] - 2
        o = (jnp.dot(ap[0:r], t_ref[0], preferred_element_type=f32) +
             jnp.dot(ap[1:r + 1], t_ref[1], preferred_element_type=f32) +
             jnp.dot(ap[2:r + 2], t_ref[2], preferred_element_type=f32))
        return jnp.maximum(o * s_ref[...] + b_ref[...], 0.0)

    def pool_and_repad(o, cout, sel_ref):
        # 2x2/2 max pool + zero-row re-padding for the next conv block.
        mx = jnp.maximum(o[:, :-cout], o[:, cout:])   # x-pairs -> even chunks
        my = jnp.maximum(mx[:-1], mx[1:])             # y-pairs -> even rows
        # Constant 0/1 matmul: picks the even rows and inserts pad rows.
        return jnp.dot(sel_ref[...], my, preferred_element_type=f32)

    o = conv_bn_relu(x_ref[0], T1, s1, b1)
    o = conv_bn_relu(pool_and_repad(o, o.shape[1] - T2.shape[1], sel1),
                     T2, s2, b2)
    o = conv_bn_relu(pool_and_repad(o, o.shape[1] - T3.shape[1], sel2),
                     T3, s3, b3)
    o = conv_bn_relu(pool_and_repad(o, o.shape[1] - T4.shape[1], sel3),
                     T4, s4, b4)

    # Global average pool (1/(H*W) is folded into fc1 host-side).
    c4 = fw1.shape[0]
    w4 = o.shape[1] // c4
    h4 = o.shape[0] - 2
    t = o[:, 0:c4]
    for x in range(1, w4):                    # 128-aligned lane slices
        t = t + o[:, x * c4:(x + 1) * c4]
    feats = t[0:1]
    for y in range(1, h4):
        feats = feats + t[y:y + 1]

    # Dropout = identity (eval).  fc1 -> ReLU -> fc2 (padded to 128 lanes).
    h = jnp.maximum(jnp.dot(feats, fw1[...], preferred_element_type=f32)
                    + fb1[...], 0.0)
    out = jnp.dot(h, fw2[...], preferred_element_type=f32) + fb2[...]
    o_ref[...] = out.reshape(o_ref.shape)


# ---------------------------------------------------------------------------
# Host-side (one-time) operand preparation.
# ---------------------------------------------------------------------------
def _toeplitz(w_hwio, width, stride_in, l_in):
    """Fold kx taps + x zero-padding of a 3x3 SAME conv into per-ky
    (l_in, width*Cout) matrices.  Input lane layout: channel ci of spatial
    column x sits at lane x*stride_in + ci; all other rows are zero."""
    cin, cout = w_hwio.shape[2], w_hwio.shape[3]
    T = np.zeros((3, l_in, width * cout), np.float32)
    for ky in range(3):
        for xo in range(width):
            for kx in range(3):
                xi = xo + kx - 1
                if 0 <= xi < width:
                    T[ky, xi * stride_in: xi * stride_in + cin,
                          xo * cout:(xo + 1) * cout] = w_hwio[ky, kx]
    return T


def _pool_select(h_out, r_in):
    """(h_out+4, r_in) 0/1 matrix: row 1+k selects input row 2k; row 0 and
    rows h_out+1.. stay zero (they become the next conv's padding rows)."""
    S = np.zeros((h_out + 4, r_in), np.float32)
    for k in range(h_out):
        S[1 + k, 2 * k] = 1.0
    return S


def build_kernel_params(params, x_shape):
    """Precompute all kernel operands (runs once, eagerly, host-side)."""
    _, c0, h, w = x_shape
    assert h % 8 == 0 and w % 8 == 0, "need three 2x2 max pools"
    kp = {}
    l_in, stride = w * c0, c0
    hi, wi = h, w
    for i in range(4):
        wconv, bn_scale, shift = (np.asarray(a, np.float32)
                                  for a in params[f"block{i + 1}"])
        cout = wconv.shape[3]
        kp[f"T{i + 1}"] = jnp.asarray(_toeplitz(wconv, wi, stride, l_in))
        kp[f"s{i + 1}"] = jnp.asarray(np.tile(bn_scale, wi)[None, :])
        kp[f"b{i + 1}"] = jnp.asarray(np.tile(shift, wi)[None, :])
        if i < 3:
            kp[f"sel{i + 1}"] = jnp.asarray(_pool_select(hi // 2, hi + 1))
            l_in, stride = (wi - 1) * cout, 2 * cout
            hi, wi = hi // 2, wi // 2

    fw1, fb1, fw2, fb2 = (np.asarray(a, np.float32) for a in params["head"])
    num_out = fw2.shape[1]
    assert num_out <= _HEAD_PAD
    fw2p = np.zeros((fw1.shape[1], _HEAD_PAD), np.float32)
    fw2p[:, :num_out] = fw2
    fb2p = np.zeros((1, _HEAD_PAD), np.float32)
    fb2p[0, :num_out] = fb2
    kp["fw1"] = jnp.asarray(fw1 * (1.0 / float(hi * wi)))  # fold avg-pool 1/(H*W)
    kp["fb1"] = jnp.asarray(fb1[None, :])
    kp["fw2"] = jnp.asarray(fw2p)
    kp["fb2"] = jnp.asarray(fb2p)
    return kp


# ---------------------------------------------------------------------------
# pallas_call wrapper.
# ---------------------------------------------------------------------------
def _const_index_map(nd):
    return lambda b: (0,) * nd


def _const_spec(shape):
    return pl.BlockSpec(shape, _const_index_map(len(shape)))


def fused_forward(x_slab, kp):
    n = x_slab.shape[0]
    operands = [x_slab,
                kp["T1"], kp["s1"], kp["b1"], kp["sel1"],
                kp["T2"], kp["s2"], kp["b2"], kp["sel2"],
                kp["T3"], kp["s3"], kp["b3"], kp["sel3"],
                kp["T4"], kp["s4"], kp["b4"],
                kp["fw1"], kp["fb1"], kp["fw2"], kp["fb2"]]

    in_specs = ([pl.BlockSpec((1,) + x_slab.shape[1:], lambda b: (b, 0, 0))]
                + [_const_spec(op.shape) for op in operands[1:]])

    out = pl.pallas_call(
        _fused_kernel,
        out_shape=jax.ShapeDtypeStruct((n, 1, _HEAD_PAD), jnp.float32),
        grid=(n,),
        in_specs=in_specs,
        out_specs=pl.BlockSpec((1, 1, _HEAD_PAD), lambda b: (b, 0, 0)),
        compiler_params=pltpu.CompilerParams(
            dimension_semantics=("parallel",)),
    )(*operands)
    return out.reshape(n, _HEAD_PAD)


def forward(x_nchw, kp, num_outputs=1):
    n, c, h, w = x_nchw.shape
    # NCHW -> lane-dense row slab (N, H+4, W*C): row 0 = top zero pad,
    # rows 1..H = image rows (lane = x*C + ci), rows H+1.. = bottom pad/slack.
    x = jnp.transpose(x_nchw, (0, 2, 3, 1)).astype(jnp.float32)
    x = x.reshape(n, h, w * c)
    x = jnp.pad(x, ((0, 0), (1, 3), (0, 0)))
    return fused_forward(x, kp)[:, :num_outputs]


# ---------------------------------------------------------------------------
# Parameter init (deterministic, PyTorch-shape-consistent, BN folded).
# ---------------------------------------------------------------------------
def init_params(key, in_channels=4, base_filters=16, num_outputs=1):
    eps = 1e-5
    chans = [in_channels, base_filters, base_filters * 2,
             base_filters * 4, base_filters * 8]
    params = {}
    keys = jax.random.split(key, 20)
    ki = 0
    for layer in range(4):
        cin, cout = chans[layer], chans[layer + 1]
        w = 0.1 * jax.random.normal(keys[ki], (3, 3, cin, cout), jnp.float32); ki += 1
        b = 0.1 * jax.random.normal(keys[ki], (cout,), jnp.float32); ki += 1
        gamma = 1.0 + 0.1 * jax.random.normal(keys[ki], (cout,), jnp.float32); ki += 1
        beta = 0.1 * jax.random.normal(keys[ki], (cout,), jnp.float32); ki += 1
        # BatchNorm eval-mode running stats at PyTorch init: mean=0, var=1.
        running_mean = jnp.zeros((cout,), jnp.float32)
        running_var = jnp.ones((cout,), jnp.float32)
        bn_scale = gamma / jnp.sqrt(running_var + eps)
        shift = (b - running_mean) * bn_scale + beta   # conv bias folded in
        params[f"block{layer + 1}"] = (w, bn_scale, shift)

    c4 = base_filters * 8
    w1 = 0.1 * jax.random.normal(keys[ki], (c4, 128), jnp.float32); ki += 1
    b1 = 0.1 * jax.random.normal(keys[ki], (128,), jnp.float32); ki += 1
    w2 = 0.1 * jax.random.normal(keys[ki], (128, num_outputs), jnp.float32); ki += 1
    b2 = 0.1 * jax.random.normal(keys[ki], (num_outputs,), jnp.float32); ki += 1
    params["head"] = (w1, b1, w2, b2)
    return params


# ---------------------------------------------------------------------------
# Pure-JAX reference for a numerical sanity check.
# ---------------------------------------------------------------------------
def reference_forward(x_nchw, params):
    x = jnp.transpose(x_nchw, (0, 2, 3, 1)).astype(jnp.float32)

    def block(x, w, scale, shift, pool):
        y = jax.lax.conv_general_dilated(
            x, w, (1, 1), "SAME",
            dimension_numbers=("NHWC", "HWIO", "NHWC"))
        y = jnp.maximum(y * scale + shift, 0.0)
        if pool == "max":
            n, h, w_, c = y.shape
            y = y.reshape(n, h // 2, 2, w_ // 2, 2, c).max(axis=(2, 4))
        else:
            y = y.mean(axis=(1, 2))
        return y

    x = block(x, *params["block1"], "max")
    x = block(x, *params["block2"], "max")
    x = block(x, *params["block3"], "max")
    x = block(x, *params["block4"], "avg")
    w1, b1, w2, b2 = params["head"]
    h = jnp.maximum(x @ w1 + b1, 0.0)
    return h @ w2 + b2


if __name__ == "__main__":
    key = jax.random.PRNGKey(0)
    k_param, k_x = jax.random.split(key)

    in_channels, base_filters, num_outputs = 4, 16, 1
    params = init_params(k_param, in_channels, base_filters, num_outputs)

    # NCHW input like PyTorch: (batch=2, channels=4, H=16, W=16)
    x = jax.random.normal(k_x, (2, in_channels, 16, 16), jnp.float32)

    kp = build_kernel_params(params, x.shape)   # one-time host prep

    fwd = jax.jit(functools.partial(forward, num_outputs=num_outputs))
    out = jax.block_until_ready(fwd(x, kp))
    ref = jax.block_until_ready(reference_forward(x, params))

    assert out.shape == (2, num_outputs), out.shape
    assert jnp.allclose(out, ref, atol=2e-3, rtol=2e-3), (out, ref)
    print("KERNEL_OK")
</pallas_src>

<mosaic_0001>
module attributes {stable_mosaic.version = 11 : i64} {
  func.func @_fused_kernel(%arg0: i32, %arg1: memref<1x20x64xf32, #tpu.memory_space<vmem>>, %arg2: memref<3x64x256xf32, #tpu.memory_space<vmem>>, %arg3: memref<1x256xf32, #tpu.memory_space<vmem>>, %arg4: memref<1x256xf32, #tpu.memory_space<vmem>>, %arg5: memref<12x17xf32, #tpu.memory_space<vmem>>, %arg6: memref<3x240x256xf32, #tpu.memory_space<vmem>>, %arg7: memref<1x256xf32, #tpu.memory_space<vmem>>, %arg8: memref<1x256xf32, #tpu.memory_space<vmem>>, %arg9: memref<8x9xf32, #tpu.memory_space<vmem>>, %arg10: memref<3x224x256xf32, #tpu.memory_space<vmem>>, %arg11: memref<1x256xf32, #tpu.memory_space<vmem>>, %arg12: memref<1x256xf32, #tpu.memory_space<vmem>>, %arg13: memref<6x5xf32, #tpu.memory_space<vmem>>, %arg14: memref<3x192x256xf32, #tpu.memory_space<vmem>>, %arg15: memref<1x256xf32, #tpu.memory_space<vmem>>, %arg16: memref<1x256xf32, #tpu.memory_space<vmem>>, %arg17: memref<128x128xf32, #tpu.memory_space<vmem>>, %arg18: memref<1x128xf32, #tpu.memory_space<vmem>>, %arg19: memref<128x128xf32, #tpu.memory_space<vmem>>, %arg20: memref<1x128xf32, #tpu.memory_space<vmem>>, %arg21: memref<1x1x128xf32, #tpu.memory_space<vmem>>) attributes {dimension_semantics = [#tpu.dimension_semantics<parallel>], iteration_bounds = array<i64: 2>, scalar_prefetch = 0 : i64, scratch_operands = 0 : i64, tpu.core_type = #tpu.core_type<tc>, window_params = [{transform_indices = @transform_0, window_bounds = array<i64: 1, 20, 64>}, {pipeline_mode = #tpu.pipeline_mode<synchronous>, transform_indices = @transform_1, window_bounds = array<i64: 3, 64, 256>}, {pipeline_mode = #tpu.pipeline_mode<synchronous>, transform_indices = @transform_2, window_bounds = array<i64: 1, 256>}, {pipeline_mode = #tpu.pipeline_mode<synchronous>, transform_indices = @transform_3, window_bounds = array<i64: 1, 256>}, {pipeline_mode = #tpu.pipeline_mode<synchronous>, transform_indices = @transform_4, window_bounds = array<i64: 12, 17>}, {pipeline_mode = #tpu.pipeline_mode<synchronous>, transform_indices = @transform_5, window_bounds = array<i64: 3, 240, 256>}, {pipeline_mode = #tpu.pipeline_mode<synchronous>, transform_indices = @transform_6, window_bounds = array<i64: 1, 256>}, {pipeline_mode = #tpu.pipeline_mode<synchronous>, transform_indices = @transform_7, window_bounds = array<i64: 1, 256>}, {pipeline_mode = #tpu.pipeline_mode<synchronous>, transform_indices = @transform_8, window_bounds = array<i64: 8, 9>}, {pipeline_mode = #tpu.pipeline_mode<synchronous>, transform_indices = @transform_9, window_bounds = array<i64: 3, 224, 256>}, {pipeline_mode = #tpu.pipeline_mode<synchronous>, transform_indices = @transform_10, window_bounds = array<i64: 1, 256>}, {pipeline_mode = #tpu.pipeline_mode<synchronous>, transform_indices = @transform_11, window_bounds = array<i64: 1, 256>}, {pipeline_mode = #tpu.pipeline_mode<synchronous>, transform_indices = @transform_12, window_bounds = array<i64: 6, 5>}, {pipeline_mode = #tpu.pipeline_mode<synchronous>, transform_indices = @transform_13, window_bounds = array<i64: 3, 192, 256>}, {pipeline_mode = #tpu.pipeline_mode<synchronous>, transform_indices = @transform_14, window_bounds = array<i64: 1, 256>}, {pipeline_mode = #tpu.pipeline_mode<synchronous>, transform_indices = @transform_15, window_bounds = array<i64: 1, 256>}, {pipeline_mode = #tpu.pipeline_mode<synchronous>, transform_indices = @transform_16, window_bounds = array<i64: 128, 128>}, {pipeline_mode = #tpu.pipeline_mode<synchronous>, transform_indices = @transform_17, window_bounds = array<i64: 1, 128>}, {pipeline_mode = #tpu.pipeline_mode<synchronous>, transform_indices = @transform_18, window_bounds = array<i64: 128, 128>}, {pipeline_mode = #tpu.pipeline_mode<synchronous>, transform_indices = @transform_19, window_bounds = array<i64: 1, 128>}, {transform_indices = @transform_20, window_bounds = array<i64: 1, 1, 128>}]} {
    %c0 = arith.constant 0 : index
    %c0_0 = arith.constant 0 : index
    %c0_1 = arith.constant 0 : index
    %0 = vector.load %arg1[%c0, %c0_0, %c0_1] : memref<1x20x64xf32, #tpu.memory_space<vmem>>, vector<1x20x64xf32>
    %1 = vector.shape_cast %0 : vector<1x20x64xf32> to vector<20x64xf32>
    %2 = vector.extract_strided_slice %1 {offsets = [0, 0], sizes = [18, 64], strides = [1, 1]} : vector<20x64xf32> to vector<18x64xf32>
    %c0_2 = arith.constant 0 : index
    %c0_3 = arith.constant 0 : index
    %c0_4 = arith.constant 0 : index
    %3 = vector.load %arg2[%c0_2, %c0_3, %c0_4] : memref<3x64x256xf32, #tpu.memory_space<vmem>>, vector<1x64x256xf32>
    %4 = vector.shape_cast %3 : vector<1x64x256xf32> to vector<64x256xf32>
    %cst = arith.constant dense<0.000000e+00> : vector<18x256xf32>
    %5 = tpu.matmul %2, %4, %cst {dimension_numbers = #tpu.dot_dimension_numbers<[1], [0], [0], [1], [0, 0, 1, 1], [], []>} : vector<18x64xf32>, vector<64x256xf32>, vector<18x256xf32> -> vector<18x256xf32>
    %6 = vector.extract_strided_slice %1 {offsets = [1, 0], sizes = [18, 64], strides = [1, 1]} : vector<20x64xf32> to vector<18x64xf32>
    %c1 = arith.constant 1 : index
    %c0_5 = arith.constant 0 : index
    %c0_6 = arith.constant 0 : index
    %7 = vector.load %arg2[%c1, %c0_5, %c0_6] : memref<3x64x256xf32, #tpu.memory_space<vmem>>, vector<1x64x256xf32>
    %8 = vector.shape_cast %7 : vector<1x64x256xf32> to vector<64x256xf32>
    %cst_7 = arith.constant dense<0.000000e+00> : vector<18x256xf32>
    %9 = tpu.matmul %6, %8, %cst_7 {dimension_numbers = #tpu.dot_dimension_numbers<[1], [0], [0], [1], [0, 0, 1, 1], [], []>} : vector<18x64xf32>, vector<64x256xf32>, vector<18x256xf32> -> vector<18x256xf32>
    %10 = arith.addf %5, %9 : vector<18x256xf32>
    %11 = vector.extract_strided_slice %1 {offsets = [2, 0], sizes = [18, 64], strides = [1, 1]} : vector<20x64xf32> to vector<18x64xf32>
    %c2 = arith.constant 2 : index
    %c0_8 = arith.constant 0 : index
    %c0_9 = arith.constant 0 : index
    %12 = vector.load %arg2[%c2, %c0_8, %c0_9] : memref<3x64x256xf32, #tpu.memory_space<vmem>>, vector<1x64x256xf32>
    %13 = vector.shape_cast %12 : vector<1x64x256xf32> to vector<64x256xf32>
    %cst_10 = arith.constant dense<0.000000e+00> : vector<18x256xf32>
    %14 = tpu.matmul %11, %13, %cst_10 {dimension_numbers = #tpu.dot_dimension_numbers<[1], [0], [0], [1], [0, 0, 1, 1], [], []>} : vector<18x64xf32>, vector<64x256xf32>, vector<18x256xf32> -> vector<18x256xf32>
    %15 = arith.addf %10, %14 : vector<18x256xf32>
    %c0_11 = arith.constant 0 : index
    %c0_12 = arith.constant 0 : index
    %16 = vector.load %arg3[%c0_11, %c0_12] : memref<1x256xf32, #tpu.memory_space<vmem>>, vector<1x256xf32>
    %17 = vector.broadcast %16 : vector<1x256xf32> to vector<18x256xf32>
    %18 = arith.mulf %15, %17 : vector<18x256xf32>
    %c0_13 = arith.constant 0 : index
    %c0_14 = arith.constant 0 : index
    %19 = vector.load %arg4[%c0_13, %c0_14] : memref<1x256xf32, #tpu.memory_space<vmem>>, vector<1x256xf32>
    %20 = vector.broadcast %19 : vector<1x256xf32> to vector<18x256xf32>
    %21 = arith.addf %18, %20 : vector<18x256xf32>
    %cst_15 = arith.constant 0.000000e+00 : f32
    %22 = vector.broadcast %cst_15 : f32 to vector<18x256xf32>
    %23 = arith.maximumf %21, %22 : vector<18x256xf32>
    %24 = vector.extract_strided_slice %23 {offsets = [0, 0], sizes = [18, 240], strides = [1, 1]} : vector<18x256xf32> to vector<18x240xf32>
    %25 = vector.extract_strided_slice %23 {offsets = [0, 16], sizes = [18, 240], strides = [1, 1]} : vector<18x256xf32> to vector<18x240xf32>
    %26 = arith.maximumf %24, %25 : vector<18x240xf32>
    %27 = vector.extract_strided_slice %26 {offsets = [0, 0], sizes = [17, 240], strides = [1, 1]} : vector<18x240xf32> to vector<17x240xf32>
    %28 = vector.extract_strided_slice %26 {offsets = [1, 0], sizes = [17, 240], strides = [1, 1]} : vector<18x240xf32> to vector<17x240xf32>
    %29 = arith.maximumf %27, %28 : vector<17x240xf32>
    %c0_16 = arith.constant 0 : index
    %c0_17 = arith.constant 0 : index
    %30 = vector.load %arg5[%c0_16, %c0_17] : memref<12x17xf32, #tpu.memory_space<vmem>>, vector<12x17xf32>
    %cst_18 = arith.constant dense<0.000000e+00> : vector<12x240xf32>
    %31 = tpu.matmul %30, %29, %cst_18 {dimension_numbers = #tpu.dot_dimension_numbers<[1], [0], [0], [1], [0, 0, 1, 1], [], []>} : vector<12x17xf32>, vector<17x240xf32>, vector<12x240xf32> -> vector<12x240xf32>
    %32 = vector.extract_strided_slice %31 {offsets = [0, 0], sizes = [10, 240], strides = [1, 1]} : vector<12x240xf32> to vector<10x240xf32>
    %c0_19 = arith.constant 0 : index
    %c0_20 = arith.constant 0 : index
    %c0_21 = arith.constant 0 : index
    %33 = vector.load %arg6[%c0_19, %c0_20, %c0_21] : memref<3x240x256xf32, #tpu.memory_space<vmem>>, vector<1x240x256xf32>
    %34 = vector.shape_cast %33 : vector<1x240x256xf32> to vector<240x256xf32>
    %cst_22 = arith.constant dense<0.000000e+00> : vector<10x256xf32>
    %35 = tpu.matmul %32, %34, %cst_22 {dimension_numbers = #tpu.dot_dimension_numbers<[1], [0], [0], [1], [0, 0, 1, 1], [], []>} : vector<10x240xf32>, vector<240x256xf32>, vector<10x256xf32> -> vector<10x256xf32>
    %36 = vector.extract_strided_slice %31 {offsets = [1, 0], sizes = [10, 240], strides = [1, 1]} : vector<12x240xf32> to vector<10x240xf32>
    %c1_23 = arith.constant 1 : index
    %c0_24 = arith.constant 0 : index
    %c0_25 = arith.constant 0 : index
    %37 = vector.load %arg6[%c1_23, %c0_24, %c0_25] : memref<3x240x256xf32, #tpu.memory_space<vmem>>, vector<1x240x256xf32>
    %38 = vector.shape_cast %37 : vector<1x240x256xf32> to vector<240x256xf32>
    %cst_26 = arith.constant dense<0.000000e+00> : vector<10x256xf32>
    %39 = tpu.matmul %36, %38, %cst_26 {dimension_numbers = #tpu.dot_dimension_numbers<[1], [0], [0], [1], [0, 0, 1, 1], [], []>} : vector<10x240xf32>, vector<240x256xf32>, vector<10x256xf32> -> vector<10x256xf32>
    %40 = arith.addf %35, %39 : vector<10x256xf32>
    %41 = vector.extract_strided_slice %31 {offsets = [2, 0], sizes = [10, 240], strides = [1, 1]} : vector<12x240xf32> to vector<10x240xf32>
    %c2_27 = arith.constant 2 : index
    %c0_28 = arith.constant 0 : index
    %c0_29 = arith.constant 0 : index
    %42 = vector.load %arg6[%c2_27, %c0_28, %c0_29] : memref<3x240x256xf32, #tpu.memory_space<vmem>>, vector<1x240x256xf32>
    %43 = vector.shape_cast %42 : vector<1x240x256xf32> to vector<240x256xf32>
    %cst_30 = arith.constant dense<0.000000e+00> : vector<10x256xf32>
    %44 = tpu.matmul %41, %43, %cst_30 {dimension_numbers = #tpu.dot_dimension_numbers<[1], [0], [0], [1], [0, 0, 1, 1], [], []>} : vector<10x240xf32>, vector<240x256xf32>, vector<10x256xf32> -> vector<10x256xf32>
    %45 = arith.addf %40, %44 : vector<10x256xf32>
    %c0_31 = arith.constant 0 : index
    %c0_32 = arith.constant 0 : index
    %46 = vector.load %arg7[%c0_31, %c0_32] : memref<1x256xf32, #tpu.memory_space<vmem>>, vector<1x256xf32>
    %47 = vector.broadcast %46 : vector<1x256xf32> to vector<10x256xf32>
    %48 = arith.mulf %45, %47 : vector<10x256xf32>
    %c0_33 = arith.constant 0 : index
    %c0_34 = arith.constant 0 : index
    %49 = vector.load %arg8[%c0_33, %c0_34] : memref<1x256xf32, #tpu.memory_space<vmem>>, vector<1x256xf32>
    %50 = vector.broadcast %49 : vector<1x256xf32> to vector<10x256xf32>
    %51 = arith.addf %48, %50 : vector<10x256xf32>
    %cst_35 = arith.constant 0.000000e+00 : f32
    %52 = vector.broadcast %cst_35 : f32 to vector<10x256xf32>
    %53 = arith.maximumf %51, %52 : vector<10x256xf32>
    %54 = vector.extract_strided_slice %53 {offsets = [0, 0], sizes = [10, 224], strides = [1, 1]} : vector<10x256xf32> to vector<10x224xf32>
    %55 = vector.extract_strided_slice %53 {offsets = [0, 32], sizes = [10, 224], strides = [1, 1]} : vector<10x256xf32> to vector<10x224xf32>
    %56 = arith.maximumf %54, %55 : vector<10x224xf32>
    %57 = vector.extract_strided_slice %56 {offsets = [0, 0], sizes = [9, 224], strides = [1, 1]} : vector<10x224xf32> to vector<9x224xf32>
    %58 = vector.extract_strided_slice %56 {offsets = [1, 0], sizes = [9, 224], strides = [1, 1]} : vector<10x224xf32> to vector<9x224xf32>
    %59 = arith.maximumf %57, %58 : vector<9x224xf32>
    %c0_36 = arith.constant 0 : index
    %c0_37 = arith.constant 0 : index
    %60 = vector.load %arg9[%c0_36, %c0_37] : memref<8x9xf32, #tpu.memory_space<vmem>>, vector<8x9xf32>
    %cst_38 = arith.constant dense<0.000000e+00> : vector<8x224xf32>
    %61 = tpu.matmul %60, %59, %cst_38 {dimension_numbers = #tpu.dot_dimension_numbers<[1], [0], [0], [1], [0, 0, 1, 1], [], []>} : vector<8x9xf32>, vector<9x224xf32>, vector<8x224xf32> -> vector<8x224xf32>
    %62 = vector.extract_strided_slice %61 {offsets = [0, 0], sizes = [6, 224], strides = [1, 1]} : vector<8x224xf32> to vector<6x224xf32>
    %c0_39 = arith.constant 0 : index
    %c0_40 = arith.constant 0 : index
    %c0_41 = arith.constant 0 : index
    %63 = vector.load %arg10[%c0_39, %c0_40, %c0_41] : memref<3x224x256xf32, #tpu.memory_space<vmem>>, vector<1x224x256xf32>
    %64 = vector.shape_cast %63 : vector<1x224x256xf32> to vector<224x256xf32>
    %cst_42 = arith.constant dense<0.000000e+00> : vector<6x256xf32>
    %65 = tpu.matmul %62, %64, %cst_42 {dimension_numbers = #tpu.dot_dimension_numbers<[1], [0], [0], [1], [0, 0, 1, 1], [], []>} : vector<6x224xf32>, vector<224x256xf32>, vector<6x256xf32> -> vector<6x256xf32>
    %66 = vector.extract_strided_slice %61 {offsets = [1, 0], sizes = [6, 224], strides = [1, 1]} : vector<8x224xf32> to vector<6x224xf32>
    %c1_43 = arith.constant 1 : index
    %c0_44 = arith.constant 0 : index
    %c0_45 = arith.constant 0 : index
    %67 = vector.load %arg10[%c1_43, %c0_44, %c0_45] : memref<3x224x256xf32, #tpu.memory_space<vmem>>, vector<1x224x256xf32>
    %68 = vector.shape_cast %67 : vector<1x224x256xf32> to vector<224x256xf32>
    %cst_46 = arith.constant dense<0.000000e+00> : vector<6x256xf32>
    %69 = tpu.matmul %66, %68, %cst_46 {dimension_numbers = #tpu.dot_dimension_numbers<[1], [0], [0], [1], [0, 0, 1, 1], [], []>} : vector<6x224xf32>, vector<224x256xf32>, vector<6x256xf32> -> vector<6x256xf32>
    %70 = arith.addf %65, %69 : vector<6x256xf32>
    %71 = vector.extract_strided_slice %61 {offsets = [2, 0], sizes = [6, 224], strides = [1, 1]} : vector<8x224xf32> to vector<6x224xf32>
    %c2_47 = arith.constant 2 : index
    %c0_48 = arith.constant 0 : index
    %c0_49 = arith.constant 0 : index
    %72 = vector.load %arg10[%c2_47, %c0_48, %c0_49] : memref<3x224x256xf32, #tpu.memory_space<vmem>>, vector<1x224x256xf32>
    %73 = vector.shape_cast %72 : vector<1x224x256xf32> to vector<224x256xf32>
    %cst_50 = arith.constant dense<0.000000e+00> : vector<6x256xf32>
    %74 = tpu.matmul %71, %73, %cst_50 {dimension_numbers = #tpu.dot_dimension_numbers<[1], [0], [0], [1], [0, 0, 1, 1], [], []>} : vector<6x224xf32>, vector<224x256xf32>, vector<6x256xf32> -> vector<6x256xf32>
    %75 = arith.addf %70, %74 : vector<6x256xf32>
    %c0_51 = arith.constant 0 : index
    %c0_52 = arith.constant 0 : index
    %76 = vector.load %arg11[%c0_51, %c0_52] : memref<1x256xf32, #tpu.memory_space<vmem>>, vector<1x256xf32>
    %77 = vector.broadcast %76 : vector<1x256xf32> to vector<6x256xf32>
    %78 = arith.mulf %75, %77 : vector<6x256xf32>
    %c0_53 = arith.constant 0 : index
    %c0_54 = arith.constant 0 : index
    %79 = vector.load %arg12[%c0_53, %c0_54] : memref<1x256xf32, #tpu.memory_space<vmem>>, vector<1x256xf32>
    %80 = vector.broadcast %79 : vector<1x256xf32> to vector<6x256xf32>
    %81 = arith.addf %78, %80 : vector<6x256xf32>
    %cst_55 = arith.constant 0.000000e+00 : f32
    %82 = vector.broadcast %cst_55 : f32 to vector<6x256xf32>
    %83 = arith.maximumf %81, %82 : vector<6x256xf32>
    %84 = vector.extract_strided_slice %83 {offsets = [0, 0], sizes = [6, 192], strides = [1, 1]} : vector<6x256xf32> to vector<6x192xf32>
    %85 = vector.extract_strided_slice %83 {offsets = [0, 64], sizes = [6, 192], strides = [1, 1]} : vector<6x256xf32> to vector<6x192xf32>
    %86 = arith.maximumf %84, %85 : vector<6x192xf32>
    %87 = vector.extract_strided_slice %86 {offsets = [0, 0], sizes = [5, 192], strides = [1, 1]} : vector<6x192xf32> to vector<5x192xf32>
    %88 = vector.extract_strided_slice %86 {offsets = [1, 0], sizes = [5, 192], strides = [1, 1]} : vector<6x192xf32> to vector<5x192xf32>
    %89 = arith.maximumf %87, %88 : vector<5x192xf32>
    %c0_56 = arith.constant 0 : index
    %c0_57 = arith.constant 0 : index
    %90 = vector.load %arg13[%c0_56, %c0_57] : memref<6x5xf32, #tpu.memory_space<vmem>>, vector<6x5xf32>
    %cst_58 = arith.constant dense<0.000000e+00> : vector<6x192xf32>
    %91 = tpu.matmul %90, %89, %cst_58 {dimension_numbers = #tpu.dot_dimension_numbers<[1], [0], [0], [1], [0, 0, 1, 1], [], []>} : vector<6x5xf32>, vector<5x192xf32>, vector<6x192xf32> -> vector<6x192xf32>
    %92 = vector.extract_strided_slice %91 {offsets = [0, 0], sizes = [4, 192], strides = [1, 1]} : vector<6x192xf32> to vector<4x192xf32>
    %c0_59 = arith.constant 0 : index
    %c0_60 = arith.constant 0 : index
    %c0_61 = arith.constant 0 : index
    %93 = vector.load %arg14[%c0_59, %c0_60, %c0_61] : memref<3x192x256xf32, #tpu.memory_space<vmem>>, vector<1x192x256xf32>
    %94 = vector.shape_cast %93 : vector<1x192x256xf32> to vector<192x256xf32>
    %cst_62 = arith.constant dense<0.000000e+00> : vector<4x256xf32>
    %95 = tpu.matmul %92, %94, %cst_62 {dimension_numbers = #tpu.dot_dimension_numbers<[1], [0], [0], [1], [0, 0, 1, 1], [], []>} : vector<4x192xf32>, vector<192x256xf32>, vector<4x256xf32> -> vector<4x256xf32>
    %96 = vector.extract_strided_slice %91 {offsets = [1, 0], sizes = [4, 192], strides = [1, 1]} : vector<6x192xf32> to vector<4x192xf32>
    %c1_63 = arith.constant 1 : index
    %c0_64 = arith.constant 0 : index
    %c0_65 = arith.constant 0 : index
    %97 = vector.load %arg14[%c1_63, %c0_64, %c0_65] : memref<3x192x256xf32, #tpu.memory_space<vmem>>, vector<1x192x256xf32>
    %98 = vector.shape_cast %97 : vector<1x192x256xf32> to vector<192x256xf32>
    %cst_66 = arith.constant dense<0.000000e+00> : vector<4x256xf32>
    %99 = tpu.matmul %96, %98, %cst_66 {dimension_numbers = #tpu.dot_dimension_numbers<[1], [0], [0], [1], [0, 0, 1, 1], [], []>} : vector<4x192xf32>, vector<192x256xf32>, vector<4x256xf32> -> vector<4x256xf32>
    %100 = arith.addf %95, %99 : vector<4x256xf32>
    %101 = vector.extract_strided_slice %91 {offsets = [2, 0], sizes = [4, 192], strides = [1, 1]} : vector<6x192xf32> to vector<4x192xf32>
    %c2_67 = arith.constant 2 : index
    %c0_68 = arith.constant 0 : index
    %c0_69 = arith.constant 0 : index
    %102 = vector.load %arg14[%c2_67, %c0_68, %c0_69] : memref<3x192x256xf32, #tpu.memory_space<vmem>>, vector<1x192x256xf32>
    %103 = vector.shape_cast %102 : vector<1x192x256xf32> to vector<192x256xf32>
    %cst_70 = arith.constant dense<0.000000e+00> : vector<4x256xf32>
    %104 = tpu.matmul %101, %103, %cst_70 {dimension_numbers = #tpu.dot_dimension_numbers<[1], [0], [0], [1], [0, 0, 1, 1], [], []>} : vector<4x192xf32>, vector<192x256xf32>, vector<4x256xf32> -> vector<4x256xf32>
    %105 = arith.addf %100, %104 : vector<4x256xf32>
    %c0_71 = arith.constant 0 : index
    %c0_72 = arith.constant 0 : index
    %106 = vector.load %arg15[%c0_71, %c0_72] : memref<1x256xf32, #tpu.memory_space<vmem>>, vector<1x256xf32>
    %107 = vector.broadcast %106 : vector<1x256xf32> to vector<4x256xf32>
    %108 = arith.mulf %105, %107 : vector<4x256xf32>
    %c0_73 = arith.constant 0 : index
    %c0_74 = arith.constant 0 : index
    %109 = vector.load %arg16[%c0_73, %c0_74] : memref<1x256xf32, #tpu.memory_space<vmem>>, vector<1x256xf32>
    %110 = vector.broadcast %109 : vector<1x256xf32> to vector<4x256xf32>
    %111 = arith.addf %108, %110 : vector<4x256xf32>
    %cst_75 = arith.constant 0.000000e+00 : f32
    %112 = vector.broadcast %cst_75 : f32 to vector<4x256xf32>
    %113 = arith.maximumf %111, %112 : vector<4x256xf32>
    %114 = vector.extract_strided_slice %113 {offsets = [0, 0], sizes = [4, 128], strides = [1, 1]} : vector<4x256xf32> to vector<4x128xf32>
    %115 = vector.extract_strided_slice %113 {offsets = [0, 128], sizes = [4, 128], strides = [1, 1]} : vector<4x256xf32> to vector<4x128xf32>
    %116 = arith.addf %114, %115 : vector<4x128xf32>
    %117 = vector.extract_strided_slice %116 {offsets = [0, 0], sizes = [1, 128], strides = [1, 1]} : vector<4x128xf32> to vector<1x128xf32>
    %118 = vector.extract_strided_slice %116 {offsets = [1, 0], sizes = [1, 128], strides = [1, 1]} : vector<4x128xf32> to vector<1x128xf32>
    %119 = arith.addf %117, %118 : vector<1x128xf32>
    %c0_76 = arith.constant 0 : index
    %c0_77 = arith.constant 0 : index
    %120 = vector.load %arg17[%c0_76, %c0_77] : memref<128x128xf32, #tpu.memory_space<vmem>>, vector<128x128xf32>
    %cst_78 = arith.constant dense<0.000000e+00> : vector<1x128xf32>
    %121 = tpu.matmul %119, %120, %cst_78 {dimension_numbers = #tpu.dot_dimension_numbers<[1], [0], [0], [1], [0, 0, 1, 1], [], []>} : vector<1x128xf32>, vector<128x128xf32>, vector<1x128xf32> -> vector<1x128xf32>
    %c0_79 = arith.constant 0 : index
    %c0_80 = arith.constant 0 : index
    %122 = vector.load %arg18[%c0_79, %c0_80] : memref<1x128xf32, #tpu.memory_space<vmem>>, vector<1x128xf32>
    %123 = arith.addf %121, %122 : vector<1x128xf32>
    %cst_81 = arith.constant 0.000000e+00 : f32
    %124 = vector.broadcast %cst_81 : f32 to vector<1x128xf32>
    %125 = arith.maximumf %123, %124 : vector<1x128xf32>
    %c0_82 = arith.constant 0 : index
    %c0_83 = arith.constant 0 : index
    %126 = vector.load %arg19[%c0_82, %c0_83] : memref<128x128xf32, #tpu.memory_space<vmem>>, vector<128x128xf32>
    %cst_84 = arith.constant dense<0.000000e+00> : vector<1x128xf32>
    %127 = tpu.matmul %125, %126, %cst_84 {dimension_numbers = #tpu.dot_dimension_numbers<[1], [0], [0], [1], [0, 0, 1, 1], [], []>} : vector<1x128xf32>, vector<128x128xf32>, vector<1x128xf32> -> vector<1x128xf32>
    %c0_85 = arith.constant 0 : index
    %c0_86 = arith.constant 0 : index
    %128 = vector.load %arg20[%c0_85, %c0_86] : memref<1x128xf32, #tpu.memory_space<vmem>>, vector<1x128xf32>
    %129 = arith.addf %127, %128 : vector<1x128xf32>
    %130 = vector.shape_cast %129 : vector<1x128xf32> to vector<1x1x128xf32>
    %c0_87 = arith.constant 0 : index
    %c0_88 = arith.constant 0 : index
    %c0_89 = arith.constant 0 : index
    %131 = vector.load %arg21[%c0_87, %c0_88, %c0_89] : memref<1x1x128xf32, #tpu.memory_space<vmem>>, vector<1x1x128xf32>
    tpu.vector_store %arg21[%c0_87, %c0_88, %c0_89], %130 {strides = array<i32>} : memref<1x1x128xf32, #tpu.memory_space<vmem>>, vector<1x1x128xf32>,
    return
  }
  func.func @transform_0(%arg0: i32) -> (i32, i32, i32) {
    %c0_i32 = arith.constant 0 : i32
    %c0_i32_0 = arith.constant 0 : i32
    %c0_i32_1 = arith.constant 0 : i32
    return %arg0, %c0_i32, %c0_i32_0 : i32, i32, i32
  }
  func.func @transform_1(%arg0: i32) -> (i32, i32, i32) {
    %c0_i32 = arith.constant 0 : i32
    %c0_i32_0 = arith.constant 0 : i32
    %c0_i32_1 = arith.constant 0 : i32
    %c0_i32_2 = arith.constant 0 : i32
    return %c0_i32, %c0_i32_0, %c0_i32_1 : i32, i32, i32
  }
  func.func @transform_2(%arg0: i32) -> (i32, i32) {
    %c0_i32 = arith.constant 0 : i32
    %c0_i32_0 = arith.constant 0 : i32
    %c0_i32_1 = arith.constant 0 : i32
    return %c0_i32, %c0_i32_0 : i32, i32
  }
  func.func @transform_3(%arg0: i32) -> (i32, i32) {
    %c0_i32 = arith.constant 0 : i32
    %c0_i32_0 = arith.constant 0 : i32
    %c0_i32_1 = arith.constant 0 : i32
    return %c0_i32, %c0_i32_0 : i32, i32
  }
  func.func @transform_4(%arg0: i32) -> (i32, i32) {
    %c0_i32 = arith.constant 0 : i32
    %c0_i32_0 = arith.constant 0 : i32
    %c0_i32_1 = arith.constant 0 : i32
    return %c0_i32, %c0_i32_0 : i32, i32
  }
  func.func @transform_5(%arg0: i32) -> (i32, i32, i32) {
    %c0_i32 = arith.constant 0 : i32
    %c0_i32_0 = arith.constant 0 : i32
    %c0_i32_1 = arith.constant 0 : i32
    %c0_i32_2 = arith.constant 0 : i32
    return %c0_i32, %c0_i32_0, %c0_i32_1 : i32, i32, i32
  }
  func.func @transform_6(%arg0: i32) -> (i32, i32) {
    %c0_i32 = arith.constant 0 : i32
    %c0_i32_0 = arith.constant 0 : i32
    %c0_i32_1 = arith.constant 0 : i32
    return %c0_i32, %c0_i32_0 : i32, i32
  }
  func.func @transform_7(%arg0: i32) -> (i32, i32) {
    %c0_i32 = arith.constant 0 : i32
    %c0_i32_0 = arith.constant 0 : i32
    %c0_i32_1 = arith.constant 0 : i32
    return %c0_i32, %c0_i32_0 : i32, i32
  }
  func.func @transform_8(%arg0: i32) -> (i32, i32) {
    %c0_i32 = arith.constant 0 : i32
    %c0_i32_0 = arith.constant 0 : i32
    %c0_i32_1 = arith.constant 0 : i32
    return %c0_i32, %c0_i32_0 : i32, i32
  }
  func.func @transform_9(%arg0: i32) -> (i32, i32, i32) {
    %c0_i32 = arith.constant 0 : i32
    %c0_i32_0 = arith.constant 0 : i32
    %c0_i32_1 = arith.constant 0 : i32
    %c0_i32_2 = arith.constant 0 : i32
    return %c0_i32, %c0_i32_0, %c0_i32_1 : i32, i32, i32
  }
  func.func @transform_10(%arg0: i32) -> (i32, i32) {
    %c0_i32 = arith.constant 0 : i32
    %c0_i32_0 = arith.constant 0 : i32
    %c0_i32_1 = arith.constant 0 : i32
    return %c0_i32, %c0_i32_0 : i32, i32
  }
  func.func @transform_11(%arg0: i32) -> (i32, i32) {
    %c0_i32 = arith.constant 0 : i32
    %c0_i32_0 = arith.constant 0 : i32
    %c0_i32_1 = arith.constant 0 : i32
    return %c0_i32, %c0_i32_0 : i32, i32
  }
  func.func @transform_12(%arg0: i32) -> (i32, i32) {
    %c0_i32 = arith.constant 0 : i32
    %c0_i32_0 = arith.constant 0 : i32
    %c0_i32_1 = arith.constant 0 : i32
    return %c0_i32, %c0_i32_0 : i32, i32
  }
  func.func @transform_13(%arg0: i32) -> (i32, i32, i32) {
    %c0_i32 = arith.constant 0 : i32
    %c0_i32_0 = arith.constant 0 : i32
    %c0_i32_1 = arith.constant 0 : i32
    %c0_i32_2 = arith.constant 0 : i32
    return %c0_i32, %c0_i32_0, %c0_i32_1 : i32, i32, i32
  }
  func.func @transform_14(%arg0: i32) -> (i32, i32) {
    %c0_i32 = arith.constant 0 : i32
    %c0_i32_0 = arith.constant 0 : i32
    %c0_i32_1 = arith.constant 0 : i32
    return %c0_i32, %c0_i32_0 : i32, i32
  }
  func.func @transform_15(%arg0: i32) -> (i32, i32) {
    %c0_i32 = arith.constant 0 : i32
    %c0_i32_0 = arith.constant 0 : i32
    %c0_i32_1 = arith.constant 0 : i32
    return %c0_i32, %c0_i32_0 : i32, i32
  }
  func.func @transform_16(%arg0: i32) -> (i32, i32) {
    %c0_i32 = arith.constant 0 : i32
    %c0_i32_0 = arith.constant 0 : i32
    %c0_i32_1 = arith.constant 0 : i32
    return %c0_i32, %c0_i32_0 : i32, i32
  }
  func.func @transform_17(%arg0: i32) -> (i32, i32) {
    %c0_i32 = arith.constant 0 : i32
    %c0_i32_0 = arith.constant 0 : i32
    %c0_i32_1 = arith.constant 0 : i32
    return %c0_i32, %c0_i32_0 : i32, i32
  }
  func.func @transform_18(%arg0: i32) -> (i32, i32) {
    %c0_i32 = arith.constant 0 : i32
    %c0_i32_0 = arith.constant 0 : i32
    %c0_i32_1 = arith.constant 0 : i32
    return %c0_i32, %c0_i32_0 : i32, i32
  }
  func.func @transform_19(%arg0: i32) -> (i32, i32) {
    %c0_i32 = arith.constant 0 : i32
    %c0_i32_0 = arith.constant 0 : i32
    %c0_i32_1 = arith.constant 0 : i32
    return %c0_i32, %c0_i32_0 : i32, i32
  }
  func.func @transform_20(%arg0: i32) -> (i32, i32, i32) {
    %c0_i32 = arith.constant 0 : i32
    %c0_i32_0 = arith.constant 0 : i32
    %c0_i32_1 = arith.constant 0 : i32
    return %arg0, %c0_i32, %c0_i32_0 : i32, i32, i32
  }
}

</mosaic_0001>

<llo_original>
// kernel: forward.1
$region0: #{forward.1}
  #allocation0 [shape = 'u32[]', space=smem, size = 0x4, offset = 0x4, fixed_abs, tag = 'smem constant byte address 0x4 - core index']
  #allocation1 [shape = 'u32[144,128]{1,0:T(1,128)}', space=vmem, size = 0x12000, scoped, tag = 'internal scratch']
  %s0 = inlined_call_operand.vmem [shape: f32[2,20,64], index: 0, kind: input, shape index: {}]
  %s1 = inlined_call_operand.vmem [shape: f32[3,64,256], index: 1, kind: input, shape index: {}]
  %s2 = inlined_call_operand.vmem [shape: f32[1,256], index: 2, kind: input, shape index: {}]
  %s3 = inlined_call_operand.hbm [shape: f32[1,256], index: 3, kind: input, shape index: {}]
  %s4 = inlined_call_operand.vmem [shape: f32[12,17], index: 4, kind: input, shape index: {}]
  %s5 = inlined_call_operand.hbm [shape: f32[3,240,256], index: 5, kind: input, shape index: {}]
  %s6 = inlined_call_operand.vmem [shape: f32[1,256], index: 6, kind: input, shape index: {}]
  %s7 = inlined_call_operand.hbm [shape: f32[1,256], index: 7, kind: input, shape index: {}]
  %s8 = inlined_call_operand.vmem [shape: f32[8,9], index: 8, kind: input, shape index: {}]
  %s9 = inlined_call_operand.hbm [shape: f32[3,224,256], index: 9, kind: input, shape index: {}]
  %s10 = inlined_call_operand.vmem [shape: f32[1,256], index: 10, kind: input, shape index: {}]
  %s11 = inlined_call_operand.hbm [shape: f32[1,256], index: 11, kind: input, shape index: {}]
  %s12 = inlined_call_operand.vmem [shape: f32[6,5], index: 12, kind: input, shape index: {}]
  %s13 = inlined_call_operand.hbm [shape: f32[3,192,256], index: 13, kind: input, shape index: {}]
  %s14 = inlined_call_operand.vmem [shape: f32[1,256], index: 14, kind: input, shape index: {}]
  %s15 = inlined_call_operand.hbm [shape: f32[1,256], index: 15, kind: input, shape index: {}]
  %s16 = inlined_call_operand.vmem [shape: f32[128,128], index: 16, kind: input, shape index: {}]
  %s17 = inlined_call_operand.hbm [shape: f32[1,128], index: 17, kind: input, shape index: {}]
  %s18 = inlined_call_operand.hbm [shape: f32[128,128], index: 18, kind: input, shape index: {}]
  %s19 = inlined_call_operand.hbm [shape: f32[1,128], index: 19, kind: input, shape index: {}]
  %s20 = inlined_call_operand.vmem [shape: f32[2,1,128], index: 20, kind: output, shape index: {}]
  %s21 = sld [smem:[#allocation0]]
  $region153: #{forward.1} parent=0
    _
  %s23 = ssub.s32 1, %s21
  %s24 = scalar_select 0, %s23, %s21
  $region1: #{forward.1} parent=0
    #allocation2 [shape = 'u8[1024]{0}', space=vmem, size = 0x400, scoped, tag = 'input window, operand 3, single buffered']
    #allocation3 [shape = 's32[2]{0}', space=sflag, size = 0x8, scoped, tag = 'scoped memory for forward.1']
    #allocation4 [shape = 'u8[737280]{0}', space=vmem, size = 0xb4000, scoped, tag = 'input window, operand 5, single buffered']
    #allocation5 [shape = 's32[1]{0}', space=sflag, size = 0x4, scoped, tag = 'scoped memory for forward.1']
    #allocation6 [shape = 'u8[1024]{0}', space=vmem, size = 0x400, scoped, tag = 'input window, operand 7, single buffered']
    #allocation7 [shape = 'u8[688128]{0}', space=vmem, size = 0xa8000, scoped, tag = 'input window, operand 9, single buffered']
    #allocation8 [shape = 's32[1]{0}', space=sflag, size = 0x4, scoped, tag = 'scoped memory for forward.1']
    #allocation9 [shape = 'u8[1024]{0}', space=vmem, size = 0x400, scoped, tag = 'input window, operand 11, single buffered']
    #allocation10 [shape = 'u8[589824]{0}', space=vmem, size = 0x90000, scoped, tag = 'input window, operand 13, single buffered']
    #allocation11 [shape = 's32[1]{0}', space=sflag, size = 0x4, scoped, tag = 'scoped memory for forward.1']
    #allocation12 [shape = 'u8[1024]{0}', space=vmem, size = 0x400, scoped, tag = 'input window, operand 15, single buffered']
    #allocation13 [shape = 'u8[512]{0}', space=vmem, size = 0x400, scoped, tag = 'input window, operand 17, single buffered']
    #allocation14 [shape = 's32[1]{0}', space=sflag, size = 0x4, scoped, tag = 'scoped memory for forward.1']
    #allocation15 [shape = 'u8[65536]{0}', space=vmem, size = 0x10000, scoped, tag = 'input window, operand 18, single buffered']
    #allocation16 [shape = 'u8[512]{0}', space=vmem, size = 0x400, scoped, tag = 'input window, operand 19, single buffered']
    #allocation17 [shape = 's32[1]{0}', space=sflag, size = 0x4, scoped, tag = 'scoped memory for forward.1']
    %25 = vsyncpa [#allocation3], 0
    %26 = vsyncpa [#allocation5], 0
    %27 = vsyncpa [#allocation8], 0
    %28 = vsyncpa [#allocation11], 0
    %29 = vsyncpa [#allocation14], 0
    %30 = vsyncpa [#allocation17], 0
    loop: start=0, step=1, limit=4
    $region2: #{forward.1} parent=1 // loop_pre_header
      _
    $region3: #{forward.1} parent=1 // loop_header
      %s32 = sphi 0, %s36
      %p33 = scmp.ge.s32.totalorder %s32, 4
      %s42 = sphi 0, %s44
      %s45 = sphi 0, %s42
      %s46 = sphi 0, %s45
      %s62 = sphi 0, %s46
      %s66 = sphi 0, %s66
      %s68 = sphi 0, %s66
      %s69 = sphi 0, %s68
      %s83 = sphi 0, %s69
      %s87 = sphi 0, %s87
      %s89 = sphi 0, %s87
      %s90 = sphi 0, %s89
      %s104 = sphi 0, %s90
      %s108 = sphi 0, %s108
      %s110 = sphi 0, %s108
      %s111 = sphi 0, %s110
      %s125 = sphi 0, %s111
      %s129 = sphi 0, %s129
      %s131 = sphi 0, %s129
      %s132 = sphi 0, %s131
      %s146 = sphi 0, %s132
      %s150 = sphi 0, %s150
      %s152 = sphi 0, %s150
      %s153 = sphi 0, %s152
      %s167 = sphi 0, %s153
      %s171 = sphi 0, %s171
      %s173 = sphi 0, %s171
      %s174 = sphi 0, %s173
      %s188 = sphi 0, %s174
      %s192 = sphi 0, %s192
      %s194 = sphi 0, %s192
      %s195 = sphi 0, %s194
      %s209 = sphi 0, %s195
      %s213 = sphi 0, %s213
      %s215 = sphi 0, %s213
      %s216 = sphi 0, %s215
      %s230 = sphi 0, %s216
      %s234 = sphi 0, %s234
      %s236 = sphi 0, %s234
      %s237 = sphi 0, %s236
      %s251 = sphi 0, %s237
      %s255 = sphi 0, %s255
      %s257 = sphi 0, %s255
      %s258 = sphi 0, %s257
      %s272 = sphi 0, %s258
      %s276 = sphi 0, %s276
      %s278 = sphi 0, %s276
      %s279 = sphi 0, %s278
      %s293 = sphi 0, %s279
      %s297 = sphi 0, %s297
      %s299 = sphi 0, %s297
      %s300 = sphi 0, %s299
      %s314 = sphi 0, %s300
      %s318 = sphi 0, %s318
      %s320 = sphi 0, %s318
      %s321 = sphi 0, %s320
      %s335 = sphi 0, %s321
      %s339 = sphi 0, %s339
      %s341 = sphi 0, %s339
      %s342 = sphi 0, %s341
      %s356 = sphi 0, %s342
      %s360 = sphi 0, %s360
      %s362 = sphi 0, %s360
      %s363 = sphi 0, %s362
      %s377 = sphi 0, %s363
      %s381 = sphi 0, %s381
      %s383 = sphi 0, %s381
      %s384 = sphi 0, %s383
      %s398 = sphi 0, %s384
      %s402 = sphi 0, %s402
      %s404 = sphi 0, %s402
      %s405 = sphi 0, %s404
      %s419 = sphi 0, %s405
      %s423 = sphi 0, %s423
      %s425 = sphi 0, %s423
      %s426 = sphi 0, %s425
      %s440 = sphi 0, %s426
      %s444 = sphi 0, %s444
      %s446 = sphi 0, %s444
      %s447 = sphi 0, %s446
      %s461 = sphi 0, %s447
      %s467 = sphi 0, %s469
      %s470 = sphi 0, %s467
      %s471 = sphi 0, %s470
      %s487 = sphi 0, %s471
    $region4: #{forward.1} parent=1 // loop_header_branch
      %35 = sbr.rel (%p33) target = $region8
    $region5: #{forward.1} parent=1 // loop_body
      %s37 = ssub.s32 %s32, 1
      %s38 = ssub.s32 %s32, 2
      %s39 = sadd.s32 %s32, 1
      %s40 = ssub.s32 %s32, %s39
      %p41 = scmp.eq.s32.totalorder %s40, 0
      %s43 = sadd.s32 %s42, 1
      %s44 = scalar_select %p41, %s42, %s43
      %p47 = pneg %p41
      %p48 = scmp.eq.s32.totalorder %s32, 1
      %p49 = por %p47, %p48
      %p50 = scmp.ne.s32.totalorder %s42, %s45
      %p51 = scmp.eq.s32.totalorder %s32, 0
      %p52 = por %p50, %p51
      %p53 = scmp.ne.s32.totalorder %s42, %s45
      %p54 = scmp.eq.s32.totalorder %s37, 1
      %p55 = por %p53, %p54
      %p56 = scmp.ne.s32.totalorder %s45, %s46
      %p57 = scmp.eq.s32.totalorder %s37, 0
      %p58 = por %p56, %p57
      %p59 = scmp.ne.s32.totalorder %s45, %s46
      %p60 = scmp.eq.s32.totalorder %s38, 1
      %p61 = por %p59, %p60
      %p63 = scmp.ne.s32.totalorder %s46, %s62
      %p64 = scmp.eq.s32.totalorder %s38, 0
      %p65 = por %p63, %p64
      %s67 = sadd.s32 %s66, 1
      %p70 = scmp.eq.s32.totalorder %s32, 1
      %p71 = scmp.ne.s32.totalorder %s66, %s68
      %p72 = scmp.eq.s32.totalorder %s32, 0
      %p73 = por %p71, %p72
      %p74 = scmp.ne.s32.totalorder %s66, %s68
      %p75 = scmp.eq.s32.totalorder %s37, 1
      %p76 = por %p74, %p75
      %p77 = scmp.ne.s32.totalorder %s68, %s69
      %p78 = scmp.eq.s32.totalorder %s37, 0
      %p79 = por %p77, %p78
      %p80 = scmp.ne.s32.totalorder %s68, %s69
      %p81 = scmp.eq.s32.totalorder %s38, 1
      %p82 = por %p80, %p81
      %p84 = scmp.ne.s32.totalorder %s69, %s83
      %p85 = scmp.eq.s32.totalorder %s38, 0
      %p86 = por %p84, %p85
      %s88 = sadd.s32 %s87, 1
      %p91 = scmp.eq.s32.totalorder %s32, 1
      %p92 = scmp.ne.s32.totalorder %s87, %s89
      %p93 = scmp.eq.s32.totalorder %s32, 0
      %p94 = por %p92, %p93
      %p95 = scmp.ne.s32.totalorder %s87, %s89
      %p96 = scmp.eq.s32.totalorder %s37, 1
      %p97 = por %p95, %p96
      %p98 = scmp.ne.s32.totalorder %s89, %s90
      %p99 = scmp.eq.s32.totalorder %s37, 0
      %p100 = por %p98, %p99
      %p101 = scmp.ne.s32.totalorder %s89, %s90
      %p102 = scmp.eq.s32.totalorder %s38, 1
      %p103 = por %p101, %p102
      %p105 = scmp.ne.s32.totalorder %s90, %s104
      %p106 = scmp.eq.s32.totalorder %s38, 0
      %p107 = por %p105, %p106
      %s109 = sadd.s32 %s108, 1
      %p112 = scmp.eq.s32.totalorder %s32, 1
      %p113 = scmp.ne.s32.totalorder %s108, %s110
      %p114 = scmp.eq.s32.totalorder %s32, 0
      %p115 = por %p113, %p114
      %p116 = scmp.ne.s32.totalorder %s108, %s110
      %p117 = scmp.eq.s32.totalorder %s37, 1
      %p118 = por %p116, %p117
      %p119 = scmp.ne.s32.totalorder %s110, %s111
      %p120 = scmp.eq.s32.totalorder %s37, 0
      %p121 = por %p119, %p120
      %p122 = scmp.ne.s32.totalorder %s110, %s111
      %p123 = scmp.eq.s32.totalorder %s38, 1
      %p124 = por %p122, %p123
      %p126 = scmp.ne.s32.totalorder %s111, %s125
      %p127 = scmp.eq.s32.totalorder %s38, 0
      %p128 = por %p126, %p127
      %s130 = sadd.s32 %s129, 1
      %p133 = scmp.eq.s32.totalorder %s32, 1
      %p134 = scmp.ne.s32.totalorder %s129, %s131
      %p135 = scmp.eq.s32.totalorder %s32, 0
      %p136 = por %p134, %p135
      %p137 = scmp.ne.s32.totalorder %s129, %s131
      %p138 = scmp.eq.s32.totalorder %s37, 1
      %p139 = por %p137, %p138
      %p140 = scmp.ne.s32.totalorder %s131, %s132
      %p141 = scmp.eq.s32.totalorder %s37, 0
      %p142 = por %p140, %p141
      %p143 = scmp.ne.s32.totalorder %s131, %s132
      %p144 = scmp.eq.s32.totalorder %s38, 1
      %p145 = por %p143, %p144
      %p147 = scmp.ne.s32.totalorder %s132, %s146
      %p148 = scmp.eq.s32.totalorder %s38, 0
      %p149 = por %p147, %p148
      %s151 = sadd.s32 %s150, 1
      %p154 = scmp.eq.s32.totalorder %s32, 1
      %p155 = scmp.ne.s32.totalorder %s150, %s152
      %p156 = scmp.eq.s32.totalorder %s32, 0
      %p157 = por %p155, %p156
      %p158 = scmp.ne.s32.totalorder %s150, %s152
      %p159 = scmp.eq.s32.totalorder %s37, 1
      %p160 = por %p158, %p159
      %p161 = scmp.ne.s32.totalorder %s152, %s153
      %p162 = scmp.eq.s32.totalorder %s37, 0
      %p163 = por %p161, %p162
      %p164 = scmp.ne.s32.totalorder %s152, %s153
      %p165 = scmp.eq.s32.totalorder %s38, 1
      %p166 = por %p164, %p165
      %p168 = scmp.ne.s32.totalorder %s153, %s167
      %p169 = scmp.eq.s32.totalorder %s38, 0
      %p170 = por %p168, %p169
      %s172 = sadd.s32 %s171, 1
      %p175 = scmp.eq.s32.totalorder %s32, 1
      %p176 = scmp.ne.s32.totalorder %s171, %s173
      %p177 = scmp.eq.s32.totalorder %s32, 0
      %p178 = por %p176, %p177
      %p179 = scmp.ne.s32.totalorder %s171, %s173
      %p180 = scmp.eq.s32.totalorder %s37, 1
      %p181 = por %p179, %p180
      %p182 = scmp.ne.s32.totalorder %s173, %s174
      %p183 = scmp.eq.s32.totalorder %s37, 0
      %p184 = por %p182, %p183
      %p185 = scmp.ne.s32.totalorder %s173, %s174
      %p186 = scmp.eq.s32.totalorder %s38, 1
      %p187 = por %p185, %p186
      %p189 = scmp.ne.s32.totalorder %s174, %s188
      %p190 = scmp.eq.s32.totalorder %s38, 0
      %p191 = por %p189, %p190
      %s193 = sadd.s32 %s192, 1
      %p196 = scmp.eq.s32.totalorder %s32, 1
      %p197 = scmp.ne.s32.totalorder %s192, %s194
      %p198 = scmp.eq.s32.totalorder %s32, 0
      %p199 = por %p197, %p198
      %p200 = scmp.ne.s32.totalorder %s192, %s194
      %p201 = scmp.eq.s32.totalorder %s37, 1
      %p202 = por %p200, %p201
      %p203 = scmp.ne.s32.totalorder %s194, %s195
      %p204 = scmp.eq.s32.totalorder %s37, 0
      %p205 = por %p203, %p204
      %p206 = scmp.ne.s32.totalorder %s194, %s195
      %p207 = scmp.eq.s32.totalorder %s38, 1
      %p208 = por %p206, %p207
      %p210 = scmp.ne.s32.totalorder %s195, %s209
      %p211 = scmp.eq.s32.totalorder %s38, 0
      %p212 = por %p210, %p211
      %s214 = sadd.s32 %s213, 1
      %p217 = scmp.eq.s32.totalorder %s32, 1
      %p218 = scmp.ne.s32.totalorder %s213, %s215
      %p219 = scmp.eq.s32.totalorder %s32, 0
      %p220 = por %p218, %p219
      %p221 = scmp.ne.s32.totalorder %s213, %s215
      %p222 = scmp.eq.s32.totalorder %s37, 1
      %p223 = por %p221, %p222
      %p224 = scmp.ne.s32.totalorder %s215, %s216
      %p225 = scmp.eq.s32.totalorder %s37, 0
      %p226 = por %p224, %p225
      %p227 = scmp.ne.s32.totalorder %s215, %s216
      %p228 = scmp.eq.s32.totalorder %s38, 1
      %p229 = por %p227, %p228
      %p231 = scmp.ne.s32.totalorder %s216, %s230
      %p232 = scmp.eq.s32.totalorder %s38, 0
      %p233 = por %p231, %p232
      %s235 = sadd.s32 %s234, 1
      %p238 = scmp.eq.s32.totalorder %s32, 1
      %p239 = scmp.ne.s32.totalorder %s234, %s236
      %p240 = scmp.eq.s32.totalorder %s32, 0
      %p241 = por %p239, %p240
      %p242 = scmp.ne.s32.totalorder %s234, %s236
      %p243 = scmp.eq.s32.totalorder %s37, 1
      %p244 = por %p242, %p243
      %p245 = scmp.ne.s32.totalorder %s236, %s237
      %p246 = scmp.eq.s32.totalorder %s37, 0
      %p247 = por %p245, %p246
      %p248 = scmp.ne.s32.totalorder %s236, %s237
      %p249 = scmp.eq.s32.totalorder %s38, 1
      %p250 = por %p248, %p249
      %p252 = scmp.ne.s32.totalorder %s237, %s251
      %p253 = scmp.eq.s32.totalorder %s38, 0
      %p254 = por %p252, %p253
      %s256 = sadd.s32 %s255, 1
      %p259 = scmp.eq.s32.totalorder %s32, 1
      %p260 = scmp.ne.s32.totalorder %s255, %s257
      %p261 = scmp.eq.s32.totalorder %s32, 0
      %p262 = por %p260, %p261
      %p263 = scmp.ne.s32.totalorder %s255, %s257
      %p264 = scmp.eq.s32.totalorder %s37, 1
      %p265 = por %p263, %p264
      %p266 = scmp.ne.s32.totalorder %s257, %s258
      %p267 = scmp.eq.s32.totalorder %s37, 0
      %p268 = por %p266, %p267
      %p269 = scmp.ne.s32.totalorder %s257, %s258
      %p270 = scmp.eq.s32.totalorder %s38, 1
      %p271 = por %p269, %p270
      %p273 = scmp.ne.s32.totalorder %s258, %s272
      %p274 = scmp.eq.s32.totalorder %s38, 0
      %p275 = por %p273, %p274
      %s277 = sadd.s32 %s276, 1
      %p280 = scmp.eq.s32.totalorder %s32, 1
      %p281 = scmp.ne.s32.totalorder %s276, %s278
      %p282 = scmp.eq.s32.totalorder %s32, 0
      %p283 = por %p281, %p282
      %p284 = scmp.ne.s32.totalorder %s276, %s278
      %p285 = scmp.eq.s32.totalorder %s37, 1
      %p286 = por %p284, %p285
      %p287 = scmp.ne.s32.totalorder %s278, %s279
      %p288 = scmp.eq.s32.totalorder %s37, 0
      %p289 = por %p287, %p288
      %p290 = scmp.ne.s32.totalorder %s278, %s279
      %p291 = scmp.eq.s32.totalorder %s38, 1
      %p292 = por %p290, %p291
      %p294 = scmp.ne.s32.totalorder %s279, %s293
      %p295 = scmp.eq.s32.totalorder %s38, 0
      %p296 = por %p294, %p295
      %s298 = sadd.s32 %s297, 1
      %p301 = scmp.eq.s32.totalorder %s32, 1
      %p302 = scmp.ne.s32.totalorder %s297, %s299
      %p303 = scmp.eq.s32.totalorder %s32, 0
      %p304 = por %p302, %p303
      %p305 = scmp.ne.s32.totalorder %s297, %s299
      %p306 = scmp.eq.s32.totalorder %s37, 1
      %p307 = por %p305, %p306
      %p308 = scmp.ne.s32.totalorder %s299, %s300
      %p309 = scmp.eq.s32.totalorder %s37, 0
      %p310 = por %p308, %p309
      %p311 = scmp.ne.s32.totalorder %s299, %s300
      %p312 = scmp.eq.s32.totalorder %s38, 1
      %p313 = por %p311, %p312
      %p315 = scmp.ne.s32.totalorder %s300, %s314
      %p316 = scmp.eq.s32.totalorder %s38, 0
      %p317 = por %p315, %p316
      %s319 = sadd.s32 %s318, 1
      %p322 = scmp.eq.s32.totalorder %s32, 1
      %p323 = scmp.ne.s32.totalorder %s318, %s320
      %p324 = scmp.eq.s32.totalorder %s32, 0
      %p325 = por %p323, %p324
      %p326 = scmp.ne.s32.totalorder %s318, %s320
      %p327 = scmp.eq.s32.totalorder %s37, 1
      %p328 = por %p326, %p327
      %p329 = scmp.ne.s32.totalorder %s320, %s321
      %p330 = scmp.eq.s32.totalorder %s37, 0
      %p331 = por %p329, %p330
      %p332 = scmp.ne.s32.totalorder %s320, %s321
      %p333 = scmp.eq.s32.totalorder %s38, 1
      %p334 = por %p332, %p333
      %p336 = scmp.ne.s32.totalorder %s321, %s335
      %p337 = scmp.eq.s32.totalorder %s38, 0
      %p338 = por %p336, %p337
      %s340 = sadd.s32 %s339, 1
      %p343 = scmp.eq.s32.totalorder %s32, 1
      %p344 = scmp.ne.s32.totalorder %s339, %s341
      %p345 = scmp.eq.s32.totalorder %s32, 0
      %p346 = por %p344, %p345
      %p347 = scmp.ne.s32.totalorder %s339, %s341
      %p348 = scmp.eq.s32.totalorder %s37, 1
      %p349 = por %p347, %p348
      %p350 = scmp.ne.s32.totalorder %s341, %s342
      %p351 = scmp.eq.s32.totalorder %s37, 0
      %p352 = por %p350, %p351
      %p353 = scmp.ne.s32.totalorder %s341, %s342
      %p354 = scmp.eq.s32.totalorder %s38, 1
      %p355 = por %p353, %p354
      %p357 = scmp.ne.s32.totalorder %s342, %s356
      %p358 = scmp.eq.s32.totalorder %s38, 0
      %p359 = por %p357, %p358
      %s361 = sadd.s32 %s360, 1
      %p364 = scmp.eq.s32.totalorder %s32, 1
      %p365 = scmp.ne.s32.totalorder %s360, %s362
      %p366 = scmp.eq.s32.totalorder %s32, 0
      %p367 = por %p365, %p366
      %p368 = scmp.ne.s32.totalorder %s360, %s362
      %p369 = scmp.eq.s32.totalorder %s37, 1
      %p370 = por %p368, %p369
      %p371 = scmp.ne.s32.totalorder %s362, %s363
      %p372 = scmp.eq.s32.totalorder %s37, 0
      %p373 = por %p371, %p372
      %p374 = scmp.ne.s32.totalorder %s362, %s363
      %p375 = scmp.eq.s32.totalorder %s38, 1
      %p376 = por %p374, %p375
      %p378 = scmp.ne.s32.totalorder %s363, %s377
      %p379 = scmp.eq.s32.totalorder %s38, 0
      %p380 = por %p378, %p379
      %s382 = sadd.s32 %s381, 1
      %p385 = scmp.eq.s32.totalorder %s32, 1
      %p386 = scmp.ne.s32.totalorder %s381, %s383
      %p387 = scmp.eq.s32.totalorder %s32, 0
      %p388 = por %p386, %p387
      %p389 = scmp.ne.s32.totalorder %s381, %s383
      %p390 = scmp.eq.s32.totalorder %s37, 1
      %p391 = por %p389, %p390
      %p392 = scmp.ne.s32.totalorder %s383, %s384
      %p393 = scmp.eq.s32.totalorder %s37, 0
      %p394 = por %p392, %p393
      %p395 = scmp.ne.s32.totalorder %s383, %s384
      %p396 = scmp.eq.s32.totalorder %s38, 1
      %p397 = por %p395, %p396
      %p399 = scmp.ne.s32.totalorder %s384, %s398
      %p400 = scmp.eq.s32.totalorder %s38, 0
      %p401 = por %p399, %p400
      %s403 = sadd.s32 %s402, 1
      %p406 = scmp.eq.s32.totalorder %s32, 1
      %p407 = scmp.ne.s32.totalorder %s402, %s404
      %p408 = scmp.eq.s32.totalorder %s32, 0
      %p409 = por %p407, %p408
      %p410 = scmp.ne.s32.totalorder %s402, %s404
      %p411 = scmp.eq.s32.totalorder %s37, 1
      %p412 = por %p410, %p411
      %p413 = scmp.ne.s32.totalorder %s404, %s405
      %p414 = scmp.eq.s32.totalorder %s37, 0
      %p415 = por %p413, %p414
      %p416 = scmp.ne.s32.totalorder %s404, %s405
      %p417 = scmp.eq.s32.totalorder %s38, 1
      %p418 = por %p416, %p417
      %p420 = scmp.ne.s32.totalorder %s405, %s419
      %p421 = scmp.eq.s32.totalorder %s38, 0
      %p422 = por %p420, %p421
      %s424 = sadd.s32 %s423, 1
      %p427 = scmp.eq.s32.totalorder %s32, 1
      %p428 = scmp.ne.s32.totalorder %s423, %s425
      %p429 = scmp.eq.s32.totalorder %s32, 0
      %p430 = por %p428, %p429
      %p431 = scmp.ne.s32.totalorder %s423, %s425
      %p432 = scmp.eq.s32.totalorder %s37, 1
      %p433 = por %p431, %p432
      %p434 = scmp.ne.s32.totalorder %s425, %s426
      %p435 = scmp.eq.s32.totalorder %s37, 0
      %p436 = por %p434, %p435
      %p437 = scmp.ne.s32.totalorder %s425, %s426
      %p438 = scmp.eq.s32.totalorder %s38, 1
      %p439 = por %p437, %p438
      %p441 = scmp.ne.s32.totalorder %s426, %s440
      %p442 = scmp.eq.s32.totalorder %s38, 0
      %p443 = por %p441, %p442
      %s445 = sadd.s32 %s444, 1
      %p448 = scmp.eq.s32.totalorder %s32, 1
      %p449 = scmp.ne.s32.totalorder %s444, %s446
      %p450 = scmp.eq.s32.totalorder %s32, 0
      %p451 = por %p449, %p450
      %p452 = scmp.ne.s32.totalorder %s444, %s446
      %p453 = scmp.eq.s32.totalorder %s37, 1
      %p454 = por %p452, %p453
      %p455 = scmp.ne.s32.totalorder %s446, %s447
      %p456 = scmp.eq.s32.totalorder %s37, 0
      %p457 = por %p455, %p456
      %p458 = scmp.ne.s32.totalorder %s446, %s447
      %p459 = scmp.eq.s32.totalorder %s38, 1
      %p460 = por %p458, %p459
      %p462 = scmp.ne.s32.totalorder %s447, %s461
      %p463 = scmp.eq.s32.totalorder %s38, 0
      %p464 = por %p462, %p463
      %s465 = ssub.s32 %s32, %s39
      %p466 = scmp.eq.s32.totalorder %s465, 0
      %s468 = sadd.s32 %s467, 1
      %s469 = scalar_select %p466, %s467, %s468
      %p472 = pneg %p466
      %p473 = scmp.eq.s32.totalorder %s32, 1
      %p474 = por %p472, %p473
      %p475 = scmp.ne.s32.totalorder %s467, %s470
      %p476 = scmp.eq.s32.totalorder %s32, 0
      %p477 = por %p475, %p476
      %p478 = scmp.ne.s32.totalorder %s467, %s470
      %p479 = scmp.eq.s32.totalorder %s37, 1
      %p480 = por %p478, %p479
      %p481 = scmp.ne.s32.totalorder %s470, %s471
      %p482 = scmp.eq.s32.totalorder %s37, 0
      %p483 = por %p481, %p482
      %p484 = scmp.ne.s32.totalorder %s470, %s471
      %p485 = scmp.eq.s32.totalorder %s38, 1
      %p486 = por %p484, %p485
      %p488 = scmp.ne.s32.totalorder %s471, %s487
      %p489 = scmp.eq.s32.totalorder %s38, 0
      %p490 = por %p488, %p489
      %p491 = scmp.le.s32.totalorder 1, %s32
      %p492 = scmp.lt.s32.totalorder %s32, 3
      %p493 = pnand %p491, %p492
      %p494 = pneg %p493
      // Predicated region
      $region9: #{forward.1} parent=5 // pred_check
        _
      $region10: #{forward.1} parent=5 // pred_check_branch
        %496 = sbr.rel (%p493) target = $region12
      $region11: #{forward.1} parent=5 // pred_region
        %s497 = ssub.s32 %s32, 1
        // Predicated region
        $region13: #{forward.1} parent=11 // pred_check
          %p498 = pneg %p79
        $region14: #{forward.1} parent=11 // pred_check_branch
          %500 = sbr.rel (%p498) target = $region16
        $region15: #{forward.1} parent=11 // pred_region
          _
        $region16: #{forward.1} parent=11 // pred_fallthru
          _
        // Predicated region
        $region17: #{forward.1} parent=11 // pred_check
          %p501 = pneg %p100
        $region18: #{forward.1} parent=11 // pred_check_branch
          %503 = sbr.rel (%p501) target = $region20
        $region19: #{forward.1} parent=11 // pred_region
          _
        $region20: #{forward.1} parent=11 // pred_fallthru
          _
        // Predicated region
        $region21: #{forward.1} parent=11 // pred_check
          %p504 = pneg %p121
        $region22: #{forward.1} parent=11 // pred_check_branch
          %506 = sbr.rel (%p504) target = $region24
        $region23: #{forward.1} parent=11 // pred_region
          %s508 = ssub.s32 32, 32
          %509 = vsyncadd [#allocation3], %s508
          %s511 = sshll.u32 [#allocation2], 4
          %s512 = int_to_ptr.vmem [resolvable:$true] %s511
          %514 = dma.hbm_to_vmem [thread:$0]  %s3, 32, %s512, [#allocation3]
        $region24: #{forward.1} parent=11 // pred_fallthru
          _
        // Predicated region
        $region25: #{forward.1} parent=11 // pred_check
          %p515 = pneg %p142
        $region26: #{forward.1} parent=11 // pred_check_branch
          %517 = sbr.rel (%p515) target = $region28
        $region27: #{forward.1} parent=11 // pred_region
          _
        $region28: #{forward.1} parent=11 // pred_fallthru
          _
        // Predicated region
        $region29: #{forward.1} parent=11 // pred_check
          %p518 = pneg %p163
        $region30: #{forward.1} parent=11 // pred_check_branch
          %520 = sbr.rel (%p518) target = $region32
        $region31: #{forward.1} parent=11 // pred_region
          %s522 = ssub.s32 23040, 23040
          %523 = vsyncadd [#allocation5], %s522
          %s524 = sshll.u32 [#allocation4], 4
          %s525 = int_to_ptr.vmem [resolvable:$true] %s524
          %530 = dma.hbm_to_vmem [thread:$0]  %s5, 23040, %s525, [#allocation5], 256, 256, 16
        $region32: #{forward.1} parent=11 // pred_fallthru
          _
        // Predicated region
        $region33: #{forward.1} parent=11 // pred_check
          %p531 = pneg %p184
        $region34: #{forward.1} parent=11 // pred_check_branch
          %533 = sbr.rel (%p531) target = $region36
        $region35: #{forward.1} parent=11 // pred_region
          _
        $region36: #{forward.1} parent=11 // pred_fallthru
          _
        // Predicated region
        $region37: #{forward.1} parent=11 // pred_check
          %p534 = pneg %p205
        $region38: #{forward.1} parent=11 // pred_check_branch
          %536 = sbr.rel (%p534) target = $region40
        $region39: #{forward.1} parent=11 // pred_region
          %s538 = ssub.s32 32, 32
          %539 = vsyncadd [#allocation5], %s538
          %s541 = sshll.u32 [#allocation6], 4
          %s542 = int_to_ptr.vmem [resolvable:$true] %s541
          %544 = dma.hbm_to_vmem [thread:$0]  %s7, 32, %s542, [#allocation5]
        $region40: #{forward.1} parent=11 // pred_fallthru
          _
        // Predicated region
        $region41: #{forward.1} parent=11 // pred_check
          %p545 = pneg %p226
        $region42: #{forward.1} parent=11 // pred_check_branch
          %547 = sbr.rel (%p545) target = $region44
        $region43: #{forward.1} parent=11 // pred_region
          _
        $region44: #{forward.1} parent=11 // pred_fallthru
          _
        // Predicated region
        $region45: #{forward.1} parent=11 // pred_check
          %p548 = pneg %p247
        $region46: #{forward.1} parent=11 // pred_check_branch
          %550 = sbr.rel (%p548) target = $region48
        $region47: #{forward.1} parent=11 // pred_region
          %s552 = ssub.s32 21504, 21504
          %553 = vsyncadd [#allocation8], %s552
          %s554 = sshll.u32 [#allocation7], 4
          %s555 = int_to_ptr.vmem [resolvable:$true] %s554
          %560 = dma.hbm_to_vmem [thread:$0]  %s9, 21504, %s555, [#allocation8], 256, 256, 16
        $region48: #{forward.1} parent=11 // pred_fallthru
          _
        // Predicated region
        $region49: #{forward.1} parent=11 // pred_check
          %p561 = pneg %p268
        $region50: #{forward.1} parent=11 // pred_check_branch
          %563 = sbr.rel (%p561) target = $region52
        $region51: #{forward.1} parent=11 // pred_region
          _
        $region52: #{forward.1} parent=11 // pred_fallthru
          _
        // Predicated region
        $region53: #{forward.1} parent=11 // pred_check
          %p564 = pneg %p289
        $region54: #{forward.1} parent=11 // pred_check_branch
          %566 = sbr.rel (%p564) target = $region56
        $region55: #{forward.1} parent=11 // pred_region
          %s568 = ssub.s32 32, 32
          %569 = vsyncadd [#allocation8], %s568
          %s571 = sshll.u32 [#allocation9], 4
          %s572 = int_to_ptr.vmem [resolvable:$true] %s571
          %574 = dma.hbm_to_vmem [thread:$0]  %s11, 32, %s572, [#allocation8]
        $region56: #{forward.1} parent=11 // pred_fallthru
          _
        // Predicated region
        $region57: #{forward.1} parent=11 // pred_check
          %p575 = pneg %p310
        $region58: #{forward.1} parent=11 // pred_check_branch
          %577 = sbr.rel (%p575) target = $region60
        $region59: #{forward.1} parent=11 // pred_region
          _
        $region60: #{forward.1} parent=11 // pred_fallthru
          _
        // Predicated region
        $region61: #{forward.1} parent=11 // pred_check
          %p578 = pneg %p331
        $region62: #{forward.1} parent=11 // pred_check_branch
          %580 = sbr.rel (%p578) target = $region64
        $region63: #{forward.1} parent=11 // pred_region
          %s582 = ssub.s32 18432, 18432
          %583 = vsyncadd [#allocation11], %s582
          %s584 = sshll.u32 [#allocation10], 4
          %s585 = int_to_ptr.vmem [resolvable:$true] %s584
          %590 = dma.hbm_to_vmem [thread:$0]  %s13, 18432, %s585, [#allocation11], 256, 256, 16
        $region64: #{forward.1} parent=11 // pred_fallthru
          _
        // Predicated region
        $region65: #{forward.1} parent=11 // pred_check
          %p591 = pneg %p352
        $region66: #{forward.1} parent=11 // pred_check_branch
          %593 = sbr.rel (%p591) target = $region68
        $region67: #{forward.1} parent=11 // pred_region
          _
        $region68: #{forward.1} parent=11 // pred_fallthru
          _
        // Predicated region
        $region69: #{forward.1} parent=11 // pred_check
          %p594 = pneg %p373
        $region70: #{forward.1} parent=11 // pred_check_branch
          %596 = sbr.rel (%p594) target = $region72
        $region71: #{forward.1} parent=11 // pred_region
          %s598 = ssub.s32 32, 32
          %599 = vsyncadd [#allocation11], %s598
          %s601 = sshll.u32 [#allocation12], 4
          %s602 = int_to_ptr.vmem [resolvable:$true] %s601
          %604 = dma.hbm_to_vmem [thread:$0]  %s15, 32, %s602, [#allocation11]
        $region72: #{forward.1} parent=11 // pred_fallthru
          _
        // Predicated region
        $region73: #{forward.1} parent=11 // pred_check
          %p605 = pneg %p394
        $region74: #{forward.1} parent=11 // pred_check_branch
          %607 = sbr.rel (%p605) target = $region76
        $region75: #{forward.1} parent=11 // pred_region
          _
        $region76: #{forward.1} parent=11 // pred_fallthru
          _
        // Predicated region
        $region77: #{forward.1} parent=11 // pred_check
          %p608 = pneg %p415
        $region78: #{forward.1} parent=11 // pred_check_branch
          %610 = sbr.rel (%p608) target = $region80
        $region79: #{forward.1} parent=11 // pred_region
          %s612 = ssub.s32 16, 16
          %613 = vsyncadd [#allocation14], %s612
          %s615 = sshll.u32 [#allocation13], 4
          %s616 = int_to_ptr.vmem [resolvable:$true] %s615
          %618 = dma.hbm_to_vmem [thread:$0]  %s17, 16, %s616, [#allocation14]
        $region80: #{forward.1} parent=11 // pred_fallthru
          _
        // Predicated region
        $region81: #{forward.1} parent=11 // pred_check
          %p619 = pneg %p436
        $region82: #{forward.1} parent=11 // pred_check_branch
          %621 = sbr.rel (%p619) target = $region84
        $region83: #{forward.1} parent=11 // pred_region
          %s623 = ssub.s32 2048, 2048
          %624 = vsyncadd [#allocation14], %s623
          %s625 = sshll.u32 [#allocation15], 4
          %s626 = int_to_ptr.vmem [resolvable:$true] %s625
          %631 = dma.hbm_to_vmem [thread:$0]  %s18, 2048, %s626, [#allocation14], 128, 128, 8
        $region84: #{forward.1} parent=11 // pred_fallthru
          _
        // Predicated region
        $region85: #{forward.1} parent=11 // pred_check
          %p632 = pneg %p457
        $region86: #{forward.1} parent=11 // pred_check_branch
          %634 = sbr.rel (%p632) target = $region88
        $region87: #{forward.1} parent=11 // pred_region
          %s636 = ssub.s32 16, 16
          %637 = vsyncadd [#allocation17], %s636
          %s639 = sshll.u32 [#allocation16], 4
          %s640 = int_to_ptr.vmem [resolvable:$true] %s639
          %642 = dma.hbm_to_vmem [thread:$0]  %s19, 16, %s640, [#allocation17]
        $region88: #{forward.1} parent=11 // pred_fallthru
          _
      $region12: #{forward.1} parent=5 // pred_fallthru
        _
      %p643 = scmp.lt.s32.totalorder %s32, 2
      // Predicated region
      $region89: #{forward.1} parent=5 // pred_check
        %p644 = pneg %p643
      $region90: #{forward.1} parent=5 // pred_check_branch
        %646 = sbr.rel (%p644) target = $region92
      $region91: #{forward.1} parent=5 // pred_region
        // Predicated region
        $region93: #{forward.1} parent=91 // pred_check
          %p647 = pneg %p52
        $region94: #{forward.1} parent=91 // pred_check_branch
          %649 = sbr.rel (%p647) target = $region96
        $region95: #{forward.1} parent=91 // pred_region
          %p650 = scmp.lt.s32.totalorder %s32, 1
          %s651 = scalar_select %p650, %s32, 1
          %s652 = smul.addr %s651, 3
          %s653 = smul.addr %s652, 8
          %s654 = scalar_lea.vmem %s0, %s653
        $region96: #{forward.1} parent=91 // pred_fallthru
          _
      $region92: #{forward.1} parent=5 // pred_fallthru
        _
      %p655 = scmp.le.s32.totalorder 1, %s32
      %p656 = scmp.lt.s32.totalorder %s32, 3
      %p657 = pnand %p655, %p656
      %p658 = pneg %p657
      // Predicated region
      $region97: #{forward.1} parent=5 // pred_check
        _
      $region98: #{forward.1} parent=5 // pred_check_branch
        %660 = sbr.rel (%p657) target = $region100
      $region99: #{forward.1} parent=5 // pred_region
        %s661 = ssub.s32 %s32, 1
        // Predicated region
        $region101: #{forward.1} parent=99 // pred_check
          %p662 = pneg %p121
        $region102: #{forward.1} parent=99 // pred_check_branch
          %664 = sbr.rel (%p662) target = $region104
        $region103: #{forward.1} parent=99 // pred_region
          %665 = dma.done [#allocation3], 32
        $region104: #{forward.1} parent=99 // pred_fallthru
          _
        // Predicated region
        $region105: #{forward.1} parent=99 // pred_check
          %p666 = pneg %p163
        $region106: #{forward.1} parent=99 // pred_check_branch
          %668 = sbr.rel (%p666) target = $region108
        $region107: #{forward.1} parent=99 // pred_region
          %669 = dma.done [#allocation5], 23040
        $region108: #{forward.1} parent=99 // pred_fallthru
          _
        // Predicated region
        $region109: #{forward.1} parent=99 // pred_check
          %p670 = pneg %p205
        $region110: #{forward.1} parent=99 // pred_check_branch
          %672 = sbr.rel (%p670) target = $region112
        $region111: #{forward.1} parent=99 // pred_region
          %673 = dma.done [#allocation5], 32
        $region112: #{forward.1} parent=99 // pred_fallthru
          _
        // Predicated region
        $region113: #{forward.1} parent=99 // pred_check
          %p674 = pneg %p247
        $region114: #{forward.1} parent=99 // pred_check_branch
          %676 = sbr.rel (%p674) target = $region116
        $region115: #{forward.1} parent=99 // pred_region
          %677 = dma.done [#allocation8], 21504
        $region116: #{forward.1} parent=99 // pred_fallthru
          _
        // Predicated region
        $region117: #{forward.1} parent=99 // pred_check
          %p678 = pneg %p289
        $region118: #{forward.1} parent=99 // pred_check_branch
          %680 = sbr.rel (%p678) target = $region120
        $region119: #{forward.1} parent=99 // pred_region
          %681 = dma.done [#allocation8], 32
        $region120: #{forward.1} parent=99 // pred_fallthru
          _
        // Predicated region
        $region121: #{forward.1} parent=99 // pred_check
          %p682 = pneg %p331
        $region122: #{forward.1} parent=99 // pred_check_branch
          %684 = sbr.rel (%p682) target = $region124
        $region123: #{forward.1} parent=99 // pred_region
          %685 = dma.done [#allocation11], 18432
        $region124: #{forward.1} parent=99 // pred_fallthru
          _
        // Predicated region
        $region125: #{forward.1} parent=99 // pred_check
          %p686 = pneg %p373
        $region126: #{forward.1} parent=99 // pred_check_branch
          %688 = sbr.rel (%p686) target = $region128
        $region127: #{forward.1} parent=99 // pred_region
          %689 = dma.done [#allocation11], 32
        $region128: #{forward.1} parent=99 // pred_fallthru
          _
        // Predicated region
        $region129: #{forward.1} parent=99 // pred_check
          %p690 = pneg %p415
        $region130: #{forward.1} parent=99 // pred_check_branch
          %692 = sbr.rel (%p690) target = $region132
        $region131: #{forward.1} parent=99 // pred_region
          %693 = dma.done [#allocation14], 16
        $region132: #{forward.1} parent=99 // pred_fallthru
          _
        // Predicated region
        $region133: #{forward.1} parent=99 // pred_check
          %p694 = pneg %p436
        $region134: #{forward.1} parent=99 // pred_check_branch
          %696 = sbr.rel (%p694) target = $region136
        $region135: #{forward.1} parent=99 // pred_region
          %697 = dma.done [#allocation14], 2048
        $region136: #{forward.1} parent=99 // pred_fallthru
          _
        // Predicated region
        $region137: #{forward.1} parent=99 // pred_check
          %p698 = pneg %p457
        $region138: #{forward.1} parent=99 // pred_check_branch
          %700 = sbr.rel (%p698) target = $region140
        $region139: #{forward.1} parent=99 // pred_region
          %701 = dma.done [#allocation17], 16
        $region140: #{forward.1} parent=99 // pred_fallthru
          _
        %p702 = scmp.lt.s32.totalorder %s37, 1
        %s703 = scalar_select %p702, %s37, 1
        %s704 = smul.addr %s703, 3
        %s705 = smul.addr %s704, 8
        %s706 = scalar_lea.vmem %s0, %s705
        %p707 = pneg %p58
        %p708 = pneg %p55
        %p709 = pneg %p79
        %p710 = pneg %p76
        %p711 = pneg %p100
        %p712 = pneg %p97
        %p713 = pneg %p121
        %p714 = pneg %p118
        %p715 = pneg %p142
        %p716 = pneg %p139
        %p717 = pneg %p163
        %p718 = pneg %p160
        %p719 = pneg %p184
        %p720 = pneg %p181
        %p721 = pneg %p205
        %p722 = pneg %p202
        %p723 = pneg %p226
        %p724 = pneg %p223
        %p725 = pneg %p247
        %p726 = pneg %p244
        %p727 = pneg %p268
        %p728 = pneg %p265
        %p729 = pneg %p289
        %p730 = pneg %p286
        %p731 = pneg %p310
        %p732 = pneg %p307
        %p733 = pneg %p331
        %p734 = pneg %p328
        %p735 = pneg %p352
        %p736 = pneg %p349
        %p737 = pneg %p373
        %p738 = pneg %p370
        %p739 = pneg %p394
        %p740 = pneg %p391
        %p741 = pneg %p415
        %p742 = pneg %p412
        %p743 = pneg %p436
        %p744 = pneg %p433
        %p745 = pneg %p457
        %p746 = pneg %p454
        %p747 = pneg %p483
        %p748 = pneg %p480
        %p749 = scmp.lt.s32.totalorder %s37, 1
        %s750 = scalar_select %p749, %s37, 1
        %s751 = scalar_lea.vmem %s20, %s750
        %p752 = scmp.lt.s32.totalorder %s37, 1
        %s753 = scalar_select %p752, %s37, 1
        %s754 = smul.addr %s753, 3
        %s755 = smul.addr %s754, 8
        %s756 = scalar_lea.vmem %s0, %s755
        %p757 = scmp.lt.s32.totalorder %s37, 1
        %s758 = scalar_select %p757, %s37, 1
        %s759 = scalar_lea.vmem %s20, %s758
        %v760 = vld [vmem:[%s756] sm:$0xff]
        %v761 = vld [vmem:[%s756 + $0x8] sm:$0xff]
        %v762 = vld [vmem:[%s756 + $0x10] sm:$0xf]
        %v763 = vld [vmem:[%s1] sm:$0xff]
        %v764 = vld [vmem:[%s1 + $0x8] sm:$0xff]
        %v765 = vld [vmem:[%s1 + $0x10] sm:$0xff]
        %v766 = vld [vmem:[%s1 + $0x18] sm:$0xff]
        %v767 = vld [vmem:[%s1 + $0x20] sm:$0xff]
        %v768 = vld [vmem:[%s1 + $0x28] sm:$0xff]
        %v769 = vld [vmem:[%s1 + $0x30] sm:$0xff]
        %v770 = vld [vmem:[%s1 + $0x38] sm:$0xff]
        %v771 = vld [vmem:[%s1 + $0x40] sm:$0xff]
        %v772 = vld [vmem:[%s1 + $0x48] sm:$0xff]
        %v773 = vld [vmem:[%s1 + $0x50] sm:$0xff]
        %v774 = vld [vmem:[%s1 + $0x58] sm:$0xff]
        %v775 = vld [vmem:[%s1 + $0x60] sm:$0xff]
        %v776 = vld [vmem:[%s1 + $0x68] sm:$0xff]
        %v777 = vld [vmem:[%s1 + $0x70] sm:$0xff]
        %v778 = vld [vmem:[%s1 + $0x78] sm:$0xff]
        %s779 = scalar_lea.vmem %s1, 128
        %v780 = vld [vmem:[%s779] sm:$0xff]
        %v781 = vld [vmem:[%s779 + $0x8] sm:$0xff]
        %v782 = vld [vmem:[%s779 + $0x10] sm:$0xff]
        %v783 = vld [vmem:[%s779 + $0x18] sm:$0xff]
        %v784 = vld [vmem:[%s779 + $0x20] sm:$0xff]
        %v785 = vld [vmem:[%s779 + $0x28] sm:$0xff]
        %v786 = vld [vmem:[%s779 + $0x30] sm:$0xff]
        %v787 = vld [vmem:[%s779 + $0x38] sm:$0xff]
        %v788 = vld [vmem:[%s779 + $0x40] sm:$0xff]
        %v789 = vld [vmem:[%s779 + $0x48] sm:$0xff]
        %v790 = vld [vmem:[%s779 + $0x50] sm:$0xff]
        %v791 = vld [vmem:[%s779 + $0x58] sm:$0xff]
        %v792 = vld [vmem:[%s779 + $0x60] sm:$0xff]
        %v793 = vld [vmem:[%s779 + $0x68] sm:$0xff]
        %v794 = vld [vmem:[%s779 + $0x70] sm:$0xff]
        %v795 = vld [vmem:[%s779 + $0x78] sm:$0xff]
        %vm799 = vcmask 1046528
        %v800 = vrot.slane %v760, 1
        %v801 = vrot.slane %v761, 1
        %v802 = vsel %vm799, %v800, %v801
        %v803 = vrot.slane %v762, 1
        %v804 = vsel %vm799, %v801, %v803
        %vm805 = vcmask 523264
        %v806 = vsel %vm805, %v802, 0
        %v808 = vsel %vm805, %v804, 0
        %v810 = vsel %vm805, %v803, 0
        %812 = vmatprep.subr.mxu0 %v781
        %813 = vmatpush1.msra.mxu0 %v780
        %814 = vmatprep.subr.mxu0 %v783
        %815 = vmatpush1.msra.mxu0 %v782
        %816 = vmatprep.subr.mxu0 %v785
        %817 = vmatpush1.msra.mxu0 %v784
        %818 = vmatprep.subr.mxu0 %v787
        %819 = vmatpush1.msra.mxu0 %v786
        %820 = vmatprep.subr.mxu0 %v789
        %821 = vmatpush1.msra.mxu0 %v788
        %822 = vmatprep.subr.mxu0 %v791
        %823 = vmatpush1.msra.mxu0 %v790
        %824 = vmatprep.subr.mxu0 %v793
        %825 = vmatpush1.msra.mxu0 %v792
        %826 = vmatprep.subr.mxu0 %v795
        %827 = vmatpush1.msra.mxu0 %v794
        %828 = vmatprep.subr.mxu0 0.0
        %829 = vmatpush1.msra.mxu0 0.0
        %830 = vmatprep.subr.mxu0 0.0
        %831 = vmatpush1.msra.mxu0 0.0
        %832 = vmatprep.subr.mxu0 0.0
        %833 = vmatpush1.msra.mxu0 0.0
        %834 = vmatprep.subr.mxu0 0.0
        %835 = vmatpush1.msra.mxu0 0.0
        %836 = vmatprep.subr.mxu0 0.0
        %837 = vmatpush1.msra.mxu0 0.0
        %838 = vmatprep.subr.mxu0 0.0
        %839 = vmatpush1.msra.mxu0 0.0
        %840 = vmatprep.subr.mxu0 0.0
        %841 = vmatpush1.msra.mxu0 0.0
        %842 = vmatprep.subr.mxu0 0.0
        %843 = vmatpush1.msra.mxu0 0.0
        %844 = vmatprep.subr.mxu0 0.0
        %845 = vmatpush1.msra.mxu0 0.0
        %846 = vmatprep.subr.mxu0 0.0
        %847 = vmatpush1.msra.mxu0 0.0
        %848 = vmatprep.subr.mxu0 0.0
        %849 = vmatpush1.msra.mxu0 0.0
        %850 = vmatprep.subr.mxu0 0.0
        %851 = vmatpush1.msra.mxu0 0.0
        %852 = vmatprep.subr.mxu0 0.0
        %853 = vmatpush1.msra.mxu0 0.0
        %854 = vmatprep.subr.mxu0 0.0
        %855 = vmatpush1.msra.mxu0 0.0
        %856 = vmatprep.subr.mxu0 0.0
        %857 = vmatpush1.msra.mxu0 0.0
        %858 = vmatprep.subr.mxu0 0.0
        %859 = vmatpush1.msra.mxu0 0.0
        %860 = vmatprep.subr.mxu0 0.0
        %861 = vmatpush1.msra.mxu0 0.0
        %862 = vmatprep.subr.mxu0 0.0
        %863 = vmatpush1.msra.mxu0 0.0
        %864 = vmatprep.subr.mxu0 0.0
        %865 = vmatpush1.msra.mxu0 0.0
        %866 = vmatprep.subr.mxu0 0.0
        %867 = vmatpush1.msra.mxu0 0.0
        %868 = vmatprep.subr.mxu0 0.0
        %869 = vmatpush1.msra.mxu0 0.0
        %870 = vmatprep.subr.mxu0 0.0
        %871 = vmatpush1.msra.mxu0 0.0
        %872 = vmatprep.subr.mxu0 0.0
        %873 = vmatpush1.msra.mxu0 0.0
        %874 = vmatprep.subr.mxu0 0.0
        %875 = vmatpush1.msra.mxu0 0.0
        %876 = vmatprep.mubr.f32.mxu0 0.0
        %877 = vmatmul.mubr.f32.gmra.mrb[0].mxu0 %v806
        %v878 = vpop.f32.mrb[0].mxu0
        %v879 = vadd.f32 0.0, %v878
        %v880 = vpop.f32.mrb[0].mxu0
        %v881 = vadd.f32 0.0, %v880
        %882 = vmatprep.mubr.f32.mxu0 0.0
        %883 = vmatmul.mubr.f32.gmra.mrb[0].mxu0 %v808
        %v884 = vpop.f32.mrb[0].mxu0
        %v885 = vadd.f32 0.0, %v884
        %v886 = vpop.f32.mrb[0].mxu0
        %v887 = vadd.f32 0.0, %v886
        %888 = vmatprep.mubr.f32.mxu0 0.0
        %889 = vmatmul.mubr.f32.gmra.mrb[0].mxu0 %v810
        %v890 = vpop.f32.mrb[0].mxu0
        %v891 = vadd.f32 0.0, %v890
        %v892 = vpop.f32.mrb[0].mxu0
        %v893 = vadd.f32 0.0, %v892
        %894 = vdwg.mxu0
        %v895 = vsel %vm805, %v760, 0
        %v897 = vsel %vm805, %v761, 0
        %v899 = vsel %vm805, %v762, 0
        %901 = vmatprep.subr.mxu0 %v764
        %902 = vmatpush1.msra.mxu0 %v763
        %903 = vmatprep.subr.mxu0 %v766
        %904 = vmatpush1.msra.mxu0 %v765
        %905 = vmatprep.subr.mxu0 %v768
        %906 = vmatpush1.msra.mxu0 %v767
        %907 = vmatprep.subr.mxu0 %v770
        %908 = vmatpush1.msra.mxu0 %v769
        %909 = vmatprep.subr.mxu0 %v772
        %910 = vmatpush1.msra.mxu0 %v771
        %911 = vmatprep.subr.mxu0 %v774
        %912 = vmatpush1.msra.mxu0 %v773
        %913 = vmatprep.subr.mxu0 %v776
        %914 = vmatpush1.msra.mxu0 %v775
        %915 = vmatprep.subr.mxu0 %v778
        %916 = vmatpush1.msra.mxu0 %v777
        %917 = vmatprep.subr.mxu0 0.0
        %918 = vmatpush1.msra.mxu0 0.0
        %919 = vmatprep.subr.mxu0 0.0
        %920 = vmatpush1.msra.mxu0 0.0
        %921 = vmatprep.subr.mxu0 0.0
        %922 = vmatpush1.msra.mxu0 0.0
        %923 = vmatprep.subr.mxu0 0.0
        %924 = vmatpush1.msra.mxu0 0.0
        %925 = vmatprep.subr.mxu0 0.0
        %926 = vmatpush1.msra.mxu0 0.0
        %927 = vmatprep.subr.mxu0 0.0
        %928 = vmatpush1.msra.mxu0 0.0
        %929 = vmatprep.subr.mxu0 0.0
        %930 = vmatpush1.msra.mxu0 0.0
        %931 = vmatprep.subr.mxu0 0.0
        %932 = vmatpush1.msra.mxu0 0.0
        %933 = vmatprep.subr.mxu0 0.0
        %934 = vmatpush1.msra.mxu0 0.0
        %935 = vmatprep.subr.mxu0 0.0
        %936 = vmatpush1.msra.mxu0 0.0
        %937 = vmatprep.subr.mxu0 0.0
        %938 = vmatpush1.msra.mxu0 0.0
        %939 = vmatprep.subr.mxu0 0.0
        %940 = vmatpush1.msra.mxu0 0.0
        %941 = vmatprep.subr.mxu0 0.0
        %942 = vmatpush1.msra.mxu0 0.0
        %943 = vmatprep.subr.mxu0 0.0
        %944 = vmatpush1.msra.mxu0 0.0
        %945 = vmatprep.subr.mxu0 0.0
        %946 = vmatpush1.msra.mxu0 0.0
        %947 = vmatprep.subr.mxu0 0.0
        %948 = vmatpush1.msra.mxu0 0.0
        %949 = vmatprep.subr.mxu0 0.0
        %950 = vmatpush1.msra.mxu0 0.0
        %951 = vmatprep.subr.mxu0 0.0
        %952 = vmatpush1.msra.mxu0 0.0
        %953 = vmatprep.subr.mxu0 0.0
        %954 = vmatpush1.msra.mxu0 0.0
        %955 = vmatprep.subr.mxu0 0.0
        %956 = vmatpush1.msra.mxu0 0.0
        %957 = vmatprep.subr.mxu0 0.0
        %958 = vmatpush1.msra.mxu0 0.0
        %959 = vmatprep.subr.mxu0 0.0
        %960 = vmatpush1.msra.mxu0 0.0
        %961 = vmatprep.subr.mxu0 0.0
        %962 = vmatpush1.msra.mxu0 0.0
        %963 = vmatprep.subr.mxu0 0.0
        %964 = vmatpush1.msra.mxu0 0.0
        %965 = vmatprep.mubr.f32.mxu0 0.0
        %966 = vmatmul.mubr.f32.gmra.mrb[0].mxu0 %v895
        %v967 = vpop.f32.mrb[0].mxu0
        %v968 = vadd.f32 %v879, %v967
        %v969 = vpop.f32.mrb[0].mxu0
        %v970 = vadd.f32 %v881, %v969
        %971 = vmatprep.mubr.f32.mxu0 0.0
        %972 = vmatmul.mubr.f32.gmra.mrb[0].mxu0 %v897
        %v973 = vpop.f32.mrb[0].mxu0
        %v974 = vadd.f32 %v885, %v973
        %v975 = vpop.f32.mrb[0].mxu0
        %v976 = vadd.f32 %v887, %v975
        %977 = vmatprep.mubr.f32.mxu0 0.0
        %978 = vmatmul.mubr.f32.gmra.mrb[0].mxu0 %v899
        %v979 = vpop.f32.mrb[0].mxu0
        %v980 = vadd.f32 %v891, %v979
        %v981 = vpop.f32.mrb[0].mxu0
        %v982 = vadd.f32 %v893, %v981
        %983 = vdwg.mxu0
        %s984 = scalar_lea.vmem %s1, 256
        %v985 = vld [vmem:[%s984] sm:$0xff]
        %v986 = vld [vmem:[%s984 + $0x8] sm:$0xff]
        %v987 = vld [vmem:[%s984 + $0x10] sm:$0xff]
        %v988 = vld [vmem:[%s984 + $0x18] sm:$0xff]
        %v989 = vld [vmem:[%s984 + $0x20] sm:$0xff]
        %v990 = vld [vmem:[%s984 + $0x28] sm:$0xff]
        %v991 = vld [vmem:[%s984 + $0x30] sm:$0xff]
        %v992 = vld [vmem:[%s984 + $0x38] sm:$0xff]
        %v993 = vld [vmem:[%s984 + $0x40] sm:$0xff]
        %v994 = vld [vmem:[%s984 + $0x48] sm:$0xff]
        %v995 = vld [vmem:[%s984 + $0x50] sm:$0xff]
        %v996 = vld [vmem:[%s984 + $0x58] sm:$0xff]
        %v997 = vld [vmem:[%s984 + $0x60] sm:$0xff]
        %v998 = vld [vmem:[%s984 + $0x68] sm:$0xff]
        %v999 = vld [vmem:[%s984 + $0x70] sm:$0xff]
        %v1000 = vld [vmem:[%s984 + $0x78] sm:$0xff]
        %vm1001 = vcmask 1045504
        %v1002 = vrot.slane %v760, 2
        %v1003 = vrot.slane %v761, 2
        %v1004 = vsel %vm1001, %v1002, %v1003
        %v1005 = vrot.slane %v762, 2
        %v1006 = vsel %vm1001, %v1003, %v1005
        %v1007 = vsel %vm805, %v1004, 0
        %v1009 = vsel %vm805, %v1006, 0
        %v1011 = vsel %vm805, %v1005, 0
        %1013 = vmatprep.subr.mxu0 %v986
        %1014 = vmatpush1.msra.mxu0 %v985
        %1015 = vmatprep.subr.mxu0 %v988
        %1016 = vmatpush1.msra.mxu0 %v987
        %1017 = vmatprep.subr.mxu0 %v990
        %1018 = vmatpush1.msra.mxu0 %v989
        %1019 = vmatprep.subr.mxu0 %v992
        %1020 = vmatpush1.msra.mxu0 %v991
        %1021 = vmatprep.subr.mxu0 %v994
        %1022 = vmatpush1.msra.mxu0 %v993
        %1023 = vmatprep.subr.mxu0 %v996
        %1024 = vmatpush1.msra.mxu0 %v995
        %1025 = vmatprep.subr.mxu0 %v998
        %1026 = vmatpush1.msra.mxu0 %v997
        %1027 = vmatprep.subr.mxu0 %v1000
        %1028 = vmatpush1.msra.mxu0 %v999
        %1029 = vmatprep.subr.mxu0 0.0
        %1030 = vmatpush1.msra.mxu0 0.0
        %1031 = vmatprep.subr.mxu0 0.0
        %1032 = vmatpush1.msra.mxu0 0.0
        %1033 = vmatprep.subr.mxu0 0.0
        %1034 = vmatpush1.msra.mxu0 0.0
        %1035 = vmatprep.subr.mxu0 0.0
        %1036 = vmatpush1.msra.mxu0 0.0
        %1037 = vmatprep.subr.mxu0 0.0
        %1038 = vmatpush1.msra.mxu0 0.0
        %1039 = vmatprep.subr.mxu0 0.0
        %1040 = vmatpush1.msra.mxu0 0.0
        %1041 = vmatprep.subr.mxu0 0.0
        %1042 = vmatpush1.msra.mxu0 0.0
        %1043 = vmatprep.subr.mxu0 0.0
        %1044 = vmatpush1.msra.mxu0 0.0
        %1045 = vmatprep.subr.mxu0 0.0
        %1046 = vmatpush1.msra.mxu0 0.0
        %1047 = vmatprep.subr.mxu0 0.0
        %1048 = vmatpush1.msra.mxu0 0.0
        %1049 = vmatprep.subr.mxu0 0.0
        %1050 = vmatpush1.msra.mxu0 0.0
        %1051 = vmatprep.subr.mxu0 0.0
        %1052 = vmatpush1.msra.mxu0 0.0
        %1053 = vmatprep.subr.mxu0 0.0
        %1054 = vmatpush1.msra.mxu0 0.0
        %1055 = vmatprep.subr.mxu0 0.0
        %1056 = vmatpush1.msra.mxu0 0.0
        %1057 = vmatprep.subr.mxu0 0.0
        %1058 = vmatpush1.msra.mxu0 0.0
        %1059 = vmatprep.subr.mxu0 0.0
        %1060 = vmatpush1.msra.mxu0 0.0
        %1061 = vmatprep.subr.mxu0 0.0
        %1062 = vmatpush1.msra.mxu0 0.0
        %1063 = vmatprep.subr.mxu0 0.0
        %1064 = vmatpush1.msra.mxu0 0.0
        %1065 = vmatprep.subr.mxu0 0.0
        %1066 = vmatpush1.msra.mxu0 0.0
        %1067 = vmatprep.subr.mxu0 0.0
        %1068 = vmatpush1.msra.mxu0 0.0
        %1069 = vmatprep.subr.mxu0 0.0
        %1070 = vmatpush1.msra.mxu0 0.0
        %1071 = vmatprep.subr.mxu0 0.0
        %1072 = vmatpush1.msra.mxu0 0.0
        %1073 = vmatprep.subr.mxu0 0.0
        %1074 = vmatpush1.msra.mxu0 0.0
        %1075 = vmatprep.subr.mxu0 0.0
        %1076 = vmatpush1.msra.mxu0 0.0
        %1077 = vmatprep.mubr.f32.mxu0 0.0
        %1078 = vmatmul.mubr.f32.gmra.mrb[0].mxu0 %v1007
        %v1079 = vpop.f32.mrb[0].mxu0
        %v1080 = vadd.f32 0.0, %v1079
        %v1081 = vpop.f32.mrb[0].mxu0
        %v1082 = vadd.f32 0.0, %v1081
        %1083 = vmatprep.mubr.f32.mxu0 0.0
        %1084 = vmatmul.mubr.f32.gmra.mrb[0].mxu0 %v1009
        %v1085 = vpop.f32.mrb[0].mxu0
        %v1086 = vadd.f32 0.0, %v1085
        %v1087 = vpop.f32.mrb[0].mxu0
        %v1088 = vadd.f32 0.0, %v1087
        %1089 = vmatprep.mubr.f32.mxu0 0.0
        %1090 = vmatmul.mubr.f32.gmra.mrb[0].mxu0 %v1011
        %v1091 = vpop.f32.mrb[0].mxu0
        %v1092 = vadd.f32 0.0, %v1091
        %v1093 = vpop.f32.mrb[0].mxu0
        %v1094 = vadd.f32 0.0, %v1093
        %1095 = vdwg.mxu0
        %v1096 = vadd.f32 %v968, %v1080
        %v1097 = vadd.f32 %v970, %v1082
        %v1098 = vadd.f32 %v974, %v1086
        %v1099 = vadd.f32 %v976, %v1088
        %v1100 = vadd.f32 %v980, %v1092
        %v1101 = vadd.f32 %v982, %v1094
        %v1102 = vld [vmem:[%s2] sm:$0x3]
        %v1104 = vlaneseq
        %v1105 = vshrl.u32 %v1104, 7
        %v1106 = vsub.s32 0, %v1105
        %v1107 = vrot.slane %v1102, %v1106
        %v1108 = vlaneseq
        %v1109 = vshrl.u32 %v1108, 7
        %v1110 = vsub.s32 1, %v1109
        %v1111 = vrot.slane %v1102, %v1110
        %v1114 = vmul.f32 %v1096, %v1107
        %v1115 = vmul.f32 %v1097, %v1111
        %v1116 = vmul.f32 %v1098, %v1107
        %v1117 = vmul.f32 %v1099, %v1111
        %v1118 = vmul.f32 %v1100, %v1107
        %v1119 = vmul.f32 %v1101, %v1111
        %v1120 = vld [vmem:[#allocation2] sm:$0x3]
        %v1122 = vlaneseq
        %v1123 = vshrl.u32 %v1122, 7
        %v1124 = vsub.s32 0, %v1123
        %v1125 = vrot.slane %v1120, %v1124
        %v1126 = vlaneseq
        %v1127 = vshrl.u32 %v1126, 7
        %v1128 = vsub.s32 1, %v1127
        %v1129 = vrot.slane %v1120, %v1128
        %v1132 = vadd.f32 %v1114, %v1125
        %v1133 = vadd.f32 %v1115, %v1129
        %v1134 = vadd.f32 %v1116, %v1125
        %v1135 = vadd.f32 %v1117, %v1129
        %v1136 = vadd.f32 %v1118, %v1125
        %v1137 = vadd.f32 %v1119, %v1129
        %v1138 = vmax.f32 %v1132, 0.0
        %v1139 = vmax.f32 %v1133, 0.0
        %v1140 = vmax.f32 %v1134, 0.0
        %v1141 = vmax.f32 %v1135, 0.0
        %v1142 = vmax.f32 %v1136, 0.0
        %v1143 = vmax.f32 %v1137, 0.0
        %1150 = vrot.lane.b32.xlu0 %v1138, 112
        %v1151 = vpop.permute.xlu0 %1150
        %1152 = vrot.lane.b32.xlu0 %v1139, 112
        %v1153 = vpop.permute.xlu0 %1152
        %1154 = vrot.lane.b32.xlu0 %v1140, 112
        %v1155 = vpop.permute.xlu0 %1154
        %1156 = vrot.lane.b32.xlu0 %v1141, 112
        %v1157 = vpop.permute.xlu0 %1156
        %1158 = vrot.lane.b32.xlu0 %v1142, 112
        %v1159 = vpop.permute.xlu0 %1158
        %1160 = vrot.lane.b32.xlu0 %v1143, 112
        %v1161 = vpop.permute.xlu0 %1160
        %vm1162 = vcmask 916480
        %v1163 = vsel %vm1162, %v1151, %v1153
        %v1164 = vsel %vm1162, %v1155, %v1157
        %v1165 = vsel %vm1162, %v1159, %v1161
        %v1172 = vmax.f32 %v1138, %v1163
        %v1173 = vmax.f32 %v1139, %v1153
        %v1174 = vmax.f32 %v1140, %v1164
        %v1175 = vmax.f32 %v1141, %v1157
        %v1176 = vmax.f32 %v1142, %v1165
        %v1177 = vmax.f32 %v1143, %v1161
        %v1184 = vrot.slane %v1172, 1
        %v1185 = vrot.slane %v1174, 1
        %v1186 = vsel %vm799, %v1184, %v1185
        %v1187 = vrot.slane %v1173, 1
        %v1188 = vrot.slane %v1175, 1
        %v1189 = vsel %vm799, %v1187, %v1188
        %v1190 = vrot.slane %v1176, 1
        %v1191 = vsel %vm799, %v1185, %v1190
        %v1192 = vrot.slane %v1177, 1
        %v1193 = vsel %vm799, %v1188, %v1192
        %v1200 = vmax.f32 %v1172, %v1186
        %v1201 = vmax.f32 %v1173, %v1189
        %v1202 = vmax.f32 %v1174, %v1191
        %v1203 = vmax.f32 %v1175, %v1193
        %v1204 = vmax.f32 %v1176, %v1190
        %v1205 = vmax.f32 %v1177, %v1192
        %v1206 = vld [vmem:[%s4] sm:$0xff]
        %v1207 = vld [vmem:[%s4 + $0x8] sm:$0xf]
        %vm1208 = vcmask 138240
        %v1210 = vsel %vm1208, %v1206, 0
        %v1213 = vsel %vm1208, %v1207, 0
        %vm1215 = vcmask 1040384
        %v1217 = vsel %vm1215, %v1204, 0
        %v1220 = vsel %vm1215, %v1205, 0
        %1222 = vmatprep.subr.mxu0 %v1201
        %1223 = vmatpush1.msra.mxu0 %v1200
        %1224 = vmatprep.subr.mxu0 %v1203
        %1225 = vmatpush1.msra.mxu0 %v1202
        %1226 = vmatprep.subr.mxu0 %v1220
        %1227 = vmatpush1.msra.mxu0 %v1217
        %1228 = vmatprep.subr.mxu0 0.0
        %1229 = vmatpush1.msra.mxu0 0.0
        %1230 = vmatprep.subr.mxu0 0.0
        %1231 = vmatpush1.msra.mxu0 0.0
        %1232 = vmatprep.subr.mxu0 0.0
        %1233 = vmatpush1.msra.mxu0 0.0
        %1234 = vmatprep.subr.mxu0 0.0
        %1235 = vmatpush1.msra.mxu0 0.0
        %1236 = vmatprep.subr.mxu0 0.0
        %1237 = vmatpush1.msra.mxu0 0.0
        %1238 = vmatprep.subr.mxu0 0.0
        %1239 = vmatpush1.msra.mxu0 0.0
        %1240 = vmatprep.subr.mxu0 0.0
        %1241 = vmatpush1.msra.mxu0 0.0
        %1242 = vmatprep.subr.mxu0 0.0
        %1243 = vmatpush1.msra.mxu0 0.0
        %1244 = vmatprep.subr.mxu0 0.0
        %1245 = vmatpush1.msra.mxu0 0.0
        %1246 = vmatprep.subr.mxu0 0.0
        %1247 = vmatpush1.msra.mxu0 0.0
        %1248 = vmatprep.subr.mxu0 0.0
        %1249 = vmatpush1.msra.mxu0 0.0
        %1250 = vmatprep.subr.mxu0 0.0
        %1251 = vmatpush1.msra.mxu0 0.0
        %1252 = vmatprep.subr.mxu0 0.0
        %1253 = vmatpush1.msra.mxu0 0.0
        %1254 = vmatprep.subr.mxu0 0.0
        %1255 = vmatpush1.msra.mxu0 0.0
        %1256 = vmatprep.subr.mxu0 0.0
        %1257 = vmatpush1.msra.mxu0 0.0
        %1258 = vmatprep.subr.mxu0 0.0
        %1259 = vmatpush1.msra.mxu0 0.0
        %1260 = vmatprep.subr.mxu0 0.0
        %1261 = vmatpush1.msra.mxu0 0.0
        %1262 = vmatprep.subr.mxu0 0.0
        %1263 = vmatpush1.msra.mxu0 0.0
        %1264 = vmatprep.subr.mxu0 0.0
        %1265 = vmatpush1.msra.mxu0 0.0
        %1266 = vmatprep.subr.mxu0 0.0
        %1267 = vmatpush1.msra.mxu0 0.0
        %1268 = vmatprep.subr.mxu0 0.0
        %1269 = vmatpush1.msra.mxu0 0.0
        %1270 = vmatprep.subr.mxu0 0.0
        %1271 = vmatpush1.msra.mxu0 0.0
        %1272 = vmatprep.subr.mxu0 0.0
        %1273 = vmatpush1.msra.mxu0 0.0
        %1274 = vmatprep.subr.mxu0 0.0
        %1275 = vmatpush1.msra.mxu0 0.0
        %1276 = vmatprep.subr.mxu0 0.0
        %1277 = vmatpush1.msra.mxu0 0.0
        %1278 = vmatprep.subr.mxu0 0.0
        %1279 = vmatpush1.msra.mxu0 0.0
        %1280 = vmatprep.subr.mxu0 0.0
        %1281 = vmatpush1.msra.mxu0 0.0
        %1282 = vmatprep.subr.mxu0 0.0
        %1283 = vmatpush1.msra.mxu0 0.0
        %1284 = vmatprep.subr.mxu0 0.0
        %1285 = vmatpush1.msra.mxu0 0.0
        %1286 = vmatprep.mubr.f32.mxu0 0.0
        %1287 = vmatmul.mubr.f32.gmra.mrb[0].mxu0 %v1210
        %v1288 = vpop.f32.mrb[0].mxu0
        %v1289 = vadd.f32 0.0, %v1288
        %v1290 = vpop.f32.mrb[0].mxu0
        %v1291 = vadd.f32 0.0, %v1290
        %1292 = vmatprep.mubr.f32.mxu0 0.0
        %1293 = vmatmul.mubr.f32.gmra.mrb[0].mxu0 %v1213
        %v1294 = vpop.f32.mrb[0].mxu0
        %v1295 = vadd.f32 0.0, %v1294
        %v1296 = vpop.f32.mrb[0].mxu0
        %v1297 = vadd.f32 0.0, %v1296
        %1298 = vdwg.mxu0
        %v1299 = vld [vmem:[#allocation4] sm:$0xff]
        %v1300 = vld [vmem:[#allocation4 + $0x8] sm:$0xff]
        %v1301 = vld [vmem:[#allocation4 + $0x10] sm:$0xff]
        %v1302 = vld [vmem:[#allocation4 + $0x18] sm:$0xff]
        %v1303 = vld [vmem:[#allocation4 + $0x20] sm:$0xff]
        %v1304 = vld [vmem:[#allocation4 + $0x28] sm:$0xff]
        %v1305 = vld [vmem:[#allocation4 + $0x30] sm:$0xff]
        %v1306 = vld [vmem:[#allocation4 + $0x38] sm:$0xff]
        %v1307 = vld [vmem:[#allocation4 + $0x40] sm:$0xff]
        %v1308 = vld [vmem:[#allocation4 + $0x48] sm:$0xff]
        %v1309 = vld [vmem:[#allocation4 + $0x50] sm:$0xff]
        %v1310 = vld [vmem:[#allocation4 + $0x58] sm:$0xff]
        %v1311 = vld [vmem:[#allocation4 + $0x60] sm:$0xff]
        %v1312 = vld [vmem:[#allocation4 + $0x68] sm:$0xff]
        %v1313 = vld [vmem:[#allocation4 + $0x70] sm:$0xff]
        %v1314 = vld [vmem:[#allocation4 + $0x78] sm:$0xff]
        %v1315 = vld [vmem:[#allocation4 + $0x80] sm:$0xff]
        %v1316 = vld [vmem:[#allocation4 + $0x88] sm:$0xff]
        %v1317 = vld [vmem:[#allocation4 + $0x90] sm:$0xff]
        %v1318 = vld [vmem:[#allocation4 + $0x98] sm:$0xff]
        %v1319 = vld [vmem:[#allocation4 + $0xa0] sm:$0xff]
        %v1320 = vld [vmem:[#allocation4 + $0xa8] sm:$0xff]
        %v1321 = vld [vmem:[#allocation4 + $0xb0] sm:$0xff]
        %v1322 = vld [vmem:[#allocation4 + $0xb8] sm:$0xff]
        %v1323 = vld [vmem:[#allocation4 + $0xc0] sm:$0xff]
        %v1324 = vld [vmem:[#allocation4 + $0xc8] sm:$0xff]
        %v1325 = vld [vmem:[#allocation4 + $0xd0] sm:$0xff]
        %v1326 = vld [vmem:[#allocation4 + $0xd8] sm:$0xff]
        %v1327 = vld [vmem:[#allocation4 + $0xe0] sm:$0xff]
        %v1328 = vld [vmem:[#allocation4 + $0xe8] sm:$0xff]
        %v1329 = vld [vmem:[#allocation4 + $0xf0] sm:$0xff]
        %v1330 = vld [vmem:[#allocation4 + $0xf8] sm:$0xff]
        %v1331 = vld [vmem:[#allocation4 + $0x100] sm:$0xff]
        %v1332 = vld [vmem:[#allocation4 + $0x108] sm:$0xff]
        %v1333 = vld [vmem:[#allocation4 + $0x110] sm:$0xff]
        %v1334 = vld [vmem:[#allocation4 + $0x118] sm:$0xff]
        %v1335 = vld [vmem:[#allocation4 + $0x120] sm:$0xff]
        %v1336 = vld [vmem:[#allocation4 + $0x128] sm:$0xff]
        %v1337 = vld [vmem:[#allocation4 + $0x130] sm:$0xff]
        %v1338 = vld [vmem:[#allocation4 + $0x138] sm:$0xff]
        %v1339 = vld [vmem:[#allocation4 + $0x140] sm:$0xff]
        %v1340 = vld [vmem:[#allocation4 + $0x148] sm:$0xff]
        %v1341 = vld [vmem:[#allocation4 + $0x150] sm:$0xff]
        %v1342 = vld [vmem:[#allocation4 + $0x158] sm:$0xff]
        %v1343 = vld [vmem:[#allocation4 + $0x160] sm:$0xff]
        %v1344 = vld [vmem:[#allocation4 + $0x168] sm:$0xff]
        %v1345 = vld [vmem:[#allocation4 + $0x170] sm:$0xff]
        %v1346 = vld [vmem:[#allocation4 + $0x178] sm:$0xff]
        %v1347 = vld [vmem:[#allocation4 + $0x180] sm:$0xff]
        %v1348 = vld [vmem:[#allocation4 + $0x188] sm:$0xff]
        %v1349 = vld [vmem:[#allocation4 + $0x190] sm:$0xff]
        %v1350 = vld [vmem:[#allocation4 + $0x198] sm:$0xff]
        %v1351 = vld [vmem:[#allocation4 + $0x1a0] sm:$0xff]
        %v1352 = vld [vmem:[#allocation4 + $0x1a8] sm:$0xff]
        %v1353 = vld [vmem:[#allocation4 + $0x1b0] sm:$0xff]
        %v1354 = vld [vmem:[#allocation4 + $0x1b8] sm:$0xff]
        %v1355 = vld [vmem:[#allocation4 + $0x1c0] sm:$0xff]
        %v1356 = vld [vmem:[#allocation4 + $0x1c8] sm:$0xff]
        %v1357 = vld [vmem:[#allocation4 + $0x1d0] sm:$0xff]
        %v1358 = vld [vmem:[#allocation4 + $0x1d8] sm:$0xff]
        %s1359 = scalar_lea.vmem [#allocation4], 480
        %v1360 = vld [vmem:[%s1359] sm:$0xff]
        %v1361 = vld [vmem:[%s1359 + $0x8] sm:$0xff]
        %v1362 = vld [vmem:[%s1359 + $0x10] sm:$0xff]
        %v1363 = vld [vmem:[%s1359 + $0x18] sm:$0xff]
        %v1364 = vld [vmem:[%s1359 + $0x20] sm:$0xff]
        %v1365 = vld [vmem:[%s1359 + $0x28] sm:$0xff]
        %v1366 = vld [vmem:[%s1359 + $0x30] sm:$0xff]
        %v1367 = vld [vmem:[%s1359 + $0x38] sm:$0xff]
        %v1368 = vld [vmem:[%s1359 + $0x40] sm:$0xff]
        %v1369 = vld [vmem:[%s1359 + $0x48] sm:$0xff]
        %v1370 = vld [vmem:[%s1359 + $0x50] sm:$0xff]
        %v1371 = vld [vmem:[%s1359 + $0x58] sm:$0xff]
        %v1372 = vld [vmem:[%s1359 + $0x60] sm:$0xff]
        %v1373 = vld [vmem:[%s1359 + $0x68] sm:$0xff]
        %v1374 = vld [vmem:[%s1359 + $0x70] sm:$0xff]
        %v1375 = vld [vmem:[%s1359 + $0x78] sm:$0xff]
        %v1376 = vld [vmem:[%s1359 + $0x80] sm:$0xff]
        %v1377 = vld [vmem:[%s1359 + $0x88] sm:$0xff]
        %v1378 = vld [vmem:[%s1359 + $0x90] sm:$0xff]
        %v1379 = vld [vmem:[%s1359 + $0x98] sm:$0xff]
        %v1380 = vld [vmem:[%s1359 + $0xa0] sm:$0xff]
        %v1381 = vld [vmem:[%s1359 + $0xa8] sm:$0xff]
        %v1382 = vld [vmem:[%s1359 + $0xb0] sm:$0xff]
        %v1383 = vld [vmem:[%s1359 + $0xb8] sm:$0xff]
        %v1384 = vld [vmem:[%s1359 + $0xc0] sm:$0xff]
        %v1385 = vld [vmem:[%s1359 + $0xc8] sm:$0xff]
        %v1386 = vld [vmem:[%s1359 + $0xd0] sm:$0xff]
        %v1387 = vld [vmem:[%s1359 + $0xd8] sm:$0xff]
        %v1388 = vld [vmem:[%s1359 + $0xe0] sm:$0xff]
        %v1389 = vld [vmem:[%s1359 + $0xe8] sm:$0xff]
        %v1390 = vld [vmem:[%s1359 + $0xf0] sm:$0xff]
        %v1391 = vld [vmem:[%s1359 + $0xf8] sm:$0xff]
        %v1392 = vld [vmem:[%s1359 + $0x100] sm:$0xff]
        %v1393 = vld [vmem:[%s1359 + $0x108] sm:$0xff]
        %v1394 = vld [vmem:[%s1359 + $0x110] sm:$0xff]
        %v1395 = vld [vmem:[%s1359 + $0x118] sm:$0xff]
        %v1396 = vld [vmem:[%s1359 + $0x120] sm:$0xff]
        %v1397 = vld [vmem:[%s1359 + $0x128] sm:$0xff]
        %v1398 = vld [vmem:[%s1359 + $0x130] sm:$0xff]
        %v1399 = vld [vmem:[%s1359 + $0x138] sm:$0xff]
        %v1400 = vld [vmem:[%s1359 + $0x140] sm:$0xff]
        %v1401 = vld [vmem:[%s1359 + $0x148] sm:$0xff]
        %v1402 = vld [vmem:[%s1359 + $0x150] sm:$0xff]
        %v1403 = vld [vmem:[%s1359 + $0x158] sm:$0xff]
        %v1404 = vld [vmem:[%s1359 + $0x160] sm:$0xff]
        %v1405 = vld [vmem:[%s1359 + $0x168] sm:$0xff]
        %v1406 = vld [vmem:[%s1359 + $0x170] sm:$0xff]
        %v1407 = vld [vmem:[%s1359 + $0x178] sm:$0xff]
        %v1408 = vld [vmem:[%s1359 + $0x180] sm:$0xff]
        %v1409 = vld [vmem:[%s1359 + $0x188] sm:$0xff]
        %v1410 = vld [vmem:[%s1359 + $0x190] sm:$0xff]
        %v1411 = vld [vmem:[%s1359 + $0x198] sm:$0xff]
        %v1412 = vld [vmem:[%s1359 + $0x1a0] sm:$0xff]
        %v1413 = vld [vmem:[%s1359 + $0x1a8] sm:$0xff]
        %v1414 = vld [vmem:[%s1359 + $0x1b0] sm:$0xff]
        %v1415 = vld [vmem:[%s1359 + $0x1b8] sm:$0xff]
        %v1416 = vld [vmem:[%s1359 + $0x1c0] sm:$0xff]
        %v1417 = vld [vmem:[%s1359 + $0x1c8] sm:$0xff]
        %v1418 = vld [vmem:[%s1359 + $0x1d0] sm:$0xff]
        %v1419 = vld [vmem:[%s1359 + $0x1d8] sm:$0xff]
        %v1424 = vrot.slane %v1289, 1
        %v1425 = vrot.slane %v1295, 1
        %v1426 = vsel %vm799, %v1424, %v1425
        %v1427 = vrot.slane %v1291, 1
        %v1428 = vrot.slane %v1297, 1
        %v1429 = vsel %vm799, %v1427, %v1428
        %v1432 = vsel %vm1162, %v1429, 0
        %v1434 = vsel %vm1162, %v1428, 0
        %1436 = vmatprep.subr.mxu0 %v1361
        %1437 = vmatpush1.msra.mxu0 %v1360
        %1438 = vmatprep.subr.mxu0 %v1363
        %1439 = vmatpush1.msra.mxu0 %v1362
        %1440 = vmatprep.subr.mxu0 %v1365
        %1441 = vmatpush1.msra.mxu0 %v1364
        %1442 = vmatprep.subr.mxu0 %v1367
        %1443 = vmatpush1.msra.mxu0 %v1366
        %1444 = vmatprep.subr.mxu0 %v1369
        %1445 = vmatpush1.msra.mxu0 %v1368
        %1446 = vmatprep.subr.mxu0 %v1371
        %1447 = vmatpush1.msra.mxu0 %v1370
        %1448 = vmatprep.subr.mxu0 %v1373
        %1449 = vmatpush1.msra.mxu0 %v1372
        %1450 = vmatprep.subr.mxu0 %v1375
        %1451 = vmatpush1.msra.mxu0 %v1374
        %1452 = vmatprep.subr.mxu0 %v1377
        %1453 = vmatpush1.msra.mxu0 %v1376
        %1454 = vmatprep.subr.mxu0 %v1379
        %1455 = vmatpush1.msra.mxu0 %v1378
        %1456 = vmatprep.subr.mxu0 %v1381
        %1457 = vmatpush1.msra.mxu0 %v1380
        %1458 = vmatprep.subr.mxu0 %v1383
        %1459 = vmatpush1.msra.mxu0 %v1382
        %1460 = vmatprep.subr.mxu0 %v1385
        %1461 = vmatpush1.msra.mxu0 %v1384
        %1462 = vmatprep.subr.mxu0 %v1387
        %1463 = vmatpush1.msra.mxu0 %v1386
        %1464 = vmatprep.subr.mxu0 %v1389
        %1465 = vmatpush1.msra.mxu0 %v1388
        %1466 = vmatprep.subr.mxu0 %v1391
        %1467 = vmatpush1.msra.mxu0 %v1390
        %1468 = vmatprep.subr.mxu0 %v1393
        %1469 = vmatpush1.msra.mxu0 %v1392
        %1470 = vmatprep.subr.mxu0 %v1395
        %1471 = vmatpush1.msra.mxu0 %v1394
        %1472 = vmatprep.subr.mxu0 %v1397
        %1473 = vmatpush1.msra.mxu0 %v1396
        %1474 = vmatprep.subr.mxu0 %v1399
        %1475 = vmatpush1.msra.mxu0 %v1398
        %1476 = vmatprep.subr.mxu0 %v1401
        %1477 = vmatpush1.msra.mxu0 %v1400
        %1478 = vmatprep.subr.mxu0 %v1403
        %1479 = vmatpush1.msra.mxu0 %v1402
        %1480 = vmatprep.subr.mxu0 %v1405
        %1481 = vmatpush1.msra.mxu0 %v1404
        %1482 = vmatprep.subr.mxu0 %v1407
        %1483 = vmatpush1.msra.mxu0 %v1406
        %1484 = vmatprep.subr.mxu0 %v1409
        %1485 = vmatpush1.msra.mxu0 %v1408
        %1486 = vmatprep.subr.mxu0 %v1411
        %1487 = vmatpush1.msra.mxu0 %v1410
        %1488 = vmatprep.subr.mxu0 %v1413
        %1489 = vmatpush1.msra.mxu0 %v1412
        %1490 = vmatprep.subr.mxu0 %v1415
        %1491 = vmatpush1.msra.mxu0 %v1414
        %1492 = vmatprep.subr.mxu0 %v1417
        %1493 = vmatpush1.msra.mxu0 %v1416
        %1494 = vmatprep.subr.mxu0 %v1419
        %1495 = vmatpush1.msra.mxu0 %v1418
        %1496 = vmatprep.subr.mxu0 0.0
        %1497 = vmatpush1.msra.mxu0 0.0
        %1498 = vmatprep.subr.mxu0 0.0
        %1499 = vmatpush1.msra.mxu0 0.0
        %1500 = vmatprep.mubr.f32.mxu0 %v1432
        %1501 = vmatmul.mubr.f32.gmra.mrb[0].mxu0 %v1426
        %v1502 = vpop.f32.mrb[0].mxu0
        %v1503 = vadd.f32 0.0, %v1502
        %v1504 = vpop.f32.mrb[0].mxu0
        %v1505 = vadd.f32 0.0, %v1504
        %1506 = vmatprep.mubr.f32.mxu0 %v1434
        %1507 = vmatmul.mubr.f32.gmra.mrb[0].mxu0 %v1425
        %v1508 = vpop.f32.mrb[0].mxu0
        %v1509 = vadd.f32 0.0, %v1508
        %v1510 = vpop.f32.mrb[0].mxu0
        %v1511 = vadd.f32 0.0, %v1510
        %1512 = vdwg.mxu0
        %v1513 = vsel %vm1162, %v1291, 0
        %v1515 = vsel %vm1162, %v1297, 0
        %1517 = vmatprep.subr.mxu0 %v1300
        %1518 = vmatpush1.msra.mxu0 %v1299
        %1519 = vmatprep.subr.mxu0 %v1302
        %1520 = vmatpush1.msra.mxu0 %v1301
        %1521 = vmatprep.subr.mxu0 %v1304
        %1522 = vmatpush1.msra.mxu0 %v1303
        %1523 = vmatprep.subr.mxu0 %v1306
        %1524 = vmatpush1.msra.mxu0 %v1305
        %1525 = vmatprep.subr.mxu0 %v1308
        %1526 = vmatpush1.msra.mxu0 %v1307
        %1527 = vmatprep.subr.mxu0 %v1310
        %1528 = vmatpush1.msra.mxu0 %v1309
        %1529 = vmatprep.subr.mxu0 %v1312
        %1530 = vmatpush1.msra.mxu0 %v1311
        %1531 = vmatprep.subr.mxu0 %v1314
        %1532 = vmatpush1.msra.mxu0 %v1313
        %1533 = vmatprep.subr.mxu0 %v1316
        %1534 = vmatpush1.msra.mxu0 %v1315
        %1535 = vmatprep.subr.mxu0 %v1318
        %1536 = vmatpush1.msra.mxu0 %v1317
        %1537 = vmatprep.subr.mxu0 %v1320
        %1538 = vmatpush1.msra.mxu0 %v1319
        %1539 = vmatprep.subr.mxu0 %v1322
        %1540 = vmatpush1.msra.mxu0 %v1321
        %1541 = vmatprep.subr.mxu0 %v1324
        %1542 = vmatpush1.msra.mxu0 %v1323
        %1543 = vmatprep.subr.mxu0 %v1326
        %1544 = vmatpush1.msra.mxu0 %v1325
        %1545 = vmatprep.subr.mxu0 %v1328
        %1546 = vmatpush1.msra.mxu0 %v1327
        %1547 = vmatprep.subr.mxu0 %v1330
        %1548 = vmatpush1.msra.mxu0 %v1329
        %1549 = vmatprep.subr.mxu0 %v1332
        %1550 = vmatpush1.msra.mxu0 %v1331
        %1551 = vmatprep.subr.mxu0 %v1334
        %1552 = vmatpush1.msra.mxu0 %v1333
        %1553 = vmatprep.subr.mxu0 %v1336
        %1554 = vmatpush1.msra.mxu0 %v1335
        %1555 = vmatprep.subr.mxu0 %v1338
        %1556 = vmatpush1.msra.mxu0 %v1337
        %1557 = vmatprep.subr.mxu0 %v1340
        %1558 = vmatpush1.msra.mxu0 %v1339
        %1559 = vmatprep.subr.mxu0 %v1342
        %1560 = vmatpush1.msra.mxu0 %v1341
        %1561 = vmatprep.subr.mxu0 %v1344
        %1562 = vmatpush1.msra.mxu0 %v1343
        %1563 = vmatprep.subr.mxu0 %v1346
        %1564 = vmatpush1.msra.mxu0 %v1345
        %1565 = vmatprep.subr.mxu0 %v1348
        %1566 = vmatpush1.msra.mxu0 %v1347
        %1567 = vmatprep.subr.mxu0 %v1350
        %1568 = vmatpush1.msra.mxu0 %v1349
        %1569 = vmatprep.subr.mxu0 %v1352
        %1570 = vmatpush1.msra.mxu0 %v1351
        %1571 = vmatprep.subr.mxu0 %v1354
        %1572 = vmatpush1.msra.mxu0 %v1353
        %1573 = vmatprep.subr.mxu0 %v1356
        %1574 = vmatpush1.msra.mxu0 %v1355
        %1575 = vmatprep.subr.mxu0 %v1358
        %1576 = vmatpush1.msra.mxu0 %v1357
        %1577 = vmatprep.subr.mxu0 0.0
        %1578 = vmatpush1.msra.mxu0 0.0
        %1579 = vmatprep.subr.mxu0 0.0
        %1580 = vmatpush1.msra.mxu0 0.0
        %1581 = vmatprep.mubr.f32.mxu0 %v1513
        %1582 = vmatmul.mubr.f32.gmra.mrb[0].mxu0 %v1289
        %v1583 = vpop.f32.mrb[0].mxu0
        %v1584 = vadd.f32 %v1503, %v1583
        %v1585 = vpop.f32.mrb[0].mxu0
        %v1586 = vadd.f32 %v1505, %v1585
        %1587 = vmatprep.mubr.f32.mxu0 %v1515
        %1588 = vmatmul.mubr.f32.gmra.mrb[0].mxu0 %v1295
        %v1589 = vpop.f32.mrb[0].mxu0
        %v1590 = vadd.f32 %v1509, %v1589
        %v1591 = vpop.f32.mrb[0].mxu0
        %v1592 = vadd.f32 %v1511, %v1591
        %1593 = vdwg.mxu0
        %s1594 = scalar_lea.vmem [#allocation4], 960
        %v1595 = vld [vmem:[%s1594] sm:$0xff]
        %v1596 = vld [vmem:[%s1594 + $0x8] sm:$0xff]
        %v1597 = vld [vmem:[%s1594 + $0x10] sm:$0xff]
        %v1598 = vld [vmem:[%s1594 + $0x18] sm:$0xff]
        %v1599 = vld [vmem:[%s1594 + $0x20] sm:$0xff]
        %v1600 = vld [vmem:[%s1594 + $0x28] sm:$0xff]
        %v1601 = vld [vmem:[%s1594 + $0x30] sm:$0xff]
        %v1602 = vld [vmem:[%s1594 + $0x38] sm:$0xff]
        %v1603 = vld [vmem:[%s1594 + $0x40] sm:$0xff]
        %v1604 = vld [vmem:[%s1594 + $0x48] sm:$0xff]
        %v1605 = vld [vmem:[%s1594 + $0x50] sm:$0xff]
        %v1606 = vld [vmem:[%s1594 + $0x58] sm:$0xff]
        %v1607 = vld [vmem:[%s1594 + $0x60] sm:$0xff]
        %v1608 = vld [vmem:[%s1594 + $0x68] sm:$0xff]
        %v1609 = vld [vmem:[%s1594 + $0x70] sm:$0xff]
        %v1610 = vld [vmem:[%s1594 + $0x78] sm:$0xff]
        %v1611 = vld [vmem:[%s1594 + $0x80] sm:$0xff]
        %v1612 = vld [vmem:[%s1594 + $0x88] sm:$0xff]
        %v1613 = vld [vmem:[%s1594 + $0x90] sm:$0xff]
        %v1614 = vld [vmem:[%s1594 + $0x98] sm:$0xff]
        %v1615 = vld [vmem:[%s1594 + $0xa0] sm:$0xff]
        %v1616 = vld [vmem:[%s1594 + $0xa8] sm:$0xff]
        %v1617 = vld [vmem:[%s1594 + $0xb0] sm:$0xff]
        %v1618 = vld [vmem:[%s1594 + $0xb8] sm:$0xff]
        %v1619 = vld [vmem:[%s1594 + $0xc0] sm:$0xff]
        %v1620 = vld [vmem:[%s1594 + $0xc8] sm:$0xff]
        %v1621 = vld [vmem:[%s1594 + $0xd0] sm:$0xff]
        %v1622 = vld [vmem:[%s1594 + $0xd8] sm:$0xff]
        %v1623 = vld [vmem:[%s1594 + $0xe0] sm:$0xff]
        %v1624 = vld [vmem:[%s1594 + $0xe8] sm:$0xff]
        %v1625 = vld [vmem:[%s1594 + $0xf0] sm:$0xff]
        %v1626 = vld [vmem:[%s1594 + $0xf8] sm:$0xff]
        %v1627 = vld [vmem:[%s1594 + $0x100] sm:$0xff]
        %v1628 = vld [vmem:[%s1594 + $0x108] sm:$0xff]
        %v1629 = vld [vmem:[%s1594 + $0x110] sm:$0xff]
        %v1630 = vld [vmem:[%s1594 + $0x118] sm:$0xff]
        %v1631 = vld [vmem:[%s1594 + $0x120] sm:$0xff]
        %v1632 = vld [vmem:[%s1594 + $0x128] sm:$0xff]
        %v1633 = vld [vmem:[%s1594 + $0x130] sm:$0xff]
        %v1634 = vld [vmem:[%s1594 + $0x138] sm:$0xff]
        %v1635 = vld [vmem:[%s1594 + $0x140] sm:$0xff]
        %v1636 = vld [vmem:[%s1594 + $0x148] sm:$0xff]
        %v1637 = vld [vmem:[%s1594 + $0x150] sm:$0xff]
        %v1638 = vld [vmem:[%s1594 + $0x158] sm:$0xff]
        %v1639 = vld [vmem:[%s1594 + $0x160] sm:$0xff]
        %v1640 = vld [vmem:[%s1594 + $0x168] sm:$0xff]
        %v1641 = vld [vmem:[%s1594 + $0x170] sm:$0xff]
        %v1642 = vld [vmem:[%s1594 + $0x178] sm:$0xff]
        %v1643 = vld [vmem:[%s1594 + $0x180] sm:$0xff]
        %v1644 = vld [vmem:[%s1594 + $0x188] sm:$0xff]
        %v1645 = vld [vmem:[%s1594 + $0x190] sm:$0xff]
        %v1646 = vld [vmem:[%s1594 + $0x198] sm:$0xff]
        %v1647 = vld [vmem:[%s1594 + $0x1a0] sm:$0xff]
        %v1648 = vld [vmem:[%s1594 + $0x1a8] sm:$0xff]
        %v1649 = vld [vmem:[%s1594 + $0x1b0] sm:$0xff]
        %v1650 = vld [vmem:[%s1594 + $0x1b8] sm:$0xff]
        %v1651 = vld [vmem:[%s1594 + $0x1c0] sm:$0xff]
        %v1652 = vld [vmem:[%s1594 + $0x1c8] sm:$0xff]
        %v1653 = vld [vmem:[%s1594 + $0x1d0] sm:$0xff]
        %v1654 = vld [vmem:[%s1594 + $0x1d8] sm:$0xff]
        %v1655 = vrot.slane %v1289, 2
        %v1656 = vrot.slane %v1295, 2
        %v1657 = vsel %vm1001, %v1655, %v1656
        %v1658 = vrot.slane %v1291, 2
        %v1659 = vrot.slane %v1297, 2
        %v1660 = vsel %vm1001, %v1658, %v1659
        %v1663 = vsel %vm1162, %v1660, 0
        %v1665 = vsel %vm1162, %v1659, 0
        %1667 = vmatprep.subr.mxu0 %v1596
        %1668 = vmatpush1.msra.mxu0 %v1595
        %1669 = vmatprep.subr.mxu0 %v1598
        %1670 = vmatpush1.msra.mxu0 %v1597
        %1671 = vmatprep.subr.mxu0 %v1600
        %1672 = vmatpush1.msra.mxu0 %v1599
        %1673 = vmatprep.subr.mxu0 %v1602
        %1674 = vmatpush1.msra.mxu0 %v1601
        %1675 = vmatprep.subr.mxu0 %v1604
        %1676 = vmatpush1.msra.mxu0 %v1603
        %1677 = vmatprep.subr.mxu0 %v1606
        %1678 = vmatpush1.msra.mxu0 %v1605
        %1679 = vmatprep.subr.mxu0 %v1608
        %1680 = vmatpush1.msra.mxu0 %v1607
        %1681 = vmatprep.subr.mxu0 %v1610
        %1682 = vmatpush1.msra.mxu0 %v1609
        %1683 = vmatprep.subr.mxu0 %v1612
        %1684 = vmatpush1.msra.mxu0 %v1611
        %1685 = vmatprep.subr.mxu0 %v1614
        %1686 = vmatpush1.msra.mxu0 %v1613
        %1687 = vmatprep.subr.mxu0 %v1616
        %1688 = vmatpush1.msra.mxu0 %v1615
        %1689 = vmatprep.subr.mxu0 %v1618
        %1690 = vmatpush1.msra.mxu0 %v1617
        %1691 = vmatprep.subr.mxu0 %v1620
        %1692 = vmatpush1.msra.mxu0 %v1619
        %1693 = vmatprep.subr.mxu0 %v1622
        %1694 = vmatpush1.msra.mxu0 %v1621
        %1695 = vmatprep.subr.mxu0 %v1624
        %1696 = vmatpush1.msra.mxu0 %v1623
        %1697 = vmatprep.subr.mxu0 %v1626
        %1698 = vmatpush1.msra.mxu0 %v1625
        %1699 = vmatprep.subr.mxu0 %v1628
        %1700 = vmatpush1.msra.mxu0 %v1627
        %1701 = vmatprep.subr.mxu0 %v1630
        %1702 = vmatpush1.msra.mxu0 %v1629
        %1703 = vmatprep.subr.mxu0 %v1632
        %1704 = vmatpush1.msra.mxu0 %v1631
        %1705 = vmatprep.subr.mxu0 %v1634
        %1706 = vmatpush1.msra.mxu0 %v1633
        %1707 = vmatprep.subr.mxu0 %v1636
        %1708 = vmatpush1.msra.mxu0 %v1635
        %1709 = vmatprep.subr.mxu0 %v1638
        %1710 = vmatpush1.msra.mxu0 %v1637
        %1711 = vmatprep.subr.mxu0 %v1640
        %1712 = vmatpush1.msra.mxu0 %v1639
        %1713 = vmatprep.subr.mxu0 %v1642
        %1714 = vmatpush1.msra.mxu0 %v1641
        %1715 = vmatprep.subr.mxu0 %v1644
        %1716 = vmatpush1.msra.mxu0 %v1643
        %1717 = vmatprep.subr.mxu0 %v1646
        %1718 = vmatpush1.msra.mxu0 %v1645
        %1719 = vmatprep.subr.mxu0 %v1648
        %1720 = vmatpush1.msra.mxu0 %v1647
        %1721 = vmatprep.subr.mxu0 %v1650
        %1722 = vmatpush1.msra.mxu0 %v1649
        %1723 = vmatprep.subr.mxu0 %v1652
        %1724 = vmatpush1.msra.mxu0 %v1651
        %1725 = vmatprep.subr.mxu0 %v1654
        %1726 = vmatpush1.msra.mxu0 %v1653
        %1727 = vmatprep.subr.mxu0 0.0
        %1728 = vmatpush1.msra.mxu0 0.0
        %1729 = vmatprep.subr.mxu0 0.0
        %1730 = vmatpush1.msra.mxu0 0.0
        %1731 = vmatprep.mubr.f32.mxu0 %v1663
        %1732 = vmatmul.mubr.f32.gmra.mrb[0].mxu0 %v1657
        %v1733 = vpop.f32.mrb[0].mxu0
        %v1734 = vadd.f32 0.0, %v1733
        %v1735 = vpop.f32.mrb[0].mxu0
        %v1736 = vadd.f32 0.0, %v1735
        %1737 = vmatprep.mubr.f32.mxu0 %v1665
        %1738 = vmatmul.mubr.f32.gmra.mrb[0].mxu0 %v1656
        %v1739 = vpop.f32.mrb[0].mxu0
        %v1740 = vadd.f32 0.0, %v1739
        %v1741 = vpop.f32.mrb[0].mxu0
        %v1742 = vadd.f32 0.0, %v1741
        %1743 = vdwg.mxu0
        %v1744 = vadd.f32 %v1584, %v1734
        %v1745 = vadd.f32 %v1586, %v1736
        %v1746 = vadd.f32 %v1590, %v1740
        %v1747 = vadd.f32 %v1592, %v1742
        %v1748 = vld [vmem:[%s6] sm:$0x3]
        %v1750 = vlaneseq
        %v1751 = vshrl.u32 %v1750, 7
        %v1752 = vsub.s32 0, %v1751
        %v1753 = vrot.slane %v1748, %v1752
        %v1754 = vlaneseq
        %v1755 = vshrl.u32 %v1754, 7
        %v1756 = vsub.s32 1, %v1755
        %v1757 = vrot.slane %v1748, %v1756
        %v1760 = vmul.f32 %v1744, %v1753
        %v1761 = vmul.f32 %v1745, %v1757
        %v1762 = vmul.f32 %v1746, %v1753
        %v1763 = vmul.f32 %v1747, %v1757
        %v1764 = vld [vmem:[#allocation6] sm:$0x3]
        %v1766 = vlaneseq
        %v1767 = vshrl.u32 %v1766, 7
        %v1768 = vsub.s32 0, %v1767
        %v1769 = vrot.slane %v1764, %v1768
        %v1770 = vlaneseq
        %v1771 = vshrl.u32 %v1770, 7
        %v1772 = vsub.s32 1, %v1771
        %v1773 = vrot.slane %v1764, %v1772
        %v1776 = vadd.f32 %v1760, %v1769
        %v1777 = vadd.f32 %v1761, %v1773
        %v1778 = vadd.f32 %v1762, %v1769
        %v1779 = vadd.f32 %v1763, %v1773
        %v1780 = vmax.f32 %v1776, 0.0
        %v1781 = vmax.f32 %v1777, 0.0
        %v1782 = vmax.f32 %v1778, 0.0
        %v1783 = vmax.f32 %v1779, 0.0
        %1788 = vrot.lane.b32.xlu0 %v1780, 96
        %v1789 = vpop.permute.xlu0 %1788
        %1790 = vrot.lane.b32.xlu0 %v1781, 96
        %v1791 = vpop.permute.xlu0 %1790
        %1792 = vrot.lane.b32.xlu0 %v1782, 96
        %v1793 = vpop.permute.xlu0 %1792
        %1794 = vrot.lane.b32.xlu0 %v1783, 96
        %v1795 = vpop.permute.xlu0 %1794
        %vm1796 = vcmask 785408
        %v1797 = vsel %vm1796, %v1789, %v1791
        %v1798 = vsel %vm1796, %v1793, %v1795
        %v1803 = vmax.f32 %v1780, %v1797
        %v1804 = vmax.f32 %v1781, %v1791
        %v1805 = vmax.f32 %v1782, %v1798
        %v1806 = vmax.f32 %v1783, %v1795
        %v1811 = vrot.slane %v1803, 1
        %v1812 = vrot.slane %v1805, 1
        %v1813 = vsel %vm799, %v1811, %v1812
        %v1814 = vrot.slane %v1804, 1
        %v1815 = vrot.slane %v1806, 1
        %v1816 = vsel %vm799, %v1814, %v1815
        %v1821 = vmax.f32 %v1803, %v1813
        %v1822 = vmax.f32 %v1804, %v1816
        %v1823 = vmax.f32 %v1805, %v1812
        %v1824 = vmax.f32 %v1806, %v1815
        %v1825 = vld [vmem:[%s8] sm:$0xff]
        %vm1826 = vcmask 72704
        %v1828 = vsel %vm1826, %v1825, 0
        %v1831 = vsel %vm1215, %v1823, 0
        %v1834 = vsel %vm1215, %v1824, 0
        %1836 = vmatprep.subr.mxu0 %v1822
        %1837 = vmatpush1.msra.mxu0 %v1821
        %1838 = vmatprep.subr.mxu0 %v1834
        %1839 = vmatpush1.msra.mxu0 %v1831
        %1840 = vmatprep.subr.mxu0 0.0
        %1841 = vmatpush1.msra.mxu0 0.0
        %1842 = vmatprep.subr.mxu0 0.0
        %1843 = vmatpush1.msra.mxu0 0.0
        %1844 = vmatprep.subr.mxu0 0.0
        %1845 = vmatpush1.msra.mxu0 0.0
        %1846 = vmatprep.subr.mxu0 0.0
        %1847 = vmatpush1.msra.mxu0 0.0
        %1848 = vmatprep.subr.mxu0 0.0
        %1849 = vmatpush1.msra.mxu0 0.0
        %1850 = vmatprep.subr.mxu0 0.0
        %1851 = vmatpush1.msra.mxu0 0.0
        %1852 = vmatprep.subr.mxu0 0.0
        %1853 = vmatpush1.msra.mxu0 0.0
        %1854 = vmatprep.subr.mxu0 0.0
        %1855 = vmatpush1.msra.mxu0 0.0
        %1856 = vmatprep.subr.mxu0 0.0
        %1857 = vmatpush1.msra.mxu0 0.0
        %1858 = vmatprep.subr.mxu0 0.0
        %1859 = vmatpush1.msra.mxu0 0.0
        %1860 = vmatprep.subr.mxu0 0.0
        %1861 = vmatpush1.msra.mxu0 0.0
        %1862 = vmatprep.subr.mxu0 0.0
        %1863 = vmatpush1.msra.mxu0 0.0
        %1864 = vmatprep.subr.mxu0 0.0
        %1865 = vmatpush1.msra.mxu0 0.0
        %1866 = vmatprep.subr.mxu0 0.0
        %1867 = vmatpush1.msra.mxu0 0.0
        %1868 = vmatprep.subr.mxu0 0.0
        %1869 = vmatpush1.msra.mxu0 0.0
        %1870 = vmatprep.subr.mxu0 0.0
        %1871 = vmatpush1.msra.mxu0 0.0
        %1872 = vmatprep.subr.mxu0 0.0
        %1873 = vmatpush1.msra.mxu0 0.0
        %1874 = vmatprep.subr.mxu0 0.0
        %1875 = vmatpush1.msra.mxu0 0.0
        %1876 = vmatprep.subr.mxu0 0.0
        %1877 = vmatpush1.msra.mxu0 0.0
        %1878 = vmatprep.subr.mxu0 0.0
        %1879 = vmatpush1.msra.mxu0 0.0
        %1880 = vmatprep.subr.mxu0 0.0
        %1881 = vmatpush1.msra.mxu0 0.0
        %1882 = vmatprep.subr.mxu0 0.0
        %1883 = vmatpush1.msra.mxu0 0.0
        %1884 = vmatprep.subr.mxu0 0.0
        %1885 = vmatpush1.msra.mxu0 0.0
        %1886 = vmatprep.subr.mxu0 0.0
        %1887 = vmatpush1.msra.mxu0 0.0
        %1888 = vmatprep.subr.mxu0 0.0
        %1889 = vmatpush1.msra.mxu0 0.0
        %1890 = vmatprep.subr.mxu0 0.0
        %1891 = vmatpush1.msra.mxu0 0.0
        %1892 = vmatprep.subr.mxu0 0.0
        %1893 = vmatpush1.msra.mxu0 0.0
        %1894 = vmatprep.subr.mxu0 0.0
        %1895 = vmatpush1.msra.mxu0 0.0
        %1896 = vmatprep.subr.mxu0 0.0
        %1897 = vmatpush1.msra.mxu0 0.0
        %1898 = vmatprep.subr.mxu0 0.0
        %1899 = vmatpush1.msra.mxu0 0.0
        %1900 = vmatprep.mubr.f32.mxu0 0.0
        %1901 = vmatmul.mubr.f32.gmra.mrb[0].mxu0 %v1828
        %v1902 = vpop.f32.mrb[0].mxu0
        %v1903 = vadd.f32 0.0, %v1902
        %v1904 = vpop.f32.mrb[0].mxu0
        %v1905 = vadd.f32 0.0, %v1904
        %1906 = vdwg.mxu0
        %v1907 = vld [vmem:[#allocation7] sm:$0xff]
        %v1908 = vld [vmem:[#allocation7 + $0x8] sm:$0xff]
        %v1909 = vld [vmem:[#allocation7 + $0x10] sm:$0xff]
        %v1910 = vld [vmem:[#allocation7 + $0x18] sm:$0xff]
        %v1911 = vld [vmem:[#allocation7 + $0x20] sm:$0xff]
        %v1912 = vld [vmem:[#allocation7 + $0x28] sm:$0xff]
        %v1913 = vld [vmem:[#allocation7 + $0x30] sm:$0xff]
        %v1914 = vld [vmem:[#allocation7 + $0x38] sm:$0xff]
        %v1915 = vld [vmem:[#allocation7 + $0x40] sm:$0xff]
        %v1916 = vld [vmem:[#allocation7 + $0x48] sm:$0xff]
        %v1917 = vld [vmem:[#allocation7 + $0x50] sm:$0xff]
        %v1918 = vld [vmem:[#allocation7 + $0x58] sm:$0xff]
        %v1919 = vld [vmem:[#allocation7 + $0x60] sm:$0xff]
        %v1920 = vld [vmem:[#allocation7 + $0x68] sm:$0xff]
        %v1921 = vld [vmem:[#allocation7 + $0x70] sm:$0xff]
        %v1922 = vld [vmem:[#allocation7 + $0x78] sm:$0xff]
        %v1923 = vld [vmem:[#allocation7 + $0x80] sm:$0xff]
        %v1924 = vld [vmem:[#allocation7 + $0x88] sm:$0xff]
        %v1925 = vld [vmem:[#allocation7 + $0x90] sm:$0xff]
        %v1926 = vld [vmem:[#allocation7 + $0x98] sm:$0xff]
        %v1927 = vld [vmem:[#allocation7 + $0xa0] sm:$0xff]
        %v1928 = vld [vmem:[#allocation7 + $0xa8] sm:$0xff]
        %v1929 = vld [vmem:[#allocation7 + $0xb0] sm:$0xff]
        %v1930 = vld [vmem:[#allocation7 + $0xb8] sm:$0xff]
        %v1931 = vld [vmem:[#allocation7 + $0xc0] sm:$0xff]
        %v1932 = vld [vmem:[#allocation7 + $0xc8] sm:$0xff]
        %v1933 = vld [vmem:[#allocation7 + $0xd0] sm:$0xff]
        %v1934 = vld [vmem:[#allocation7 + $0xd8] sm:$0xff]
        %v1935 = vld [vmem:[#allocation7 + $0xe0] sm:$0xff]
        %v1936 = vld [vmem:[#allocation7 + $0xe8] sm:$0xff]
        %v1937 = vld [vmem:[#allocation7 + $0xf0] sm:$0xff]
        %v1938 = vld [vmem:[#allocation7 + $0xf8] sm:$0xff]
        %v1939 = vld [vmem:[#allocation7 + $0x100] sm:$0xff]
        %v1940 = vld [vmem:[#allocation7 + $0x108] sm:$0xff]
        %v1941 = vld [vmem:[#allocation7 + $0x110] sm:$0xff]
        %v1942 = vld [vmem:[#allocation7 + $0x118] sm:$0xff]
        %v1943 = vld [vmem:[#allocation7 + $0x120] sm:$0xff]
        %v1944 = vld [vmem:[#allocation7 + $0x128] sm:$0xff]
        %v1945 = vld [vmem:[#allocation7 + $0x130] sm:$0xff]
        %v1946 = vld [vmem:[#allocation7 + $0x138] sm:$0xff]
        %v1947 = vld [vmem:[#allocation7 + $0x140] sm:$0xff]
        %v1948 = vld [vmem:[#allocation7 + $0x148] sm:$0xff]
        %v1949 = vld [vmem:[#allocation7 + $0x150] sm:$0xff]
        %v1950 = vld [vmem:[#allocation7 + $0x158] sm:$0xff]
        %v1951 = vld [vmem:[#allocation7 + $0x160] sm:$0xff]
        %v1952 = vld [vmem:[#allocation7 + $0x168] sm:$0xff]
        %v1953 = vld [vmem:[#allocation7 + $0x170] sm:$0xff]
        %v1954 = vld [vmem:[#allocation7 + $0x178] sm:$0xff]
        %v1955 = vld [vmem:[#allocation7 + $0x180] sm:$0xff]
        %v1956 = vld [vmem:[#allocation7 + $0x188] sm:$0xff]
        %v1957 = vld [vmem:[#allocation7 + $0x190] sm:$0xff]
        %v1958 = vld [vmem:[#allocation7 + $0x198] sm:$0xff]
        %v1959 = vld [vmem:[#allocation7 + $0x1a0] sm:$0xff]
        %v1960 = vld [vmem:[#allocation7 + $0x1a8] sm:$0xff]
        %v1961 = vld [vmem:[#allocation7 + $0x1b0] sm:$0xff]
        %v1962 = vld [vmem:[#allocation7 + $0x1b8] sm:$0xff]
        %s1963 = scalar_lea.vmem [#allocation7], 448
        %v1964 = vld [vmem:[%s1963] sm:$0xff]
        %v1965 = vld [vmem:[%s1963 + $0x8] sm:$0xff]
        %v1966 = vld [vmem:[%s1963 + $0x10] sm:$0xff]
        %v1967 = vld [vmem:[%s1963 + $0x18] sm:$0xff]
        %v1968 = vld [vmem:[%s1963 + $0x20] sm:$0xff]
        %v1969 = vld [vmem:[%s1963 + $0x28] sm:$0xff]
        %v1970 = vld [vmem:[%s1963 + $0x30] sm:$0xff]
        %v1971 = vld [vmem:[%s1963 + $0x38] sm:$0xff]
        %v1972 = vld [vmem:[%s1963 + $0x40] sm:$0xff]
        %v1973 = vld [vmem:[%s1963 + $0x48] sm:$0xff]
        %v1974 = vld [vmem:[%s1963 + $0x50] sm:$0xff]
        %v1975 = vld [vmem:[%s1963 + $0x58] sm:$0xff]
        %v1976 = vld [vmem:[%s1963 + $0x60] sm:$0xff]
        %v1977 = vld [vmem:[%s1963 + $0x68] sm:$0xff]
        %v1978 = vld [vmem:[%s1963 + $0x70] sm:$0xff]
        %v1979 = vld [vmem:[%s1963 + $0x78] sm:$0xff]
        %v1980 = vld [vmem:[%s1963 + $0x80] sm:$0xff]
        %v1981 = vld [vmem:[%s1963 + $0x88] sm:$0xff]
        %v1982 = vld [vmem:[%s1963 + $0x90] sm:$0xff]
        %v1983 = vld [vmem:[%s1963 + $0x98] sm:$0xff]
        %v1984 = vld [vmem:[%s1963 + $0xa0] sm:$0xff]
        %v1985 = vld [vmem:[%s1963 + $0xa8] sm:$0xff]
        %v1986 = vld [vmem:[%s1963 + $0xb0] sm:$0xff]
        %v1987 = vld [vmem:[%s1963 + $0xb8] sm:$0xff]
        %v1988 = vld [vmem:[%s1963 + $0xc0] sm:$0xff]
        %v1989 = vld [vmem:[%s1963 + $0xc8] sm:$0xff]
        %v1990 = vld [vmem:[%s1963 + $0xd0] sm:$0xff]
        %v1991 = vld [vmem:[%s1963 + $0xd8] sm:$0xff]
        %v1992 = vld [vmem:[%s1963 + $0xe0] sm:$0xff]
        %v1993 = vld [vmem:[%s1963 + $0xe8] sm:$0xff]
        %v1994 = vld [vmem:[%s1963 + $0xf0] sm:$0xff]
        %v1995 = vld [vmem:[%s1963 + $0xf8] sm:$0xff]
        %v1996 = vld [vmem:[%s1963 + $0x100] sm:$0xff]
        %v1997 = vld [vmem:[%s1963 + $0x108] sm:$0xff]
        %v1998 = vld [vmem:[%s1963 + $0x110] sm:$0xff]
        %v1999 = vld [vmem:[%s1963 + $0x118] sm:$0xff]
        %v2000 = vld [vmem:[%s1963 + $0x120] sm:$0xff]
        %v2001 = vld [vmem:[%s1963 + $0x128] sm:$0xff]
        %v2002 = vld [vmem:[%s1963 + $0x130] sm:$0xff]
        %v2003 = vld [vmem:[%s1963 + $0x138] sm:$0xff]
        %v2004 = vld [vmem:[%s1963 + $0x140] sm:$0xff]
        %v2005 = vld [vmem:[%s1963 + $0x148] sm:$0xff]
        %v2006 = vld [vmem:[%s1963 + $0x150] sm:$0xff]
        %v2007 = vld [vmem:[%s1963 + $0x158] sm:$0xff]
        %v2008 = vld [vmem:[%s1963 + $0x160] sm:$0xff]
        %v2009 = vld [vmem:[%s1963 + $0x168] sm:$0xff]
        %v2010 = vld [vmem:[%s1963 + $0x170] sm:$0xff]
        %v2011 = vld [vmem:[%s1963 + $0x178] sm:$0xff]
        %v2012 = vld [vmem:[%s1963 + $0x180] sm:$0xff]
        %v2013 = vld [vmem:[%s1963 + $0x188] sm:$0xff]
        %v2014 = vld [vmem:[%s1963 + $0x190] sm:$0xff]
        %v2015 = vld [vmem:[%s1963 + $0x198] sm:$0xff]
        %v2016 = vld [vmem:[%s1963 + $0x1a0] sm:$0xff]
        %v2017 = vld [vmem:[%s1963 + $0x1a8] sm:$0xff]
        %v2018 = vld [vmem:[%s1963 + $0x1b0] sm:$0xff]
        %v2019 = vld [vmem:[%s1963 + $0x1b8] sm:$0xff]
        %v2022 = vrot.slane %v1903, 1
        %v2023 = vrot.slane %v1905, 1
        %v2025 = vsel %vm1796, %v2023, 0
        %2027 = vmatprep.subr.mxu0 %v1965
        %2028 = vmatpush1.msra.mxu0 %v1964
        %2029 = vmatprep.subr.mxu0 %v1967
        %2030 = vmatpush1.msra.mxu0 %v1966
        %2031 = vmatprep.subr.mxu0 %v1969
        %2032 = vmatpush1.msra.mxu0 %v1968
        %2033 = vmatprep.subr.mxu0 %v1971
        %2034 = vmatpush1.msra.mxu0 %v1970
        %2035 = vmatprep.subr.mxu0 %v1973
        %2036 = vmatpush1.msra.mxu0 %v1972
        %2037 = vmatprep.subr.mxu0 %v1975
        %2038 = vmatpush1.msra.mxu0 %v1974
        %2039 = vmatprep.subr.mxu0 %v1977
        %2040 = vmatpush1.msra.mxu0 %v1976
        %2041 = vmatprep.subr.mxu0 %v1979
        %2042 = vmatpush1.msra.mxu0 %v1978
        %2043 = vmatprep.subr.mxu0 %v1981
        %2044 = vmatpush1.msra.mxu0 %v1980
        %2045 = vmatprep.subr.mxu0 %v1983
        %2046 = vmatpush1.msra.mxu0 %v1982
        %2047 = vmatprep.subr.mxu0 %v1985
        %2048 = vmatpush1.msra.mxu0 %v1984
        %2049 = vmatprep.subr.mxu0 %v1987
        %2050 = vmatpush1.msra.mxu0 %v1986
        %2051 = vmatprep.subr.mxu0 %v1989
        %2052 = vmatpush1.msra.mxu0 %v1988
        %2053 = vmatprep.subr.mxu0 %v1991
        %2054 = vmatpush1.msra.mxu0 %v1990
        %2055 = vmatprep.subr.mxu0 %v1993
        %2056 = vmatpush1.msra.mxu0 %v1992
        %2057 = vmatprep.subr.mxu0 %v1995
        %2058 = vmatpush1.msra.mxu0 %v1994
        %2059 = vmatprep.subr.mxu0 %v1997
        %2060 = vmatpush1.msra.mxu0 %v1996
        %2061 = vmatprep.subr.mxu0 %v1999
        %2062 = vmatpush1.msra.mxu0 %v1998
        %2063 = vmatprep.subr.mxu0 %v2001
        %2064 = vmatpush1.msra.mxu0 %v2000
        %2065 = vmatprep.subr.mxu0 %v2003
        %2066 = vmatpush1.msra.mxu0 %v2002
        %2067 = vmatprep.subr.mxu0 %v2005
        %2068 = vmatpush1.msra.mxu0 %v2004
        %2069 = vmatprep.subr.mxu0 %v2007
        %2070 = vmatpush1.msra.mxu0 %v2006
        %2071 = vmatprep.subr.mxu0 %v2009
        %2072 = vmatpush1.msra.mxu0 %v2008
        %2073 = vmatprep.subr.mxu0 %v2011
        %2074 = vmatpush1.msra.mxu0 %v2010
        %2075 = vmatprep.subr.mxu0 %v2013
        %2076 = vmatpush1.msra.mxu0 %v2012
        %2077 = vmatprep.subr.mxu0 %v2015
        %2078 = vmatpush1.msra.mxu0 %v2014
        %2079 = vmatprep.subr.mxu0 %v2017
        %2080 = vmatpush1.msra.mxu0 %v2016
        %2081 = vmatprep.subr.mxu0 %v2019
        %2082 = vmatpush1.msra.mxu0 %v2018
        %2083 = vmatprep.subr.mxu0 0.0
        %2084 = vmatpush1.msra.mxu0 0.0
        %2085 = vmatprep.subr.mxu0 0.0
        %2086 = vmatpush1.msra.mxu0 0.0
        %2087 = vmatprep.subr.mxu0 0.0
        %2088 = vmatpush1.msra.mxu0 0.0
        %2089 = vmatprep.subr.mxu0 0.0
        %2090 = vmatpush1.msra.mxu0 0.0
        %2091 = vmatprep.mubr.f32.mxu0 %v2025
        %2092 = vmatmul.mubr.f32.gmra.mrb[0].mxu0 %v2022
        %v2093 = vpop.f32.mrb[0].mxu0
        %v2094 = vadd.f32 0.0, %v2093
        %v2095 = vpop.f32.mrb[0].mxu0
        %v2096 = vadd.f32 0.0, %v2095
        %2097 = vdwg.mxu0
        %v2098 = vsel %vm1796, %v1905, 0
        %2100 = vmatprep.subr.mxu0 %v1908
        %2101 = vmatpush1.msra.mxu0 %v1907
        %2102 = vmatprep.subr.mxu0 %v1910
        %2103 = vmatpush1.msra.mxu0 %v1909
        %2104 = vmatprep.subr.mxu0 %v1912
        %2105 = vmatpush1.msra.mxu0 %v1911
        %2106 = vmatprep.subr.mxu0 %v1914
        %2107 = vmatpush1.msra.mxu0 %v1913
        %2108 = vmatprep.subr.mxu0 %v1916
        %2109 = vmatpush1.msra.mxu0 %v1915
        %2110 = vmatprep.subr.mxu0 %v1918
        %2111 = vmatpush1.msra.mxu0 %v1917
        %2112 = vmatprep.subr.mxu0 %v1920
        %2113 = vmatpush1.msra.mxu0 %v1919
        %2114 = vmatprep.subr.mxu0 %v1922
        %2115 = vmatpush1.msra.mxu0 %v1921
        %2116 = vmatprep.subr.mxu0 %v1924
        %2117 = vmatpush1.msra.mxu0 %v1923
        %2118 = vmatprep.subr.mxu0 %v1926
        %2119 = vmatpush1.msra.mxu0 %v1925
        %2120 = vmatprep.subr.mxu0 %v1928
        %2121 = vmatpush1.msra.mxu0 %v1927
        %2122 = vmatprep.subr.mxu0 %v1930
        %2123 = vmatpush1.msra.mxu0 %v1929
        %2124 = vmatprep.subr.mxu0 %v1932
        %2125 = vmatpush1.msra.mxu0 %v1931
        %2126 = vmatprep.subr.mxu0 %v1934
        %2127 = vmatpush1.msra.mxu0 %v1933
        %2128 = vmatprep.subr.mxu0 %v1936
        %2129 = vmatpush1.msra.mxu0 %v1935
        %2130 = vmatprep.subr.mxu0 %v1938
        %2131 = vmatpush1.msra.mxu0 %v1937
        %2132 = vmatprep.subr.mxu0 %v1940
        %2133 = vmatpush1.msra.mxu0 %v1939
        %2134 = vmatprep.subr.mxu0 %v1942
        %2135 = vmatpush1.msra.mxu0 %v1941
        %2136 = vmatprep.subr.mxu0 %v1944
        %2137 = vmatpush1.msra.mxu0 %v1943
        %2138 = vmatprep.subr.mxu0 %v1946
        %2139 = vmatpush1.msra.mxu0 %v1945
        %2140 = vmatprep.subr.mxu0 %v1948
        %2141 = vmatpush1.msra.mxu0 %v1947
        %2142 = vmatprep.subr.mxu0 %v1950
        %2143 = vmatpush1.msra.mxu0 %v1949
        %2144 = vmatprep.subr.mxu0 %v1952
        %2145 = vmatpush1.msra.mxu0 %v1951
        %2146 = vmatprep.subr.mxu0 %v1954
        %2147 = vmatpush1.msra.mxu0 %v1953
        %2148 = vmatprep.subr.mxu0 %v1956
        %2149 = vmatpush1.msra.mxu0 %v1955
        %2150 = vmatprep.subr.mxu0 %v1958
        %2151 = vmatpush1.msra.mxu0 %v1957
        %2152 = vmatprep.subr.mxu0 %v1960
        %2153 = vmatpush1.msra.mxu0 %v1959
        %2154 = vmatprep.subr.mxu0 %v1962
        %2155 = vmatpush1.msra.mxu0 %v1961
        %2156 = vmatprep.subr.mxu0 0.0
        %2157 = vmatpush1.msra.mxu0 0.0
        %2158 = vmatprep.subr.mxu0 0.0
        %2159 = vmatpush1.msra.mxu0 0.0
        %2160 = vmatprep.subr.mxu0 0.0
        %2161 = vmatpush1.msra.mxu0 0.0
        %2162 = vmatprep.subr.mxu0 0.0
        %2163 = vmatpush1.msra.mxu0 0.0
        %2164 = vmatprep.mubr.f32.mxu0 %v2098
        %2165 = vmatmul.mubr.f32.gmra.mrb[0].mxu0 %v1903
        %v2166 = vpop.f32.mrb[0].mxu0
        %v2167 = vadd.f32 %v2094, %v2166
        %v2168 = vpop.f32.mrb[0].mxu0
        %v2169 = vadd.f32 %v2096, %v2168
        %2170 = vdwg.mxu0
        %s2171 = scalar_lea.vmem [#allocation7], 896
        %v2172 = vld [vmem:[%s2171] sm:$0xff]
        %v2173 = vld [vmem:[%s2171 + $0x8] sm:$0xff]
        %v2174 = vld [vmem:[%s2171 + $0x10] sm:$0xff]
        %v2175 = vld [vmem:[%s2171 + $0x18] sm:$0xff]
        %v2176 = vld [vmem:[%s2171 + $0x20] sm:$0xff]
        %v2177 = vld [vmem:[%s2171 + $0x28] sm:$0xff]
        %v2178 = vld [vmem:[%s2171 + $0x30] sm:$0xff]
        %v2179 = vld [vmem:[%s2171 + $0x38] sm:$0xff]
        %v2180 = vld [vmem:[%s2171 + $0x40] sm:$0xff]
        %v2181 = vld [vmem:[%s2171 + $0x48] sm:$0xff]
        %v2182 = vld [vmem:[%s2171 + $0x50] sm:$0xff]
        %v2183 = vld [vmem:[%s2171 + $0x58] sm:$0xff]
        %v2184 = vld [vmem:[%s2171 + $0x60] sm:$0xff]
        %v2185 = vld [vmem:[%s2171 + $0x68] sm:$0xff]
        %v2186 = vld [vmem:[%s2171 + $0x70] sm:$0xff]
        %v2187 = vld [vmem:[%s2171 + $0x78] sm:$0xff]
        %v2188 = vld [vmem:[%s2171 + $0x80] sm:$0xff]
        %v2189 = vld [vmem:[%s2171 + $0x88] sm:$0xff]
        %v2190 = vld [vmem:[%s2171 + $0x90] sm:$0xff]
        %v2191 = vld [vmem:[%s2171 + $0x98] sm:$0xff]
        %v2192 = vld [vmem:[%s2171 + $0xa0] sm:$0xff]
        %v2193 = vld [vmem:[%s2171 + $0xa8] sm:$0xff]
        %v2194 = vld [vmem:[%s2171 + $0xb0] sm:$0xff]
        %v2195 = vld [vmem:[%s2171 + $0xb8] sm:$0xff]
        %v2196 = vld [vmem:[%s2171 + $0xc0] sm:$0xff]
        %v2197 = vld [vmem:[%s2171 + $0xc8] sm:$0xff]
        %v2198 = vld [vmem:[%s2171 + $0xd0] sm:$0xff]
        %v2199 = vld [vmem:[%s2171 + $0xd8] sm:$0xff]
        %v2200 = vld [vmem:[%s2171 + $0xe0] sm:$0xff]
        %v2201 = vld [vmem:[%s2171 + $0xe8] sm:$0xff]
        %v2202 = vld [vmem:[%s2171 + $0xf0] sm:$0xff]
        %v2203 = vld [vmem:[%s2171 + $0xf8] sm:$0xff]
        %v2204 = vld [vmem:[%s2171 + $0x100] sm:$0xff]
        %v2205 = vld [vmem:[%s2171 + $0x108] sm:$0xff]
        %v2206 = vld [vmem:[%s2171 + $0x110] sm:$0xff]
        %v2207 = vld [vmem:[%s2171 + $0x118] sm:$0xff]
        %v2208 = vld [vmem:[%s2171 + $0x120] sm:$0xff]
        %v2209 = vld [vmem:[%s2171 + $0x128] sm:$0xff]
        %v2210 = vld [vmem:[%s2171 + $0x130] sm:$0xff]
        %v2211 = vld [vmem:[%s2171 + $0x138] sm:$0xff]
        %v2212 = vld [vmem:[%s2171 + $0x140] sm:$0xff]
        %v2213 = vld [vmem:[%s2171 + $0x148] sm:$0xff]
        %v2214 = vld [vmem:[%s2171 + $0x150] sm:$0xff]
        %v2215 = vld [vmem:[%s2171 + $0x158] sm:$0xff]
        %v2216 = vld [vmem:[%s2171 + $0x160] sm:$0xff]
        %v2217 = vld [vmem:[%s2171 + $0x168] sm:$0xff]
        %v2218 = vld [vmem:[%s2171 + $0x170] sm:$0xff]
        %v2219 = vld [vmem:[%s2171 + $0x178] sm:$0xff]
        %v2220 = vld [vmem:[%s2171 + $0x180] sm:$0xff]
        %v2221 = vld [vmem:[%s2171 + $0x188] sm:$0xff]
        %v2222 = vld [vmem:[%s2171 + $0x190] sm:$0xff]
        %v2223 = vld [vmem:[%s2171 + $0x198] sm:$0xff]
        %v2224 = vld [vmem:[%s2171 + $0x1a0] sm:$0xff]
        %v2225 = vld [vmem:[%s2171 + $0x1a8] sm:$0xff]
        %v2226 = vld [vmem:[%s2171 + $0x1b0] sm:$0xff]
        %v2227 = vld [vmem:[%s2171 + $0x1b8] sm:$0xff]
        %v2228 = vrot.slane %v1903, 2
        %v2229 = vrot.slane %v1905, 2
        %v2231 = vsel %vm1796, %v2229, 0
        %2233 = vmatprep.subr.mxu0 %v2173
        %2234 = vmatpush1.msra.mxu0 %v2172
        %2235 = vmatprep.subr.mxu0 %v2175
        %2236 = vmatpush1.msra.mxu0 %v2174
        %2237 = vmatprep.subr.mxu0 %v2177
        %2238 = vmatpush1.msra.mxu0 %v2176
        %2239 = vmatprep.subr.mxu0 %v2179
        %2240 = vmatpush1.msra.mxu0 %v2178
        %2241 = vmatprep.subr.mxu0 %v2181
        %2242 = vmatpush1.msra.mxu0 %v2180
        %2243 = vmatprep.subr.mxu0 %v2183
        %2244 = vmatpush1.msra.mxu0 %v2182
        %2245 = vmatprep.subr.mxu0 %v2185
        %2246 = vmatpush1.msra.mxu0 %v2184
        %2247 = vmatprep.subr.mxu0 %v2187
        %2248 = vmatpush1.msra.mxu0 %v2186
        %2249 = vmatprep.subr.mxu0 %v2189
        %2250 = vmatpush1.msra.mxu0 %v2188
        %2251 = vmatprep.subr.mxu0 %v2191
        %2252 = vmatpush1.msra.mxu0 %v2190
        %2253 = vmatprep.subr.mxu0 %v2193
        %2254 = vmatpush1.msra.mxu0 %v2192
        %2255 = vmatprep.subr.mxu0 %v2195
        %2256 = vmatpush1.msra.mxu0 %v2194
        %2257 = vmatprep.subr.mxu0 %v2197
        %2258 = vmatpush1.msra.mxu0 %v2196
        %2259 = vmatprep.subr.mxu0 %v2199
        %2260 = vmatpush1.msra.mxu0 %v2198
        %2261 = vmatprep.subr.mxu0 %v2201
        %2262 = vmatpush1.msra.mxu0 %v2200
        %2263 = vmatprep.subr.mxu0 %v2203
        %2264 = vmatpush1.msra.mxu0 %v2202
        %2265 = vmatprep.subr.mxu0 %v2205
        %2266 = vmatpush1.msra.mxu0 %v2204
        %2267 = vmatprep.subr.mxu0 %v2207
        %2268 = vmatpush1.msra.mxu0 %v2206
        %2269 = vmatprep.subr.mxu0 %v2209
        %2270 = vmatpush1.msra.mxu0 %v2208
        %2271 = vmatprep.subr.mxu0 %v2211
        %2272 = vmatpush1.msra.mxu0 %v2210
        %2273 = vmatprep.subr.mxu0 %v2213
        %2274 = vmatpush1.msra.mxu0 %v2212
        %2275 = vmatprep.subr.mxu0 %v2215
        %2276 = vmatpush1.msra.mxu0 %v2214
        %2277 = vmatprep.subr.mxu0 %v2217
        %2278 = vmatpush1.msra.mxu0 %v2216
        %2279 = vmatprep.subr.mxu0 %v2219
        %2280 = vmatpush1.msra.mxu0 %v2218
        %2281 = vmatprep.subr.mxu0 %v2221
        %2282 = vmatpush1.msra.mxu0 %v2220
        %2283 = vmatprep.subr.mxu0 %v2223
        %2284 = vmatpush1.msra.mxu0 %v2222
        %2285 = vmatprep.subr.mxu0 %v2225
        %2286 = vmatpush1.msra.mxu0 %v2224
        %2287 = vmatprep.subr.mxu0 %v2227
        %2288 = vmatpush1.msra.mxu0 %v2226
        %2289 = vmatprep.subr.mxu0 0.0
        %2290 = vmatpush1.msra.mxu0 0.0
        %2291 = vmatprep.subr.mxu0 0.0
        %2292 = vmatpush1.msra.mxu0 0.0
        %2293 = vmatprep.subr.mxu0 0.0
        %2294 = vmatpush1.msra.mxu0 0.0
        %2295 = vmatprep.subr.mxu0 0.0
        %2296 = vmatpush1.msra.mxu0 0.0
        %2297 = vmatprep.mubr.f32.mxu0 %v2231
        %2298 = vmatmul.mubr.f32.gmra.mrb[0].mxu0 %v2228
        %v2299 = vpop.f32.mrb[0].mxu0
        %v2300 = vadd.f32 0.0, %v2299
        %v2301 = vpop.f32.mrb[0].mxu0
        %v2302 = vadd.f32 0.0, %v2301
        %2303 = vdwg.mxu0
        %v2304 = vadd.f32 %v2167, %v2300
        %v2305 = vadd.f32 %v2169, %v2302
        %v2306 = vld [vmem:[%s10] sm:$0x3]
        %v2308 = vlaneseq
        %v2309 = vshrl.u32 %v2308, 7
        %v2310 = vsub.s32 0, %v2309
        %v2311 = vrot.slane %v2306, %v2310
        %v2312 = vlaneseq
        %v2313 = vshrl.u32 %v2312, 7
        %v2314 = vsub.s32 1, %v2313
        %v2315 = vrot.slane %v2306, %v2314
        %v2318 = vmul.f32 %v2304, %v2311
        %v2319 = vmul.f32 %v2305, %v2315
        %v2320 = vld [vmem:[#allocation9] sm:$0x3]
        %v2322 = vlaneseq
        %v2323 = vshrl.u32 %v2322, 7
        %v2324 = vsub.s32 0, %v2323
        %v2325 = vrot.slane %v2320, %v2324
        %v2326 = vlaneseq
        %v2327 = vshrl.u32 %v2326, 7
        %v2328 = vsub.s32 1, %v2327
        %v2329 = vrot.slane %v2320, %v2328
        %v2332 = vadd.f32 %v2318, %v2325
        %v2333 = vadd.f32 %v2319, %v2329
        %v2334 = vmax.f32 %v2332, 0.0
        %v2335 = vmax.f32 %v2333, 0.0
        %2338 = vrot.lane.b32.xlu0 %v2334, 64
        %v2339 = vpop.permute.xlu0 %2338
        %2340 = vrot.lane.b32.xlu0 %v2335, 64
        %v2341 = vpop.permute.xlu0 %2340
        %v2342 = vsel %vm805, %v2339, %v2341
        %v2345 = vmax.f32 %v2334, %v2342
        %v2346 = vmax.f32 %v2335, %v2341
        %v2349 = vrot.slane %v2345, 1
        %v2350 = vrot.slane %v2346, 1
        %v2353 = vmax.f32 %v2345, %v2349
        %v2354 = vmax.f32 %v2346, %v2350
        %v2355 = vld [vmem:[%s12] sm:$0x3f]
        %vm2356 = vcmask 39936
        %v2358 = vsel %vm2356, %v2355, 0
        %vm2360 = vcmask 1044480
        %v2362 = vsel %vm2360, %v2353, 0
        %v2365 = vsel %vm2360, %v2354, 0
        %2367 = vmatprep.subr.mxu0 %v2365
        %2368 = vmatpush1.msra.mxu0 %v2362
        %2369 = vmatprep.subr.mxu0 0.0
        %2370 = vmatpush1.msra.mxu0 0.0
        %2371 = vmatprep.subr.mxu0 0.0
        %2372 = vmatpush1.msra.mxu0 0.0
        %2373 = vmatprep.subr.mxu0 0.0
        %2374 = vmatpush1.msra.mxu0 0.0
        %2375 = vmatprep.subr.mxu0 0.0
        %2376 = vmatpush1.msra.mxu0 0.0
        %2377 = vmatprep.subr.mxu0 0.0
        %2378 = vmatpush1.msra.mxu0 0.0
        %2379 = vmatprep.subr.mxu0 0.0
        %2380 = vmatpush1.msra.mxu0 0.0
        %2381 = vmatprep.subr.mxu0 0.0
        %2382 = vmatpush1.msra.mxu0 0.0
        %2383 = vmatprep.subr.mxu0 0.0
        %2384 = vmatpush1.msra.mxu0 0.0
        %2385 = vmatprep.subr.mxu0 0.0
        %2386 = vmatpush1.msra.mxu0 0.0
        %2387 = vmatprep.subr.mxu0 0.0
        %2388 = vmatpush1.msra.mxu0 0.0
        %2389 = vmatprep.subr.mxu0 0.0
        %2390 = vmatpush1.msra.mxu0 0.0
        %2391 = vmatprep.subr.mxu0 0.0
        %2392 = vmatpush1.msra.mxu0 0.0
        %2393 = vmatprep.subr.mxu0 0.0
        %2394 = vmatpush1.msra.mxu0 0.0
        %2395 = vmatprep.subr.mxu0 0.0
        %2396 = vmatpush1.msra.mxu0 0.0
        %2397 = vmatprep.subr.mxu0 0.0
        %2398 = vmatpush1.msra.mxu0 0.0
        %2399 = vmatprep.subr.mxu0 0.0
        %2400 = vmatpush1.msra.mxu0 0.0
        %2401 = vmatprep.subr.mxu0 0.0
        %2402 = vmatpush1.msra.mxu0 0.0
        %2403 = vmatprep.subr.mxu0 0.0
        %2404 = vmatpush1.msra.mxu0 0.0
        %2405 = vmatprep.subr.mxu0 0.0
        %2406 = vmatpush1.msra.mxu0 0.0
        %2407 = vmatprep.subr.mxu0 0.0
        %2408 = vmatpush1.msra.mxu0 0.0
        %2409 = vmatprep.subr.mxu0 0.0
        %2410 = vmatpush1.msra.mxu0 0.0
        %2411 = vmatprep.subr.mxu0 0.0
        %2412 = vmatpush1.msra.mxu0 0.0
        %2413 = vmatprep.subr.mxu0 0.0
        %2414 = vmatpush1.msra.mxu0 0.0
        %2415 = vmatprep.subr.mxu0 0.0
        %2416 = vmatpush1.msra.mxu0 0.0
        %2417 = vmatprep.subr.mxu0 0.0
        %2418 = vmatpush1.msra.mxu0 0.0
        %2419 = vmatprep.subr.mxu0 0.0
        %2420 = vmatpush1.msra.mxu0 0.0
        %2421 = vmatprep.subr.mxu0 0.0
        %2422 = vmatpush1.msra.mxu0 0.0
        %2423 = vmatprep.subr.mxu0 0.0
        %2424 = vmatpush1.msra.mxu0 0.0
        %2425 = vmatprep.subr.mxu0 0.0
        %2426 = vmatpush1.msra.mxu0 0.0
        %2427 = vmatprep.subr.mxu0 0.0
        %2428 = vmatpush1.msra.mxu0 0.0
        %2429 = vmatprep.subr.mxu0 0.0
        %2430 = vmatpush1.msra.mxu0 0.0
        %2431 = vmatprep.mubr.f32.mxu0 0.0
        %2432 = vmatmul.mubr.f32.gmra.mrb[0].mxu0 %v2358
        %v2433 = vpop.f32.mrb[0].mxu0
        %v2434 = vadd.f32 0.0, %v2433
        %v2435 = vpop.f32.mrb[0].mxu0
        %v2436 = vadd.f32 0.0, %v2435
        %2437 = vdwg.mxu0
        %v2438 = vld [vmem:[#allocation10] sm:$0xff]
        %v2439 = vld [vmem:[#allocation10 + $0x8] sm:$0xff]
        %v2440 = vld [vmem:[#allocation10 + $0x10] sm:$0xff]
        %v2441 = vld [vmem:[#allocation10 + $0x18] sm:$0xff]
        %v2442 = vld [vmem:[#allocation10 + $0x20] sm:$0xff]
        %v2443 = vld [vmem:[#allocation10 + $0x28] sm:$0xff]
        %v2444 = vld [vmem:[#allocation10 + $0x30] sm:$0xff]
        %v2445 = vld [vmem:[#allocation10 + $0x38] sm:$0xff]
        %v2446 = vld [vmem:[#allocation10 + $0x40] sm:$0xff]
        %v2447 = vld [vmem:[#allocation10 + $0x48] sm:$0xff]
        %v2448 = vld [vmem:[#allocation10 + $0x50] sm:$0xff]
        %v2449 = vld [vmem:[#allocation10 + $0x58] sm:$0xff]
        %v2450 = vld [vmem:[#allocation10 + $0x60] sm:$0xff]
        %v2451 = vld [vmem:[#allocation10 + $0x68] sm:$0xff]
        %v2452 = vld [vmem:[#allocation10 + $0x70] sm:$0xff]
        %v2453 = vld [vmem:[#allocation10 + $0x78] sm:$0xff]
        %v2454 = vld [vmem:[#allocation10 + $0x80] sm:$0xff]
        %v2455 = vld [vmem:[#allocation10 + $0x88] sm:$0xff]
        %v2456 = vld [vmem:[#allocation10 + $0x90] sm:$0xff]
        %v2457 = vld [vmem:[#allocation10 + $0x98] sm:$0xff]
        %v2458 = vld [vmem:[#allocation10 + $0xa0] sm:$0xff]
        %v2459 = vld [vmem:[#allocation10 + $0xa8] sm:$0xff]
        %v2460 = vld [vmem:[#allocation10 + $0xb0] sm:$0xff]
        %v2461 = vld [vmem:[#allocation10 + $0xb8] sm:$0xff]
        %v2462 = vld [vmem:[#allocation10 + $0xc0] sm:$0xff]
        %v2463 = vld [vmem:[#allocation10 + $0xc8] sm:$0xff]
        %v2464 = vld [vmem:[#allocation10 + $0xd0] sm:$0xff]
        %v2465 = vld [vmem:[#allocation10 + $0xd8] sm:$0xff]
        %v2466 = vld [vmem:[#allocation10 + $0xe0] sm:$0xff]
        %v2467 = vld [vmem:[#allocation10 + $0xe8] sm:$0xff]
        %v2468 = vld [vmem:[#allocation10 + $0xf0] sm:$0xff]
        %v2469 = vld [vmem:[#allocation10 + $0xf8] sm:$0xff]
        %v2470 = vld [vmem:[#allocation10 + $0x100] sm:$0xff]
        %v2471 = vld [vmem:[#allocation10 + $0x108] sm:$0xff]
        %v2472 = vld [vmem:[#allocation10 + $0x110] sm:$0xff]
        %v2473 = vld [vmem:[#allocation10 + $0x118] sm:$0xff]
        %v2474 = vld [vmem:[#allocation10 + $0x120] sm:$0xff]
        %v2475 = vld [vmem:[#allocation10 + $0x128] sm:$0xff]
        %v2476 = vld [vmem:[#allocation10 + $0x130] sm:$0xff]
        %v2477 = vld [vmem:[#allocation10 + $0x138] sm:$0xff]
        %v2478 = vld [vmem:[#allocation10 + $0x140] sm:$0xff]
        %v2479 = vld [vmem:[#allocation10 + $0x148] sm:$0xff]
        %v2480 = vld [vmem:[#allocation10 + $0x150] sm:$0xff]
        %v2481 = vld [vmem:[#allocation10 + $0x158] sm:$0xff]
        %v2482 = vld [vmem:[#allocation10 + $0x160] sm:$0xff]
        %v2483 = vld [vmem:[#allocation10 + $0x168] sm:$0xff]
        %v2484 = vld [vmem:[#allocation10 + $0x170] sm:$0xff]
        %v2485 = vld [vmem:[#allocation10 + $0x178] sm:$0xff]
        %s2486 = scalar_lea.vmem [#allocation10], 384
        %v2487 = vld [vmem:[%s2486] sm:$0xff]
        %v2488 = vld [vmem:[%s2486 + $0x8] sm:$0xff]
        %v2489 = vld [vmem:[%s2486 + $0x10] sm:$0xff]
        %v2490 = vld [vmem:[%s2486 + $0x18] sm:$0xff]
        %v2491 = vld [vmem:[%s2486 + $0x20] sm:$0xff]
        %v2492 = vld [vmem:[%s2486 + $0x28] sm:$0xff]
        %v2493 = vld [vmem:[%s2486 + $0x30] sm:$0xff]
        %v2494 = vld [vmem:[%s2486 + $0x38] sm:$0xff]
        %v2495 = vld [vmem:[%s2486 + $0x40] sm:$0xff]
        %v2496 = vld [vmem:[%s2486 + $0x48] sm:$0xff]
        %v2497 = vld [vmem:[%s2486 + $0x50] sm:$0xff]
        %v2498 = vld [vmem:[%s2486 + $0x58] sm:$0xff]
        %v2499 = vld [vmem:[%s2486 + $0x60] sm:$0xff]
        %v2500 = vld [vmem:[%s2486 + $0x68] sm:$0xff]
        %v2501 = vld [vmem:[%s2486 + $0x70] sm:$0xff]
        %v2502 = vld [vmem:[%s2486 + $0x78] sm:$0xff]
        %v2503 = vld [vmem:[%s2486 + $0x80] sm:$0xff]
        %v2504 = vld [vmem:[%s2486 + $0x88] sm:$0xff]
        %v2505 = vld [vmem:[%s2486 + $0x90] sm:$0xff]
        %v2506 = vld [vmem:[%s2486 + $0x98] sm:$0xff]
        %v2507 = vld [vmem:[%s2486 + $0xa0] sm:$0xff]
        %v2508 = vld [vmem:[%s2486 + $0xa8] sm:$0xff]
        %v2509 = vld [vmem:[%s2486 + $0xb0] sm:$0xff]
        %v2510 = vld [vmem:[%s2486 + $0xb8] sm:$0xff]
        %v2511 = vld [vmem:[%s2486 + $0xc0] sm:$0xff]
        %v2512 = vld [vmem:[%s2486 + $0xc8] sm:$0xff]
        %v2513 = vld [vmem:[%s2486 + $0xd0] sm:$0xff]
        %v2514 = vld [vmem:[%s2486 + $0xd8] sm:$0xff]
        %v2515 = vld [vmem:[%s2486 + $0xe0] sm:$0xff]
        %v2516 = vld [vmem:[%s2486 + $0xe8] sm:$0xff]
        %v2517 = vld [vmem:[%s2486 + $0xf0] sm:$0xff]
        %v2518 = vld [vmem:[%s2486 + $0xf8] sm:$0xff]
        %v2519 = vld [vmem:[%s2486 + $0x100] sm:$0xff]
        %v2520 = vld [vmem:[%s2486 + $0x108] sm:$0xff]
        %v2521 = vld [vmem:[%s2486 + $0x110] sm:$0xff]
        %v2522 = vld [vmem:[%s2486 + $0x118] sm:$0xff]
        %v2523 = vld [vmem:[%s2486 + $0x120] sm:$0xff]
        %v2524 = vld [vmem:[%s2486 + $0x128] sm:$0xff]
        %v2525 = vld [vmem:[%s2486 + $0x130] sm:$0xff]
        %v2526 = vld [vmem:[%s2486 + $0x138] sm:$0xff]
        %v2527 = vld [vmem:[%s2486 + $0x140] sm:$0xff]
        %v2528 = vld [vmem:[%s2486 + $0x148] sm:$0xff]
        %v2529 = vld [vmem:[%s2486 + $0x150] sm:$0xff]
        %v2530 = vld [vmem:[%s2486 + $0x158] sm:$0xff]
        %v2531 = vld [vmem:[%s2486 + $0x160] sm:$0xff]
        %v2532 = vld [vmem:[%s2486 + $0x168] sm:$0xff]
        %v2533 = vld [vmem:[%s2486 + $0x170] sm:$0xff]
        %v2534 = vld [vmem:[%s2486 + $0x178] sm:$0xff]
        %v2537 = vrot.slane %v2434, 1
        %v2538 = vrot.slane %v2436, 1
        %v2540 = vsel %vm805, %v2538, 0
        %2542 = vmatprep.subr.mxu0 %v2488
        %2543 = vmatpush1.msra.mxu0 %v2487
        %2544 = vmatprep.subr.mxu0 %v2490
        %2545 = vmatpush1.msra.mxu0 %v2489
        %2546 = vmatprep.subr.mxu0 %v2492
        %2547 = vmatpush1.msra.mxu0 %v2491
        %2548 = vmatprep.subr.mxu0 %v2494
        %2549 = vmatpush1.msra.mxu0 %v2493
        %2550 = vmatprep.subr.mxu0 %v2496
        %2551 = vmatpush1.msra.mxu0 %v2495
        %2552 = vmatprep.subr.mxu0 %v2498
        %2553 = vmatpush1.msra.mxu0 %v2497
        %2554 = vmatprep.subr.mxu0 %v2500
        %2555 = vmatpush1.msra.mxu0 %v2499
        %2556 = vmatprep.subr.mxu0 %v2502
        %2557 = vmatpush1.msra.mxu0 %v2501
        %2558 = vmatprep.subr.mxu0 %v2504
        %2559 = vmatpush1.msra.mxu0 %v2503
        %2560 = vmatprep.subr.mxu0 %v2506
        %2561 = vmatpush1.msra.mxu0 %v2505
        %2562 = vmatprep.subr.mxu0 %v2508
        %2563 = vmatpush1.msra.mxu0 %v2507
        %2564 = vmatprep.subr.mxu0 %v2510
        %2565 = vmatpush1.msra.mxu0 %v2509
        %2566 = vmatprep.subr.mxu0 %v2512
        %2567 = vmatpush1.msra.mxu0 %v2511
        %2568 = vmatprep.subr.mxu0 %v2514
        %2569 = vmatpush1.msra.mxu0 %v2513
        %2570 = vmatprep.subr.mxu0 %v2516
        %2571 = vmatpush1.msra.mxu0 %v2515
        %2572 = vmatprep.subr.mxu0 %v2518
        %2573 = vmatpush1.msra.mxu0 %v2517
        %2574 = vmatprep.subr.mxu0 %v2520
        %2575 = vmatpush1.msra.mxu0 %v2519
        %2576 = vmatprep.subr.mxu0 %v2522
        %2577 = vmatpush1.msra.mxu0 %v2521
        %2578 = vmatprep.subr.mxu0 %v2524
        %2579 = vmatpush1.msra.mxu0 %v2523
        %2580 = vmatprep.subr.mxu0 %v2526
        %2581 = vmatpush1.msra.mxu0 %v2525
        %2582 = vmatprep.subr.mxu0 %v2528
        %2583 = vmatpush1.msra.mxu0 %v2527
        %2584 = vmatprep.subr.mxu0 %v2530
        %2585 = vmatpush1.msra.mxu0 %v2529
        %2586 = vmatprep.subr.mxu0 %v2532
        %2587 = vmatpush1.msra.mxu0 %v2531
        %2588 = vmatprep.subr.mxu0 %v2534
        %2589 = vmatpush1.msra.mxu0 %v2533
        %2590 = vmatprep.subr.mxu0 0.0
        %2591 = vmatpush1.msra.mxu0 0.0
        %2592 = vmatprep.subr.mxu0 0.0
        %2593 = vmatpush1.msra.mxu0 0.0
        %2594 = vmatprep.subr.mxu0 0.0
        %2595 = vmatpush1.msra.mxu0 0.0
        %2596 = vmatprep.subr.mxu0 0.0
        %2597 = vmatpush1.msra.mxu0 0.0
        %2598 = vmatprep.subr.mxu0 0.0
        %2599 = vmatpush1.msra.mxu0 0.0
        %2600 = vmatprep.subr.mxu0 0.0
        %2601 = vmatpush1.msra.mxu0 0.0
        %2602 = vmatprep.subr.mxu0 0.0
        %2603 = vmatpush1.msra.mxu0 0.0
        %2604 = vmatprep.subr.mxu0 0.0
        %2605 = vmatpush1.msra.mxu0 0.0
        %2606 = vmatprep.mubr.f32.mxu0 %v2540
        %2607 = vmatmul.mubr.f32.gmra.mrb[0].mxu0 %v2537
        %v2608 = vpop.f32.mrb[0].mxu0
        %v2609 = vadd.f32 0.0, %v2608
        %v2610 = vpop.f32.mrb[0].mxu0
        %v2611 = vadd.f32 0.0, %v2610
        %2612 = vdwg.mxu0
        %v2613 = vsel %vm805, %v2436, 0
        %2615 = vmatprep.subr.mxu0 %v2439
        %2616 = vmatpush1.msra.mxu0 %v2438
        %2617 = vmatprep.subr.mxu0 %v2441
        %2618 = vmatpush1.msra.mxu0 %v2440
        %2619 = vmatprep.subr.mxu0 %v2443
        %2620 = vmatpush1.msra.mxu0 %v2442
        %2621 = vmatprep.subr.mxu0 %v2445
        %2622 = vmatpush1.msra.mxu0 %v2444
        %2623 = vmatprep.subr.mxu0 %v2447
        %2624 = vmatpush1.msra.mxu0 %v2446
        %2625 = vmatprep.subr.mxu0 %v2449
        %2626 = vmatpush1.msra.mxu0 %v2448
        %2627 = vmatprep.subr.mxu0 %v2451
        %2628 = vmatpush1.msra.mxu0 %v2450
        %2629 = vmatprep.subr.mxu0 %v2453
        %2630 = vmatpush1.msra.mxu0 %v2452
        %2631 = vmatprep.subr.mxu0 %v2455
        %2632 = vmatpush1.msra.mxu0 %v2454
        %2633 = vmatprep.subr.mxu0 %v2457
        %2634 = vmatpush1.msra.mxu0 %v2456
        %2635 = vmatprep.subr.mxu0 %v2459
        %2636 = vmatpush1.msra.mxu0 %v2458
        %2637 = vmatprep.subr.mxu0 %v2461
        %2638 = vmatpush1.msra.mxu0 %v2460
        %2639 = vmatprep.subr.mxu0 %v2463
        %2640 = vmatpush1.msra.mxu0 %v2462
        %2641 = vmatprep.subr.mxu0 %v2465
        %2642 = vmatpush1.msra.mxu0 %v2464
        %2643 = vmatprep.subr.mxu0 %v2467
        %2644 = vmatpush1.msra.mxu0 %v2466
        %2645 = vmatprep.subr.mxu0 %v2469
        %2646 = vmatpush1.msra.mxu0 %v2468
        %2647 = vmatprep.subr.mxu0 %v2471
        %2648 = vmatpush1.msra.mxu0 %v2470
        %2649 = vmatprep.subr.mxu0 %v2473
        %2650 = vmatpush1.msra.mxu0 %v2472
        %2651 = vmatprep.subr.mxu0 %v2475
        %2652 = vmatpush1.msra.mxu0 %v2474
        %2653 = vmatprep.subr.mxu0 %v2477
        %2654 = vmatpush1.msra.mxu0 %v2476
        %2655 = vmatprep.subr.mxu0 %v2479
        %2656 = vmatpush1.msra.mxu0 %v2478
        %2657 = vmatprep.subr.mxu0 %v2481
        %2658 = vmatpush1.msra.mxu0 %v2480
        %2659 = vmatprep.subr.mxu0 %v2483
        %2660 = vmatpush1.msra.mxu0 %v2482
        %2661 = vmatprep.subr.mxu0 %v2485
        %2662 = vmatpush1.msra.mxu0 %v2484
        %2663 = vmatprep.subr.mxu0 0.0
        %2664 = vmatpush1.msra.mxu0 0.0
        %2665 = vmatprep.subr.mxu0 0.0
        %2666 = vmatpush1.msra.mxu0 0.0
        %2667 = vmatprep.subr.mxu0 0.0
        %2668 = vmatpush1.msra.mxu0 0.0
        %2669 = vmatprep.subr.mxu0 0.0
        %2670 = vmatpush1.msra.mxu0 0.0
        %2671 = vmatprep.subr.mxu0 0.0
        %2672 = vmatpush1.msra.mxu0 0.0
        %2673 = vmatprep.subr.mxu0 0.0
        %2674 = vmatpush1.msra.mxu0 0.0
        %2675 = vmatprep.subr.mxu0 0.0
        %2676 = vmatpush1.msra.mxu0 0.0
        %2677 = vmatprep.subr.mxu0 0.0
        %2678 = vmatpush1.msra.mxu0 0.0
        %2679 = vmatprep.mubr.f32.mxu0 %v2613
        %2680 = vmatmul.mubr.f32.gmra.mrb[0].mxu0 %v2434
        %v2681 = vpop.f32.mrb[0].mxu0
        %v2682 = vadd.f32 %v2609, %v2681
        %v2683 = vpop.f32.mrb[0].mxu0
        %v2684 = vadd.f32 %v2611, %v2683
        %2685 = vdwg.mxu0
        %s2686 = scalar_lea.vmem [#allocation10], 768
        %v2687 = vld [vmem:[%s2686] sm:$0xff]
        %v2688 = vld [vmem:[%s2686 + $0x8] sm:$0xff]
        %v2689 = vld [vmem:[%s2686 + $0x10] sm:$0xff]
        %v2690 = vld [vmem:[%s2686 + $0x18] sm:$0xff]
        %v2691 = vld [vmem:[%s2686 + $0x20] sm:$0xff]
        %v2692 = vld [vmem:[%s2686 + $0x28] sm:$0xff]
        %v2693 = vld [vmem:[%s2686 + $0x30] sm:$0xff]
        %v2694 = vld [vmem:[%s2686 + $0x38] sm:$0xff]
        %v2695 = vld [vmem:[%s2686 + $0x40] sm:$0xff]
        %v2696 = vld [vmem:[%s2686 + $0x48] sm:$0xff]
        %v2697 = vld [vmem:[%s2686 + $0x50] sm:$0xff]
        %v2698 = vld [vmem:[%s2686 + $0x58] sm:$0xff]
        %v2699 = vld [vmem:[%s2686 + $0x60] sm:$0xff]
        %v2700 = vld [vmem:[%s2686 + $0x68] sm:$0xff]
        %v2701 = vld [vmem:[%s2686 + $0x70] sm:$0xff]
        %v2702 = vld [vmem:[%s2686 + $0x78] sm:$0xff]
        %v2703 = vld [vmem:[%s2686 + $0x80] sm:$0xff]
        %v2704 = vld [vmem:[%s2686 + $0x88] sm:$0xff]
        %v2705 = vld [vmem:[%s2686 + $0x90] sm:$0xff]
        %v2706 = vld [vmem:[%s2686 + $0x98] sm:$0xff]
        %v2707 = vld [vmem:[%s2686 + $0xa0] sm:$0xff]
        %v2708 = vld [vmem:[%s2686 + $0xa8] sm:$0xff]
        %v2709 = vld [vmem:[%s2686 + $0xb0] sm:$0xff]
        %v2710 = vld [vmem:[%s2686 + $0xb8] sm:$0xff]
        %v2711 = vld [vmem:[%s2686 + $0xc0] sm:$0xff]
        %v2712 = vld [vmem:[%s2686 + $0xc8] sm:$0xff]
        %v2713 = vld [vmem:[%s2686 + $0xd0] sm:$0xff]
        %v2714 = vld [vmem:[%s2686 + $0xd8] sm:$0xff]
        %v2715 = vld [vmem:[%s2686 + $0xe0] sm:$0xff]
        %v2716 = vld [vmem:[%s2686 + $0xe8] sm:$0xff]
        %v2717 = vld [vmem:[%s2686 + $0xf0] sm:$0xff]
        %v2718 = vld [vmem:[%s2686 + $0xf8] sm:$0xff]
        %v2719 = vld [vmem:[%s2686 + $0x100] sm:$0xff]
        %v2720 = vld [vmem:[%s2686 + $0x108] sm:$0xff]
        %v2721 = vld [vmem:[%s2686 + $0x110] sm:$0xff]
        %v2722 = vld [vmem:[%s2686 + $0x118] sm:$0xff]
        %v2723 = vld [vmem:[%s2686 + $0x120] sm:$0xff]
        %v2724 = vld [vmem:[%s2686 + $0x128] sm:$0xff]
        %v2725 = vld [vmem:[%s2686 + $0x130] sm:$0xff]
        %v2726 = vld [vmem:[%s2686 + $0x138] sm:$0xff]
        %v2727 = vld [vmem:[%s2686 + $0x140] sm:$0xff]
        %v2728 = vld [vmem:[%s2686 + $0x148] sm:$0xff]
        %v2729 = vld [vmem:[%s2686 + $0x150] sm:$0xff]
        %v2730 = vld [vmem:[%s2686 + $0x158] sm:$0xff]
        %v2731 = vld [vmem:[%s2686 + $0x160] sm:$0xff]
        %v2732 = vld [vmem:[%s2686 + $0x168] sm:$0xff]
        %v2733 = vld [vmem:[%s2686 + $0x170] sm:$0xff]
        %v2734 = vld [vmem:[%s2686 + $0x178] sm:$0xff]
        %v2735 = vrot.slane %v2434, 2
        %v2736 = vrot.slane %v2436, 2
        %v2738 = vsel %vm805, %v2736, 0
        %2740 = vmatprep.subr.mxu0 %v2688
        %2741 = vmatpush1.msra.mxu0 %v2687
        %2742 = vmatprep.subr.mxu0 %v2690
        %2743 = vmatpush1.msra.mxu0 %v2689
        %2744 = vmatprep.subr.mxu0 %v2692
        %2745 = vmatpush1.msra.mxu0 %v2691
        %2746 = vmatprep.subr.mxu0 %v2694
        %2747 = vmatpush1.msra.mxu0 %v2693
        %2748 = vmatprep.subr.mxu0 %v2696
        %2749 = vmatpush1.msra.mxu0 %v2695
        %2750 = vmatprep.subr.mxu0 %v2698
        %2751 = vmatpush1.msra.mxu0 %v2697
        %2752 = vmatprep.subr.mxu0 %v2700
        %2753 = vmatpush1.msra.mxu0 %v2699
        %2754 = vmatprep.subr.mxu0 %v2702
        %2755 = vmatpush1.msra.mxu0 %v2701
        %2756 = vmatprep.subr.mxu0 %v2704
        %2757 = vmatpush1.msra.mxu0 %v2703
        %2758 = vmatprep.subr.mxu0 %v2706
        %2759 = vmatpush1.msra.mxu0 %v2705
        %2760 = vmatprep.subr.mxu0 %v2708
        %2761 = vmatpush1.msra.mxu0 %v2707
        %2762 = vmatprep.subr.mxu0 %v2710
        %2763 = vmatpush1.msra.mxu0 %v2709
        %2764 = vmatprep.subr.mxu0 %v2712
        %2765 = vmatpush1.msra.mxu0 %v2711
        %2766 = vmatprep.subr.mxu0 %v2714
        %2767 = vmatpush1.msra.mxu0 %v2713
        %2768 = vmatprep.subr.mxu0 %v2716
        %2769 = vmatpush1.msra.mxu0 %v2715
        %2770 = vmatprep.subr.mxu0 %v2718
        %2771 = vmatpush1.msra.mxu0 %v2717
        %2772 = vmatprep.subr.mxu0 %v2720
        %2773 = vmatpush1.msra.mxu0 %v2719
        %2774 = vmatprep.subr.mxu0 %v2722
        %2775 = vmatpush1.msra.mxu0 %v2721
        %2776 = vmatprep.subr.mxu0 %v2724
        %2777 = vmatpush1.msra.mxu0 %v2723
        %2778 = vmatprep.subr.mxu0 %v2726
        %2779 = vmatpush1.msra.mxu0 %v2725
        %2780 = vmatprep.subr.mxu0 %v2728
        %2781 = vmatpush1.msra.mxu0 %v2727
        %2782 = vmatprep.subr.mxu0 %v2730
        %2783 = vmatpush1.msra.mxu0 %v2729
        %2784 = vmatprep.subr.mxu0 %v2732
        %2785 = vmatpush1.msra.mxu0 %v2731
        %2786 = vmatprep.subr.mxu0 %v2734
        %2787 = vmatpush1.msra.mxu0 %v2733
        %2788 = vmatprep.subr.mxu0 0.0
        %2789 = vmatpush1.msra.mxu0 0.0
        %2790 = vmatprep.subr.mxu0 0.0
        %2791 = vmatpush1.msra.mxu0 0.0
        %2792 = vmatprep.subr.mxu0 0.0
        %2793 = vmatpush1.msra.mxu0 0.0
        %2794 = vmatprep.subr.mxu0 0.0
        %2795 = vmatpush1.msra.mxu0 0.0
        %2796 = vmatprep.subr.mxu0 0.0
        %2797 = vmatpush1.msra.mxu0 0.0
        %2798 = vmatprep.subr.mxu0 0.0
        %2799 = vmatpush1.msra.mxu0 0.0
        %2800 = vmatprep.subr.mxu0 0.0
        %2801 = vmatpush1.msra.mxu0 0.0
        %2802 = vmatprep.subr.mxu0 0.0
        %2803 = vmatpush1.msra.mxu0 0.0
        %2804 = vmatprep.mubr.f32.mxu0 %v2738
        %2805 = vmatmul.mubr.f32.gmra.mrb[0].mxu0 %v2735
        %v2806 = vpop.f32.mrb[0].mxu0
        %v2807 = vadd.f32 0.0, %v2806
        %v2808 = vpop.f32.mrb[0].mxu0
        %v2809 = vadd.f32 0.0, %v2808
        %2810 = vdwg.mxu0
        %v2811 = vadd.f32 %v2682, %v2807
        %v2812 = vadd.f32 %v2684, %v2809
        %v2813 = vld [vmem:[%s14] sm:$0x3]
        %v2815 = vlaneseq
        %v2816 = vshrl.u32 %v2815, 7
        %v2817 = vsub.s32 0, %v2816
        %v2818 = vrot.slane %v2813, %v2817
        %v2819 = vlaneseq
        %v2820 = vshrl.u32 %v2819, 7
        %v2821 = vsub.s32 1, %v2820
        %v2822 = vrot.slane %v2813, %v2821
        %v2825 = vmul.f32 %v2811, %v2818
        %v2826 = vmul.f32 %v2812, %v2822
        %v2827 = vld [vmem:[#allocation12] sm:$0x3]
        %v2829 = vlaneseq
        %v2830 = vshrl.u32 %v2829, 7
        %v2831 = vsub.s32 0, %v2830
        %v2832 = vrot.slane %v2827, %v2831
        %v2833 = vlaneseq
        %v2834 = vshrl.u32 %v2833, 7
        %v2835 = vsub.s32 1, %v2834
        %v2836 = vrot.slane %v2827, %v2835
        %v2839 = vadd.f32 %v2825, %v2832
        %v2840 = vadd.f32 %v2826, %v2836
        %v2841 = vmax.f32 %v2839, 0.0
        %v2842 = vmax.f32 %v2840, 0.0
        %v2843 = vadd.f32 %v2841, %v2842
        %v2845 = vrot.slane %v2843, 1
        %v2847 = vadd.f32 %v2843, %v2845
        %v2848 = vld [vmem:[%s16] sm:$0xff]
        %v2849 = vld [vmem:[%s16 + $0x8] sm:$0xff]
        %v2850 = vld [vmem:[%s16 + $0x10] sm:$0xff]
        %v2851 = vld [vmem:[%s16 + $0x18] sm:$0xff]
        %v2852 = vld [vmem:[%s16 + $0x20] sm:$0xff]
        %v2853 = vld [vmem:[%s16 + $0x28] sm:$0xff]
        %v2854 = vld [vmem:[%s16 + $0x30] sm:$0xff]
        %v2855 = vld [vmem:[%s16 + $0x38] sm:$0xff]
        %v2856 = vld [vmem:[%s16 + $0x40] sm:$0xff]
        %v2857 = vld [vmem:[%s16 + $0x48] sm:$0xff]
        %v2858 = vld [vmem:[%s16 + $0x50] sm:$0xff]
        %v2859 = vld [vmem:[%s16 + $0x58] sm:$0xff]
        %v2860 = vld [vmem:[%s16 + $0x60] sm:$0xff]
        %v2861 = vld [vmem:[%s16 + $0x68] sm:$0xff]
        %v2862 = vld [vmem:[%s16 + $0x70] sm:$0xff]
        %v2863 = vld [vmem:[%s16 + $0x78] sm:$0xff]
        %v2864 = vld [vmem:[#allocation13] sm:$0x1]
        %2865 = vmatprep.subr.mxu0 0.0
        %2866 = vmatpush1.msra.mxu0 %v2848
        %2867 = vmatprep.subr.mxu0 0.0
        %2868 = vmatpush1.msra.mxu0 %v2849
        %2869 = vmatprep.subr.mxu0 0.0
        %2870 = vmatpush1.msra.mxu0 %v2850
        %2871 = vmatprep.subr.mxu0 0.0
        %2872 = vmatpush1.msra.mxu0 %v2851
        %2873 = vmatprep.subr.mxu0 0.0
        %2874 = vmatpush1.msra.mxu0 %v2852
        %2875 = vmatprep.subr.mxu0 0.0
        %2876 = vmatpush1.msra.mxu0 %v2853
        %2877 = vmatprep.subr.mxu0 0.0
        %2878 = vmatpush1.msra.mxu0 %v2854
        %2879 = vmatprep.subr.mxu0 0.0
        %2880 = vmatpush1.msra.mxu0 %v2855
        %2881 = vmatprep.subr.mxu0 0.0
        %2882 = vmatpush1.msra.mxu0 %v2856
        %2883 = vmatprep.subr.mxu0 0.0
        %2884 = vmatpush1.msra.mxu0 %v2857
        %2885 = vmatprep.subr.mxu0 0.0
        %2886 = vmatpush1.msra.mxu0 %v2858
        %2887 = vmatprep.subr.mxu0 0.0
        %2888 = vmatpush1.msra.mxu0 %v2859
        %2889 = vmatprep.subr.mxu0 0.0
        %2890 = vmatpush1.msra.mxu0 %v2860
        %2891 = vmatprep.subr.mxu0 0.0
        %2892 = vmatpush1.msra.mxu0 %v2861
        %2893 = vmatprep.subr.mxu0 0.0
        %2894 = vmatpush1.msra.mxu0 %v2862
        %2895 = vmatprep.subr.mxu0 0.0
        %2896 = vmatpush1.msra.mxu0 %v2863
        %2897 = vmatprep.subr.mxu0 0.0
        %2898 = vmatpush1.msra.mxu0 0.0
        %2899 = vmatprep.subr.mxu0 0.0
        %2900 = vmatpush1.msra.mxu0 0.0
        %2901 = vmatprep.subr.mxu0 0.0
        %2902 = vmatpush1.msra.mxu0 0.0
        %2903 = vmatprep.subr.mxu0 0.0
        %2904 = vmatpush1.msra.mxu0 0.0
        %2905 = vmatprep.subr.mxu0 0.0
        %2906 = vmatpush1.msra.mxu0 0.0
        %2907 = vmatprep.subr.mxu0 0.0
        %2908 = vmatpush1.msra.mxu0 0.0
        %2909 = vmatprep.subr.mxu0 0.0
        %2910 = vmatpush1.msra.mxu0 0.0
        %2911 = vmatprep.subr.mxu0 0.0
        %2912 = vmatpush1.msra.mxu0 0.0
        %2913 = vmatprep.subr.mxu0 0.0
        %2914 = vmatpush1.msra.mxu0 0.0
        %2915 = vmatprep.subr.mxu0 0.0
        %2916 = vmatpush1.msra.mxu0 0.0
        %2917 = vmatprep.subr.mxu0 0.0
        %2918 = vmatpush1.msra.mxu0 0.0
        %2919 = vmatprep.subr.mxu0 0.0
        %2920 = vmatpush1.msra.mxu0 0.0
        %2921 = vmatprep.subr.mxu0 0.0
        %2922 = vmatpush1.msra.mxu0 0.0
        %2923 = vmatprep.subr.mxu0 0.0
        %2924 = vmatpush1.msra.mxu0 0.0
        %2925 = vmatprep.subr.mxu0 0.0
        %2926 = vmatpush1.msra.mxu0 0.0
        %2927 = vmatprep.subr.mxu0 0.0
        %2928 = vmatpush1.msra.mxu0 0.0
        %2929 = vmatprep.mubr.f32.mxu0 0.0
        %2930 = vmatmul.mubr.f32.gmra.mrb[0].mxu0 %v2847
        %v2931 = vpop.f32.mrb[0].mxu0
        %v2932 = vadd.f32 %v2864, %v2931
        %v2933 = vpop.f32.mrb[0].mxu0
        %2934 = vdwg.mxu0
        %v2935 = vmax.f32 %v2932, 0.0
        %v2936 = vld [vmem:[#allocation15] sm:$0xff]
        %v2937 = vld [vmem:[#allocation15 + $0x8] sm:$0xff]
        %v2938 = vld [vmem:[#allocation15 + $0x10] sm:$0xff]
        %v2939 = vld [vmem:[#allocation15 + $0x18] sm:$0xff]
        %v2940 = vld [vmem:[#allocation15 + $0x20] sm:$0xff]
        %v2941 = vld [vmem:[#allocation15 + $0x28] sm:$0xff]
        %v2942 = vld [vmem:[#allocation15 + $0x30] sm:$0xff]
        %v2943 = vld [vmem:[#allocation15 + $0x38] sm:$0xff]
        %v2944 = vld [vmem:[#allocation15 + $0x40] sm:$0xff]
        %v2945 = vld [vmem:[#allocation15 + $0x48] sm:$0xff]
        %v2946 = vld [vmem:[#allocation15 + $0x50] sm:$0xff]
        %v2947 = vld [vmem:[#allocation15 + $0x58] sm:$0xff]
        %v2948 = vld [vmem:[#allocation15 + $0x60] sm:$0xff]
        %v2949 = vld [vmem:[#allocation15 + $0x68] sm:$0xff]
        %v2950 = vld [vmem:[#allocation15 + $0x70] sm:$0xff]
        %v2951 = vld [vmem:[#allocation15 + $0x78] sm:$0xff]
        %v2952 = vld [vmem:[#allocation16] sm:$0x1]
        %2953 = vmatprep.subr.mxu0 0.0
        %2954 = vmatpush1.msra.mxu0 %v2936
        %2955 = vmatprep.subr.mxu0 0.0
        %2956 = vmatpush1.msra.mxu0 %v2937
        %2957 = vmatprep.subr.mxu0 0.0
        %2958 = vmatpush1.msra.mxu0 %v2938
        %2959 = vmatprep.subr.mxu0 0.0
        %2960 = vmatpush1.msra.mxu0 %v2939
        %2961 = vmatprep.subr.mxu0 0.0
        %2962 = vmatpush1.msra.mxu0 %v2940
        %2963 = vmatprep.subr.mxu0 0.0
        %2964 = vmatpush1.msra.mxu0 %v2941
        %2965 = vmatprep.subr.mxu0 0.0
        %2966 = vmatpush1.msra.mxu0 %v2942
        %2967 = vmatprep.subr.mxu0 0.0
        %2968 = vmatpush1.msra.mxu0 %v2943
        %2969 = vmatprep.subr.mxu0 0.0
        %2970 = vmatpush1.msra.mxu0 %v2944
        %2971 = vmatprep.subr.mxu0 0.0
        %2972 = vmatpush1.msra.mxu0 %v2945
        %2973 = vmatprep.subr.mxu0 0.0
        %2974 = vmatpush1.msra.mxu0 %v2946
        %2975 = vmatprep.subr.mxu0 0.0
        %2976 = vmatpush1.msra.mxu0 %v2947
        %2977 = vmatprep.subr.mxu0 0.0
        %2978 = vmatpush1.msra.mxu0 %v2948
        %2979 = vmatprep.subr.mxu0 0.0
        %2980 = vmatpush1.msra.mxu0 %v2949
        %2981 = vmatprep.subr.mxu0 0.0
        %2982 = vmatpush1.msra.mxu0 %v2950
        %2983 = vmatprep.subr.mxu0 0.0
        %2984 = vmatpush1.msra.mxu0 %v2951
        %2985 = vmatprep.subr.mxu0 0.0
        %2986 = vmatpush1.msra.mxu0 0.0
        %2987 = vmatprep.subr.mxu0 0.0
        %2988 = vmatpush1.msra.mxu0 0.0
        %2989 = vmatprep.subr.mxu0 0.0
        %2990 = vmatpush1.msra.mxu0 0.0
        %2991 = vmatprep.subr.mxu0 0.0
        %2992 = vmatpush1.msra.mxu0 0.0
        %2993 = vmatprep.subr.mxu0 0.0
        %2994 = vmatpush1.msra.mxu0 0.0
        %2995 = vmatprep.subr.mxu0 0.0
        %2996 = vmatpush1.msra.mxu0 0.0
        %2997 = vmatprep.subr.mxu0 0.0
        %2998 = vmatpush1.msra.mxu0 0.0
        %2999 = vmatprep.subr.mxu0 0.0
        %3000 = vmatpush1.msra.mxu0 0.0
        %3001 = vmatprep.subr.mxu0 0.0
        %3002 = vmatpush1.msra.mxu0 0.0
        %3003 = vmatprep.subr.mxu0 0.0
        %3004 = vmatpush1.msra.mxu0 0.0
        %3005 = vmatprep.subr.mxu0 0.0
        %3006 = vmatpush1.msra.mxu0 0.0
        %3007 = vmatprep.subr.mxu0 0.0
        %3008 = vmatpush1.msra.mxu0 0.0
        %3009 = vmatprep.subr.mxu0 0.0
        %3010 = vmatpush1.msra.mxu0 0.0
        %3011 = vmatprep.subr.mxu0 0.0
        %3012 = vmatpush1.msra.mxu0 0.0
        %3013 = vmatprep.subr.mxu0 0.0
        %3014 = vmatpush1.msra.mxu0 0.0
        %3015 = vmatprep.subr.mxu0 0.0
        %3016 = vmatpush1.msra.mxu0 0.0
        %3017 = vmatprep.mubr.f32.mxu0 0.0
        %3018 = vmatmul.mubr.f32.gmra.mrb[0].mxu0 %v2935
        %v3019 = vpop.f32.mrb[0].mxu0
        %v3020 = vadd.f32 %v2952, %v3019
        %v3021 = vpop.f32.mrb[0].mxu0
        %3022 = vdwg.mxu0
        %3023 = vst [vmem:[%s759] sm:$0x1] %v3020
        %p3024 = scmp.lt.s32.totalorder %s37, 1
        %s3025 = scalar_select %p3024, %s37, 1
        %s3026 = scalar_lea.vmem %s20, %s3025
        // Predicated region
        $region141: #{forward.1} parent=99 // pred_check
          %p3027 = pneg %p480
        $region142: #{forward.1} parent=99 // pred_check_branch
          %3029 = sbr.rel (%p3027) target = $region144
        $region143: #{forward.1} parent=99 // pred_region
          _
        $region144: #{forward.1} parent=99 // pred_fallthru
          _
      $region100: #{forward.1} parent=5 // pred_fallthru
        _
      %p3030 = scmp.le.s32.totalorder 2, %s32
      // Predicated region
      $region145: #{forward.1} parent=5 // pred_check
        %p3031 = pneg %p3030
      $region146: #{forward.1} parent=5 // pred_check_branch
        %3033 = sbr.rel (%p3031) target = $region148
      $region147: #{forward.1} parent=5 // pred_region
        %s3034 = ssub.s32 %s32, 2
        // Predicated region
        $region149: #{forward.1} parent=147 // pred_check
          %p3035 = pneg %p486
        $region150: #{forward.1} parent=147 // pred_check_branch
          %3037 = sbr.rel (%p3035) target = $region152
        $region151: #{forward.1} parent=147 // pred_region
          %p3038 = scmp.lt.s32.totalorder %s38, 1
          %s3039 = scalar_select %p3038, %s38, 1
          %s3040 = scalar_lea.vmem %s20, %s3039
        $region152: #{forward.1} parent=147 // pred_fallthru
          _
      $region148: #{forward.1} parent=5 // pred_fallthru
        _
    $region6: #{forward.1} parent=1 // loop_footer
      %s36 = sadd.s32 1, %s32
    $region7: #{forward.1} parent=1 // loop_footer_branch
      %31 = sbr.rel target = $region3
    $region8: #{forward.1} parent=1 // loop_exit
      _
    %3041 = vsyncpa [#allocation3], 1
    %s3042 = scalar_lea.sflag [#allocation3], 1
    %3043 = vsyncpa %s3042, 1
    %3044 = vsyncpa [#allocation5], 1
    %3045 = vsyncpa [#allocation8], 1
    %3046 = vsyncpa [#allocation11], 1
    %3047 = vsyncpa [#allocation14], 1
    %3048 = vsyncpa [#allocation17], 1

</llo_original>
